<compile_context>
chip_gen: v6e
topology: v6e:2x2x1
jax: 0.10.0
libtpu: 0.0.40
codegen_flags: <defaults>
</compile_context>

<pallas_src>
import jax
import jax.numpy as jnp
from jax.experimental import pallas as pl
from jax.experimental.pallas import tpu as pltpu

_EPS = 1e-5  # PyTorch BatchNorm2d default eps


# ---------------------------------------------------------------------------
# Fused MaskBlock kernel (one grid step == B_blk images)
# ---------------------------------------------------------------------------
def _make_mask_block_kernel(B, H, W, Cin, Cout, stride, equal_in_out):
    s = stride
    Ho = (H - 1) // s + 1
    Wo = (W - 1) // s + 1
    M = B * Ho * Wo
    nP = 1 if s == 1 else s * s

    def kernel(*refs):
        if s == 1:
            x_ref, s1_ref, b1_ref = refs[0], refs[1], refs[2]
            idx = 3
        else:
            phase_refs = refs[0:nP]
            smap_refs = refs[nP:2 * nP]
            bmap_refs = refs[2 * nP:3 * nP]
            idx = 3 * nP
        s2_ref, b2_ref, mask_ref, w1_ref, w2_ref, o_ref = refs[idx:idx + 6]

        # ---- BN1 + ReLU (f32 VPU), with conv1's zero halo ----------------------------
        if s == 1:
            x = x_ref[...]                                            # (B, H, W, Cin)
            a = jnp.maximum(x * s1_ref[...] + b1_ref[...], 0.0)
            zw = jnp.zeros((B, H, 1, Cin), jnp.float32)
            a = jnp.concatenate([zw, a, zw], axis=2)                  # pad W
            zh = jnp.zeros((B, 1, W + 2, Cin), jnp.float32)
            a = jnp.concatenate([zh, a, zh], axis=1)                  # pad H
            act = [a]                                                 # single "phase"
        else:
            # Phases of the pre-padded input.  The folded-BN maps are zero on the padding
            # frame, so the activation border is *exactly* 0 (== conv1's zero padding).
            act = [jnp.maximum(phase_refs[i][...] * smap_refs[i][...]
                               + bmap_refs[i][...], 0.0)
                   for i in range(nP)]

        # ---- conv1 (+ folded 1x1 shortcut): one big-K MXU matmul ----------------------
        taps1 = []
        for dh in range(3):
            for dw in range(3):
                pi = (dh % s) * s + (dw % s)
                r0, c0 = dh // s, dw // s
                t = act[pi][:, r0:r0 + Ho, c0:c0 + Wo, :]             # (B, Ho, Wo, Cin)
                taps1.append(t.reshape(M, Cin))
        lhs1 = jnp.concatenate(taps1, axis=-1).astype(jnp.bfloat16)   # (M, 9*Cin)
        acc1 = jnp.dot(lhs1, w1_ref[...],
                       preferred_element_type=jnp.float32)            # (M, Cout[+Cout])

        h1 = acc1 if equal_in_out else acc1[:, :Cout]

        # ---- BN2 + ReLU + pruning mask (f32) ------------------------------------------
        a2 = jnp.maximum(h1 * s2_ref[...] + b2_ref[...], 0.0) * mask_ref[...]
        # TODO(synk): F.dropout (droprate > 0, training mode) not implemented; this is
        # the eval / droprate == 0 path of MaskBlock.

        # ---- conv2: value-level zero pad (no scratch) + one big-K matmul --------------
        a2 = a2.reshape(B, Ho, Wo, Cout)
        zw2 = jnp.zeros((B, Ho, 1, Cout), jnp.float32)
        a2p = jnp.concatenate([zw2, a2, zw2], axis=2)
        zh2 = jnp.zeros((B, 1, Wo + 2, Cout), jnp.float32)
        a2p = jnp.concatenate([zh2, a2p, zh2], axis=1)                # (B, Ho+2, Wo+2, C)
        taps2 = []
        for dh in range(3):
            for dw in range(3):
                t = a2p[:, dh:dh + Ho, dw:dw + Wo, :]                 # (B, Ho, Wo, Cout)
                taps2.append(t.reshape(M, Cout))
        lhs2 = jnp.concatenate(taps2, axis=-1).astype(jnp.bfloat16)   # (M, 9*Cout)
        acc2 = jnp.dot(lhs2, w2_ref[...],
                       preferred_element_type=jnp.float32)            # (M, Cout)

        # ---- residual (f32 add) --------------------------------------------------------
        if equal_in_out:
            res = x_ref[...].reshape(M, Cin)          # raw x -> bit-exact identity skip
        else:
            res = acc1[:, Cout:]                      # folded strided 1x1 shortcut

        o_ref[...] = (res + acc2).reshape(B, Ho, Wo, Cout)

    return kernel


# ---------------------------------------------------------------------------
# Wrapper: one fused pallas_call per MaskBlock
# ---------------------------------------------------------------------------
def fold_bn(bn):
    scale = bn["gamma"] / jnp.sqrt(bn["var"] + _EPS)
    bias = bn["beta"] - bn["mean"] * scale
    return scale, bias


def _pick_batch_block(N, H, W, Cin, Cout, stride):
    """Images per grid step: as many as a conservative VMEM budget allows (fits v7x's
    smaller scoped VMEM), while keeping grid >= 2 when N allows so the 'parallel' batch
    axis can feed both v7x TensorCores."""
    s = stride
    Ho = (H - 1) // s + 1
    Wo = (W - 1) // s + 1
    per_img = 4 * ((H + 2) * (W + 2) * Cin * 3 + Ho * Wo * Cout * 6)    # f32 acts/out
    per_img += 6 * Ho * Wo * 9 * (Cin + Cout)                           # im2col LHS
    budget = 24 << 20                                                   # ~24 MiB working set
    b = max(1, budget // max(per_img, 1))
    b = min(b, 32)                          # keep per-step latency modest
    b = min(b, max(1, -(-N // 2)))          # grid >= 2 when N >= 2 (v7x megacore)
    return int(b)


def mask_block_forward(x_nhwc, p, batch_block=None):
    N, H, W, Cin = x_nhwc.shape
    s = int(p["stride"])
    equal = bool(p["equalInOut"])
    Cout = p["conv2_w"].shape[0]
    Ho = (H - 1) // s + 1
    Wo = (W - 1) // s + 1
    if equal:
        assert s == 1 and Cin == Cout, "identity skip needs stride==1 and Cin==Cout"

    s1, b1 = fold_bn(p["bn1"])
    s2, b2 = fold_bn(p["bn2"])

    # Conv weights as tap-major (9*Cin, Cout) / (9*Cout, Cout) matrices, bf16 operands.
    w1_mat = jnp.transpose(p["conv1_w"], (2, 3, 1, 0)).reshape(9 * Cin, Cout)
    if not equal:
        wsc = jnp.transpose(p["conv_sc_w"][:, :, 0, 0])                       # (Cin, Cout)
        sc_cols = jnp.zeros((9 * Cin, Cout), jnp.float32).at[4 * Cin:5 * Cin, :].set(wsc)
        w1_full = jnp.concatenate([w1_mat, sc_cols], axis=1)                  # (9Cin, 2Cout)
    else:
        w1_full = w1_mat
    w1_full = w1_full.astype(jnp.bfloat16)
    w2_full = jnp.transpose(p["conv2_w"], (2, 3, 1, 0)).reshape(9 * Cout, Cout)
    w2_full = w2_full.astype(jnp.bfloat16)

    # ---- batch blocking (biggest lever: M = B_blk*Ho*Wo matmul rows per step) --------
    B_blk = batch_block if batch_block is not None else _pick_batch_block(
        N, H, W, Cin, Cout, s)
    n_steps = -(-N // B_blk)
    Np = n_steps * B_blk
    if Np != N:
        x_nhwc = jnp.concatenate(
            [x_nhwc, jnp.zeros((Np - N, H, W, Cin), x_nhwc.dtype)], axis=0)

    inputs, in_specs = [], []
    if s == 1:
        # Raw x in, zero-padded inside the kernel (no wrapper-side pad/copy of x).
        inputs += [x_nhwc, s1.reshape(1, Cin), b1.reshape(1, Cin)]
        in_specs += [
            pl.BlockSpec((B_blk, H, W, Cin), lambda n: (n, 0, 0, 0)),
            pl.BlockSpec((1, Cin), lambda n: (0, 0)),
            pl.BlockSpec((1, Cin), lambda n: (0, 0)),
        ]
    else:
        # Space-to-phase decomposition of zero-padded x (every strided 3x3 tap becomes a
        # contiguous in-kernel slice).  Padding is plain zeros -> interior values exact.
        xp = jnp.pad(x_nhwc, ((0, 0), (1, 1), (1, 1), (0, 0)))
        phases, smaps, bmaps = [], [], []
        for ph in range(s):
            for pw in range(s):
                pv = xp[:, ph::s, pw::s, :]                           # (Np, Hp, Wp, Cin)
                phases.append(pv)
                # Fold "is this an interior (non-padding) position" into the BN scale and
                # bias so the activation border is exactly 0 == conv1's zero padding.
                hin = (jnp.arange(ph, H + 2, s) >= 1) & (jnp.arange(ph, H + 2, s) <= H)
                win = (jnp.arange(pw, W + 2, s) >= 1) & (jnp.arange(pw, W + 2, s) <= W)
                m = (hin[:, None] & win[None, :]).astype(jnp.float32)[:, :, None]
                smaps.append(m * s1[None, None, :])
                bmaps.append(m * b1[None, None, :])
        inputs += phases + smaps + bmaps
        in_specs += [pl.BlockSpec((B_blk,) + t.shape[1:], lambda n: (n, 0, 0, 0))
                     for t in phases]
        in_specs += [pl.BlockSpec(t.shape, lambda n: (0, 0, 0)) for t in smaps + bmaps]

    inputs += [s2.reshape(1, Cout), b2.reshape(1, Cout), p["mask"].reshape(1, Cout),
               w1_full, w2_full]
    in_specs += [pl.BlockSpec((1, Cout), lambda n: (0, 0))] * 3
    in_specs += [pl.BlockSpec(w1_full.shape, lambda n: (0, 0)),
                 pl.BlockSpec(w2_full.shape, lambda n: (0, 0))]

    kernel = _make_mask_block_kernel(B_blk, H, W, Cin, Cout, s, equal)

    out = pl.pallas_call(
        kernel,
        out_shape=jax.ShapeDtypeStruct((Np, Ho, Wo, Cout), jnp.float32),
        grid=(n_steps,),                       # batch-blocked, megacore-shardable
        in_specs=in_specs,
        out_specs=pl.BlockSpec((B_blk, Ho, Wo, Cout), lambda n: (n, 0, 0, 0)),
        compiler_params=pltpu.CompilerParams(dimension_semantics=("parallel",)),
    )(*inputs)
    return out[:N] if Np != N else out


def mask_blocks_forward(x_nchw, blocks):
    x = jnp.transpose(x_nchw, (0, 2, 3, 1))      # NCHW -> NHWC (channels on lanes)
    for p in blocks:
        x = mask_block_forward(x, p)
    return jnp.transpose(x, (0, 3, 1, 2))        # NHWC -> NCHW


# ---------------------------------------------------------------------------
# Deterministic parameter construction (matches MaskBlock.__init__ shapes)
# ---------------------------------------------------------------------------
def init_bn(key, c):
    k1, k2, k3, k4 = jax.random.split(key, 4)
    return dict(
        gamma=jax.random.uniform(k1, (c,), jnp.float32, 0.5, 1.5),
        beta=0.1 * jax.random.normal(k2, (c,), jnp.float32),
        mean=0.1 * jax.random.normal(k3, (c,), jnp.float32),
        var=jax.random.uniform(k4, (c,), jnp.float32, 0.5, 1.5),
    )


def init_conv(key, cin, cout, k):
    std = (2.0 / (k * k * cout)) ** 0.5          # WideResNet He-style init
    return std * jax.random.normal(key, (cout, cin, k, k), jnp.float32)   # OIHW


def init_mask_block(key, cin, cout, stride, mask=None):
    ks = jax.random.split(key, 5)
    p = {
        "bn1": init_bn(ks[0], cin),
        "conv1_w": init_conv(ks[1], cin, cout, 3),
        "bn2": init_bn(ks[2], cout),
        "conv2_w": init_conv(ks[3], cout, cout, 3),
        "stride": stride,
        "equalInOut": cin == cout,
        "mask": jnp.ones((cout,), jnp.float32) if mask is None else mask,
    }
    if not p["equalInOut"]:
        p["conv_sc_w"] = init_conv(ks[4], cin, cout, 1)
    return p


# ---------------------------------------------------------------------------
# Pure-JAX reference (high precision, for correctness check only)
# ---------------------------------------------------------------------------
def _ref_bn_relu(x, bn):
    y = (x - bn["mean"]) / jnp.sqrt(bn["var"] + _EPS) * bn["gamma"] + bn["beta"]
    return jnp.maximum(y, 0.0)


def _ref_conv(x, w_oihw, stride, pad):
    w_hwio = jnp.transpose(w_oihw, (2, 3, 1, 0))
    return jax.lax.conv_general_dilated(
        x, w_hwio, (stride, stride), ((pad, pad), (pad, pad)),
        dimension_numbers=("NHWC", "HWIO", "NHWC"),
        precision=jax.lax.Precision.HIGHEST)


def _ref_block(x, p):
    s = p["stride"]
    a = _ref_bn_relu(x, p["bn1"])
    out = _ref_conv(a, p["conv1_w"], s, 1)
    out = _ref_bn_relu(out, p["bn2"]) * p["mask"][None, None, None, :]
    out = _ref_conv(out, p["conv2_w"], 1, 1)
    res = x if p["equalInOut"] else _ref_conv(a, p["conv_sc_w"], s, 0)
    return res + out


# ---------------------------------------------------------------------------
if __name__ == "__main__":
    key = jax.random.PRNGKey(0)
    kx, k1, k2 = jax.random.split(key, 3)

    # Typical WideResNet stage: MaskBlock(16->32, stride=2) then MaskBlock(32->32, stride=1)
    N, Cin, H, W = 4, 16, 16, 16
    Cout, stride = 32, 2

    x = jax.random.normal(kx, (N, Cin, H, W), jnp.float32)          # NCHW, like PyTorch

    mask2 = jnp.ones((Cout,), jnp.float32).at[jnp.array([3, 17])].set(0.0)  # pruned channels
    blocks = [
        init_mask_block(k1, Cin, Cout, stride),           # convShortcut path
        init_mask_block(k2, Cout, Cout, 1, mask=mask2),   # identity path + pruning mask
    ]

    fwd = jax.jit(lambda xx: mask_blocks_forward(xx, blocks))
    y = jax.block_until_ready(fwd(x))
    assert y.shape == (N, Cout, H // stride, W // stride)

    # reference check (independent, HIGHEST-precision f32 convs)
    xr = jnp.transpose(x, (0, 2, 3, 1))
    for p in blocks:
        xr = _ref_block(xr, p)
    yr = jnp.transpose(xr, (0, 3, 1, 2))
    err = float(jnp.max(jnp.abs(y - yr)))
    assert jnp.allclose(y, yr, atol=3e-2, rtol=3e-2), err

    print("KERNEL_OK")
</pallas_src>

<mosaic_0001>
module attributes {stable_mosaic.version = 11 : i64} {
  func.func @kernel(%arg0: i32, %arg1: memref<2x9x9x16xf32, #tpu.memory_space<vmem>>, %arg2: memref<2x9x9x16xf32, #tpu.memory_space<vmem>>, %arg3: memref<2x9x9x16xf32, #tpu.memory_space<vmem>>, %arg4: memref<2x9x9x16xf32, #tpu.memory_space<vmem>>, %arg5: memref<9x9x16xf32, #tpu.memory_space<vmem>>, %arg6: memref<9x9x16xf32, #tpu.memory_space<vmem>>, %arg7: memref<9x9x16xf32, #tpu.memory_space<vmem>>, %arg8: memref<9x9x16xf32, #tpu.memory_space<vmem>>, %arg9: memref<9x9x16xf32, #tpu.memory_space<vmem>>, %arg10: memref<9x9x16xf32, #tpu.memory_space<vmem>>, %arg11: memref<9x9x16xf32, #tpu.memory_space<vmem>>, %arg12: memref<9x9x16xf32, #tpu.memory_space<vmem>>, %arg13: memref<1x32xf32, #tpu.memory_space<vmem>>, %arg14: memref<1x32xf32, #tpu.memory_space<vmem>>, %arg15: memref<1x32xf32, #tpu.memory_space<vmem>>, %arg16: memref<144x64xbf16, #tpu.memory_space<vmem>>, %arg17: memref<288x32xbf16, #tpu.memory_space<vmem>>, %arg18: memref<2x8x8x32xf32, #tpu.memory_space<vmem>>) attributes {dimension_semantics = [#tpu.dimension_semantics<parallel>], iteration_bounds = array<i64: 2>, scalar_prefetch = 0 : i64, scratch_operands = 0 : i64, tpu.core_type = #tpu.core_type<tc>, window_params = [{transform_indices = @transform_0, window_bounds = array<i64: 2, 9, 9, 16>}, {transform_indices = @transform_1, window_bounds = array<i64: 2, 9, 9, 16>}, {transform_indices = @transform_2, window_bounds = array<i64: 2, 9, 9, 16>}, {transform_indices = @transform_3, window_bounds = array<i64: 2, 9, 9, 16>}, {pipeline_mode = #tpu.pipeline_mode<synchronous>, transform_indices = @transform_4, window_bounds = array<i64: 9, 9, 16>}, {pipeline_mode = #tpu.pipeline_mode<synchronous>, transform_indices = @transform_5, window_bounds = array<i64: 9, 9, 16>}, {pipeline_mode = #tpu.pipeline_mode<synchronous>, transform_indices = @transform_6, window_bounds = array<i64: 9, 9, 16>}, {pipeline_mode = #tpu.pipeline_mode<synchronous>, transform_indices = @transform_7, window_bounds = array<i64: 9, 9, 16>}, {pipeline_mode = #tpu.pipeline_mode<synchronous>, transform_indices = @transform_8, window_bounds = array<i64: 9, 9, 16>}, {pipeline_mode = #tpu.pipeline_mode<synchronous>, transform_indices = @transform_9, window_bounds = array<i64: 9, 9, 16>}, {pipeline_mode = #tpu.pipeline_mode<synchronous>, transform_indices = @transform_10, window_bounds = array<i64: 9, 9, 16>}, {pipeline_mode = #tpu.pipeline_mode<synchronous>, transform_indices = @transform_11, window_bounds = array<i64: 9, 9, 16>}, {pipeline_mode = #tpu.pipeline_mode<synchronous>, transform_indices = @transform_12, window_bounds = array<i64: 1, 32>}, {pipeline_mode = #tpu.pipeline_mode<synchronous>, transform_indices = @transform_13, window_bounds = array<i64: 1, 32>}, {pipeline_mode = #tpu.pipeline_mode<synchronous>, transform_indices = @transform_14, window_bounds = array<i64: 1, 32>}, {pipeline_mode = #tpu.pipeline_mode<synchronous>, transform_indices = @transform_15, window_bounds = array<i64: 144, 64>}, {pipeline_mode = #tpu.pipeline_mode<synchronous>, transform_indices = @transform_16, window_bounds = array<i64: 288, 32>}, {transform_indices = @transform_17, window_bounds = array<i64: 2, 8, 8, 32>}]} {
    %c0 = arith.constant 0 : index
    %c0_0 = arith.constant 0 : index
    %c0_1 = arith.constant 0 : index
    %c0_2 = arith.constant 0 : index
    %0 = vector.load %arg1[%c0, %c0_0, %c0_1, %c0_2] : memref<2x9x9x16xf32, #tpu.memory_space<vmem>>, vector<2x9x9x16xf32>
    %c0_3 = arith.constant 0 : index
    %c0_4 = arith.constant 0 : index
    %c0_5 = arith.constant 0 : index
    %1 = vector.load %arg5[%c0_3, %c0_4, %c0_5] : memref<9x9x16xf32, #tpu.memory_space<vmem>>, vector<9x9x16xf32>
    %2 = vector.shape_cast %1 : vector<9x9x16xf32> to vector<1x9x9x16xf32>
    %3 = vector.broadcast %2 : vector<1x9x9x16xf32> to vector<2x9x9x16xf32>
    %4 = arith.mulf %0, %3 : vector<2x9x9x16xf32>
    %c0_6 = arith.constant 0 : index
    %c0_7 = arith.constant 0 : index
    %c0_8 = arith.constant 0 : index
    %5 = vector.load %arg9[%c0_6, %c0_7, %c0_8] : memref<9x9x16xf32, #tpu.memory_space<vmem>>, vector<9x9x16xf32>
    %6 = vector.shape_cast %5 : vector<9x9x16xf32> to vector<1x9x9x16xf32>
    %7 = vector.broadcast %6 : vector<1x9x9x16xf32> to vector<2x9x9x16xf32>
    %8 = arith.addf %4, %7 : vector<2x9x9x16xf32>
    %cst = arith.constant 0.000000e+00 : f32
    %9 = vector.broadcast %cst : f32 to vector<2x9x9x16xf32>
    %10 = arith.maximumf %8, %9 : vector<2x9x9x16xf32>
    %c0_9 = arith.constant 0 : index
    %c0_10 = arith.constant 0 : index
    %c0_11 = arith.constant 0 : index
    %c0_12 = arith.constant 0 : index
    %11 = vector.load %arg2[%c0_9, %c0_10, %c0_11, %c0_12] : memref<2x9x9x16xf32, #tpu.memory_space<vmem>>, vector<2x9x9x16xf32>
    %c0_13 = arith.constant 0 : index
    %c0_14 = arith.constant 0 : index
    %c0_15 = arith.constant 0 : index
    %12 = vector.load %arg6[%c0_13, %c0_14, %c0_15] : memref<9x9x16xf32, #tpu.memory_space<vmem>>, vector<9x9x16xf32>
    %13 = vector.shape_cast %12 : vector<9x9x16xf32> to vector<1x9x9x16xf32>
    %14 = vector.broadcast %13 : vector<1x9x9x16xf32> to vector<2x9x9x16xf32>
    %15 = arith.mulf %11, %14 : vector<2x9x9x16xf32>
    %c0_16 = arith.constant 0 : index
    %c0_17 = arith.constant 0 : index
    %c0_18 = arith.constant 0 : index
    %16 = vector.load %arg10[%c0_16, %c0_17, %c0_18] : memref<9x9x16xf32, #tpu.memory_space<vmem>>, vector<9x9x16xf32>
    %17 = vector.shape_cast %16 : vector<9x9x16xf32> to vector<1x9x9x16xf32>
    %18 = vector.broadcast %17 : vector<1x9x9x16xf32> to vector<2x9x9x16xf32>
    %19 = arith.addf %15, %18 : vector<2x9x9x16xf32>
    %cst_19 = arith.constant 0.000000e+00 : f32
    %20 = vector.broadcast %cst_19 : f32 to vector<2x9x9x16xf32>
    %21 = arith.maximumf %19, %20 : vector<2x9x9x16xf32>
    %c0_20 = arith.constant 0 : index
    %c0_21 = arith.constant 0 : index
    %c0_22 = arith.constant 0 : index
    %c0_23 = arith.constant 0 : index
    %22 = vector.load %arg3[%c0_20, %c0_21, %c0_22, %c0_23] : memref<2x9x9x16xf32, #tpu.memory_space<vmem>>, vector<2x9x9x16xf32>
    %c0_24 = arith.constant 0 : index
    %c0_25 = arith.constant 0 : index
    %c0_26 = arith.constant 0 : index
    %23 = vector.load %arg7[%c0_24, %c0_25, %c0_26] : memref<9x9x16xf32, #tpu.memory_space<vmem>>, vector<9x9x16xf32>
    %24 = vector.shape_cast %23 : vector<9x9x16xf32> to vector<1x9x9x16xf32>
    %25 = vector.broadcast %24 : vector<1x9x9x16xf32> to vector<2x9x9x16xf32>
    %26 = arith.mulf %22, %25 : vector<2x9x9x16xf32>
    %c0_27 = arith.constant 0 : index
    %c0_28 = arith.constant 0 : index
    %c0_29 = arith.constant 0 : index
    %27 = vector.load %arg11[%c0_27, %c0_28, %c0_29] : memref<9x9x16xf32, #tpu.memory_space<vmem>>, vector<9x9x16xf32>
    %28 = vector.shape_cast %27 : vector<9x9x16xf32> to vector<1x9x9x16xf32>
    %29 = vector.broadcast %28 : vector<1x9x9x16xf32> to vector<2x9x9x16xf32>
    %30 = arith.addf %26, %29 : vector<2x9x9x16xf32>
    %cst_30 = arith.constant 0.000000e+00 : f32
    %31 = vector.broadcast %cst_30 : f32 to vector<2x9x9x16xf32>
    %32 = arith.maximumf %30, %31 : vector<2x9x9x16xf32>
    %c0_31 = arith.constant 0 : index
    %c0_32 = arith.constant 0 : index
    %c0_33 = arith.constant 0 : index
    %c0_34 = arith.constant 0 : index
    %33 = vector.load %arg4[%c0_31, %c0_32, %c0_33, %c0_34] : memref<2x9x9x16xf32, #tpu.memory_space<vmem>>, vector<2x9x9x16xf32>
    %c0_35 = arith.constant 0 : index
    %c0_36 = arith.constant 0 : index
    %c0_37 = arith.constant 0 : index
    %34 = vector.load %arg8[%c0_35, %c0_36, %c0_37] : memref<9x9x16xf32, #tpu.memory_space<vmem>>, vector<9x9x16xf32>
    %35 = vector.shape_cast %34 : vector<9x9x16xf32> to vector<1x9x9x16xf32>
    %36 = vector.broadcast %35 : vector<1x9x9x16xf32> to vector<2x9x9x16xf32>
    %37 = arith.mulf %33, %36 : vector<2x9x9x16xf32>
    %c0_38 = arith.constant 0 : index
    %c0_39 = arith.constant 0 : index
    %c0_40 = arith.constant 0 : index
    %38 = vector.load %arg12[%c0_38, %c0_39, %c0_40] : memref<9x9x16xf32, #tpu.memory_space<vmem>>, vector<9x9x16xf32>
    %39 = vector.shape_cast %38 : vector<9x9x16xf32> to vector<1x9x9x16xf32>
    %40 = vector.broadcast %39 : vector<1x9x9x16xf32> to vector<2x9x9x16xf32>
    %41 = arith.addf %37, %40 : vector<2x9x9x16xf32>
    %cst_41 = arith.constant 0.000000e+00 : f32
    %42 = vector.broadcast %cst_41 : f32 to vector<2x9x9x16xf32>
    %43 = arith.maximumf %41, %42 : vector<2x9x9x16xf32>
    %44 = vector.extract_strided_slice %10 {offsets = [0, 0, 0, 0], sizes = [2, 8, 8, 16], strides = [1, 1, 1, 1]} : vector<2x9x9x16xf32> to vector<2x8x8x16xf32>
    %45 = vector.shape_cast %44 : vector<2x8x8x16xf32> to vector<128x16xf32>
    %46 = vector.extract_strided_slice %21 {offsets = [0, 0, 0, 0], sizes = [2, 8, 8, 16], strides = [1, 1, 1, 1]} : vector<2x9x9x16xf32> to vector<2x8x8x16xf32>
    %47 = vector.shape_cast %46 : vector<2x8x8x16xf32> to vector<128x16xf32>
    %48 = vector.extract_strided_slice %10 {offsets = [0, 0, 1, 0], sizes = [2, 8, 8, 16], strides = [1, 1, 1, 1]} : vector<2x9x9x16xf32> to vector<2x8x8x16xf32>
    %49 = vector.shape_cast %48 : vector<2x8x8x16xf32> to vector<128x16xf32>
    %50 = vector.extract_strided_slice %32 {offsets = [0, 0, 0, 0], sizes = [2, 8, 8, 16], strides = [1, 1, 1, 1]} : vector<2x9x9x16xf32> to vector<2x8x8x16xf32>
    %51 = vector.shape_cast %50 : vector<2x8x8x16xf32> to vector<128x16xf32>
    %52 = vector.extract_strided_slice %43 {offsets = [0, 0, 0, 0], sizes = [2, 8, 8, 16], strides = [1, 1, 1, 1]} : vector<2x9x9x16xf32> to vector<2x8x8x16xf32>
    %53 = vector.shape_cast %52 : vector<2x8x8x16xf32> to vector<128x16xf32>
    %54 = vector.extract_strided_slice %32 {offsets = [0, 0, 1, 0], sizes = [2, 8, 8, 16], strides = [1, 1, 1, 1]} : vector<2x9x9x16xf32> to vector<2x8x8x16xf32>
    %55 = vector.shape_cast %54 : vector<2x8x8x16xf32> to vector<128x16xf32>
    %56 = vector.extract_strided_slice %10 {offsets = [0, 1, 0, 0], sizes = [2, 8, 8, 16], strides = [1, 1, 1, 1]} : vector<2x9x9x16xf32> to vector<2x8x8x16xf32>
    %57 = vector.shape_cast %56 : vector<2x8x8x16xf32> to vector<128x16xf32>
    %58 = vector.extract_strided_slice %21 {offsets = [0, 1, 0, 0], sizes = [2, 8, 8, 16], strides = [1, 1, 1, 1]} : vector<2x9x9x16xf32> to vector<2x8x8x16xf32>
    %59 = vector.shape_cast %58 : vector<2x8x8x16xf32> to vector<128x16xf32>
    %60 = vector.extract_strided_slice %10 {offsets = [0, 1, 1, 0], sizes = [2, 8, 8, 16], strides = [1, 1, 1, 1]} : vector<2x9x9x16xf32> to vector<2x8x8x16xf32>
    %61 = vector.shape_cast %60 : vector<2x8x8x16xf32> to vector<128x16xf32>
    %62 = tpu.concatenate %45, %47, %49, %51, %53, %55, %57, %59, %61 in 1 : vector<128x16xf32>, vector<128x16xf32>, vector<128x16xf32>, vector<128x16xf32>, vector<128x16xf32>, vector<128x16xf32>, vector<128x16xf32>, vector<128x16xf32>, vector<128x16xf32> -> vector<128x144xf32>
    %63 = arith.truncf %62 : vector<128x144xf32> to vector<128x144xbf16>
    %c0_42 = arith.constant 0 : index
    %c0_43 = arith.constant 0 : index
    %64 = vector.load %arg16[%c0_42, %c0_43] : memref<144x64xbf16, #tpu.memory_space<vmem>>, vector<144x64xbf16>
    %cst_44 = arith.constant dense<0.000000e+00> : vector<128x64xf32>
    %65 = tpu.matmul %63, %64, %cst_44 {dimension_numbers = #tpu.dot_dimension_numbers<[1], [0], [0], [1], [0, 0, 1, 1], [], []>} : vector<128x144xbf16>, vector<144x64xbf16>, vector<128x64xf32> -> vector<128x64xf32>
    %66 = vector.extract_strided_slice %65 {offsets = [0, 0], sizes = [128, 32], strides = [1, 1]} : vector<128x64xf32> to vector<128x32xf32>
    %c0_45 = arith.constant 0 : index
    %c0_46 = arith.constant 0 : index
    %67 = vector.load %arg13[%c0_45, %c0_46] : memref<1x32xf32, #tpu.memory_space<vmem>>, vector<1x32xf32>
    %68 = vector.broadcast %67 : vector<1x32xf32> to vector<128x32xf32>
    %69 = arith.mulf %66, %68 : vector<128x32xf32>
    %c0_47 = arith.constant 0 : index
    %c0_48 = arith.constant 0 : index
    %70 = vector.load %arg14[%c0_47, %c0_48] : memref<1x32xf32, #tpu.memory_space<vmem>>, vector<1x32xf32>
    %71 = vector.broadcast %70 : vector<1x32xf32> to vector<128x32xf32>
    %72 = arith.addf %69, %71 : vector<128x32xf32>
    %cst_49 = arith.constant 0.000000e+00 : f32
    %73 = vector.broadcast %cst_49 : f32 to vector<128x32xf32>
    %74 = arith.maximumf %72, %73 : vector<128x32xf32>
    %c0_50 = arith.constant 0 : index
    %c0_51 = arith.constant 0 : index
    %75 = vector.load %arg15[%c0_50, %c0_51] : memref<1x32xf32, #tpu.memory_space<vmem>>, vector<1x32xf32>
    %76 = vector.broadcast %75 : vector<1x32xf32> to vector<128x32xf32>
    %77 = arith.mulf %74, %76 : vector<128x32xf32>
    %78 = vector.shape_cast %77 : vector<128x32xf32> to vector<2x8x8x32xf32>
    %cst_52 = arith.constant 0.000000e+00 : f32
    %79 = vector.broadcast %cst_52 : f32 to vector<2x8x1x32xf32>
    %80 = tpu.concatenate %79, %78, %79 in 2 : vector<2x8x1x32xf32>, vector<2x8x8x32xf32>, vector<2x8x1x32xf32> -> vector<2x8x10x32xf32>
    %cst_53 = arith.constant 0.000000e+00 : f32
    %81 = vector.broadcast %cst_53 : f32 to vector<2x1x10x32xf32>
    %82 = tpu.concatenate %81, %80, %81 in 1 : vector<2x1x10x32xf32>, vector<2x8x10x32xf32>, vector<2x1x10x32xf32> -> vector<2x10x10x32xf32>
    %83 = vector.extract_strided_slice %82 {offsets = [0, 0, 0, 0], sizes = [2, 8, 8, 32], strides = [1, 1, 1, 1]} : vector<2x10x10x32xf32> to vector<2x8x8x32xf32>
    %84 = vector.shape_cast %83 : vector<2x8x8x32xf32> to vector<128x32xf32>
    %85 = vector.extract_strided_slice %82 {offsets = [0, 0, 1, 0], sizes = [2, 8, 8, 32], strides = [1, 1, 1, 1]} : vector<2x10x10x32xf32> to vector<2x8x8x32xf32>
    %86 = vector.shape_cast %85 : vector<2x8x8x32xf32> to vector<128x32xf32>
    %87 = vector.extract_strided_slice %82 {offsets = [0, 0, 2, 0], sizes = [2, 8, 8, 32], strides = [1, 1, 1, 1]} : vector<2x10x10x32xf32> to vector<2x8x8x32xf32>
    %88 = vector.shape_cast %87 : vector<2x8x8x32xf32> to vector<128x32xf32>
    %89 = vector.extract_strided_slice %82 {offsets = [0, 1, 0, 0], sizes = [2, 8, 8, 32], strides = [1, 1, 1, 1]} : vector<2x10x10x32xf32> to vector<2x8x8x32xf32>
    %90 = vector.shape_cast %89 : vector<2x8x8x32xf32> to vector<128x32xf32>
    %91 = vector.extract_strided_slice %82 {offsets = [0, 1, 1, 0], sizes = [2, 8, 8, 32], strides = [1, 1, 1, 1]} : vector<2x10x10x32xf32> to vector<2x8x8x32xf32>
    %92 = vector.shape_cast %91 : vector<2x8x8x32xf32> to vector<128x32xf32>
    %93 = vector.extract_strided_slice %82 {offsets = [0, 1, 2, 0], sizes = [2, 8, 8, 32], strides = [1, 1, 1, 1]} : vector<2x10x10x32xf32> to vector<2x8x8x32xf32>
    %94 = vector.shape_cast %93 : vector<2x8x8x32xf32> to vector<128x32xf32>
    %95 = vector.extract_strided_slice %82 {offsets = [0, 2, 0, 0], sizes = [2, 8, 8, 32], strides = [1, 1, 1, 1]} : vector<2x10x10x32xf32> to vector<2x8x8x32xf32>
    %96 = vector.shape_cast %95 : vector<2x8x8x32xf32> to vector<128x32xf32>
    %97 = vector.extract_strided_slice %82 {offsets = [0, 2, 1, 0], sizes = [2, 8, 8, 32], strides = [1, 1, 1, 1]} : vector<2x10x10x32xf32> to vector<2x8x8x32xf32>
    %98 = vector.shape_cast %97 : vector<2x8x8x32xf32> to vector<128x32xf32>
    %99 = vector.extract_strided_slice %82 {offsets = [0, 2, 2, 0], sizes = [2, 8, 8, 32], strides = [1, 1, 1, 1]} : vector<2x10x10x32xf32> to vector<2x8x8x32xf32>
    %100 = vector.shape_cast %99 : vector<2x8x8x32xf32> to vector<128x32xf32>
    %101 = tpu.concatenate %84, %86, %88, %90, %92, %94, %96, %98, %100 in 1 : vector<128x32xf32>, vector<128x32xf32>, vector<128x32xf32>, vector<128x32xf32>, vector<128x32xf32>, vector<128x32xf32>, vector<128x32xf32>, vector<128x32xf32>, vector<128x32xf32> -> vector<128x288xf32>
    %102 = arith.truncf %101 : vector<128x288xf32> to vector<128x288xbf16>
    %c0_54 = arith.constant 0 : index
    %c0_55 = arith.constant 0 : index
    %103 = vector.load %arg17[%c0_54, %c0_55] : memref<288x32xbf16, #tpu.memory_space<vmem>>, vector<288x32xbf16>
    %cst_56 = arith.constant dense<0.000000e+00> : vector<128x32xf32>
    %104 = tpu.matmul %102, %103, %cst_56 {dimension_numbers = #tpu.dot_dimension_numbers<[1], [0], [0], [1], [0, 0, 1, 1], [], []>} : vector<128x288xbf16>, vector<288x32xbf16>, vector<128x32xf32> -> vector<128x32xf32>
    %105 = vector.extract_strided_slice %65 {offsets = [0, 32], sizes = [128, 32], strides = [1, 1]} : vector<128x64xf32> to vector<128x32xf32>
    %106 = arith.addf %105, %104 : vector<128x32xf32>
    %107 = vector.shape_cast %106 : vector<128x32xf32> to vector<2x8x8x32xf32>
    %c0_57 = arith.constant 0 : index
    %c0_58 = arith.constant 0 : index
    %c0_59 = arith.constant 0 : index
    %c0_60 = arith.constant 0 : index
    %108 = vector.load %arg18[%c0_57, %c0_58, %c0_59, %c0_60] : memref<2x8x8x32xf32, #tpu.memory_space<vmem>>, vector<2x8x8x32xf32>
    tpu.vector_store %arg18[%c0_57, %c0_58, %c0_59, %c0_60], %107 {strides = array<i32>} : memref<2x8x8x32xf32, #tpu.memory_space<vmem>>, vector<2x8x8x32xf32>,
    return
  }
  func.func @transform_0(%arg0: i32) -> (i32, i32, i32, i32) {
    %c0_i32 = arith.constant 0 : i32
    %c0_i32_0 = arith.constant 0 : i32
    %c0_i32_1 = arith.constant 0 : i32
    %c0_i32_2 = arith.constant 0 : i32
    return %arg0, %c0_i32, %c0_i32_0, %c0_i32_1 : i32, i32, i32, i32
  }
  func.func @transform_1(%arg0: i32) -> (i32, i32, i32, i32) {
    %c0_i32 = arith.constant 0 : i32
    %c0_i32_0 = arith.constant 0 : i32
    %c0_i32_1 = arith.constant 0 : i32
    %c0_i32_2 = arith.constant 0 : i32
    return %arg0, %c0_i32, %c0_i32_0, %c0_i32_1 : i32, i32, i32, i32
  }
  func.func @transform_2(%arg0: i32) -> (i32, i32, i32, i32) {
    %c0_i32 = arith.constant 0 : i32
    %c0_i32_0 = arith.constant 0 : i32
    %c0_i32_1 = arith.constant 0 : i32
    %c0_i32_2 = arith.constant 0 : i32
    return %arg0, %c0_i32, %c0_i32_0, %c0_i32_1 : i32, i32, i32, i32
  }
  func.func @transform_3(%arg0: i32) -> (i32, i32, i32, i32) {
    %c0_i32 = arith.constant 0 : i32
    %c0_i32_0 = arith.constant 0 : i32
    %c0_i32_1 = arith.constant 0 : i32
    %c0_i32_2 = arith.constant 0 : i32
    return %arg0, %c0_i32, %c0_i32_0, %c0_i32_1 : i32, i32, i32, i32
  }
  func.func @transform_4(%arg0: i32) -> (i32, i32, i32) {
    %c0_i32 = arith.constant 0 : i32
    %c0_i32_0 = arith.constant 0 : i32
    %c0_i32_1 = arith.constant 0 : i32
    %c0_i32_2 = arith.constant 0 : i32
    return %c0_i32, %c0_i32_0, %c0_i32_1 : i32, i32, i32
  }
  func.func @transform_5(%arg0: i32) -> (i32, i32, i32) {
    %c0_i32 = arith.constant 0 : i32
    %c0_i32_0 = arith.constant 0 : i32
    %c0_i32_1 = arith.constant 0 : i32
    %c0_i32_2 = arith.constant 0 : i32
    return %c0_i32, %c0_i32_0, %c0_i32_1 : i32, i32, i32
  }
  func.func @transform_6(%arg0: i32) -> (i32, i32, i32) {
    %c0_i32 = arith.constant 0 : i32
    %c0_i32_0 = arith.constant 0 : i32
    %c0_i32_1 = arith.constant 0 : i32
    %c0_i32_2 = arith.constant 0 : i32
    return %c0_i32, %c0_i32_0, %c0_i32_1 : i32, i32, i32
  }
  func.func @transform_7(%arg0: i32) -> (i32, i32, i32) {
    %c0_i32 = arith.constant 0 : i32
    %c0_i32_0 = arith.constant 0 : i32
    %c0_i32_1 = arith.constant 0 : i32
    %c0_i32_2 = arith.constant 0 : i32
    return %c0_i32, %c0_i32_0, %c0_i32_1 : i32, i32, i32
  }
  func.func @transform_8(%arg0: i32) -> (i32, i32, i32) {
    %c0_i32 = arith.constant 0 : i32
    %c0_i32_0 = arith.constant 0 : i32
    %c0_i32_1 = arith.constant 0 : i32
    %c0_i32_2 = arith.constant 0 : i32
    return %c0_i32, %c0_i32_0, %c0_i32_1 : i32, i32, i32
  }
  func.func @transform_9(%arg0: i32) -> (i32, i32, i32) {
    %c0_i32 = arith.constant 0 : i32
    %c0_i32_0 = arith.constant 0 : i32
    %c0_i32_1 = arith.constant 0 : i32
    %c0_i32_2 = arith.constant 0 : i32
    return %c0_i32, %c0_i32_0, %c0_i32_1 : i32, i32, i32
  }
  func.func @transform_10(%arg0: i32) -> (i32, i32, i32) {
    %c0_i32 = arith.constant 0 : i32
    %c0_i32_0 = arith.constant 0 : i32
    %c0_i32_1 = arith.constant 0 : i32
    %c0_i32_2 = arith.constant 0 : i32
    return %c0_i32, %c0_i32_0, %c0_i32_1 : i32, i32, i32
  }
  func.func @transform_11(%arg0: i32) -> (i32, i32, i32) {
    %c0_i32 = arith.constant 0 : i32
    %c0_i32_0 = arith.constant 0 : i32
    %c0_i32_1 = arith.constant 0 : i32
    %c0_i32_2 = arith.constant 0 : i32
    return %c0_i32, %c0_i32_0, %c0_i32_1 : i32, i32, i32
  }
  func.func @transform_12(%arg0: i32) -> (i32, i32) {
    %c0_i32 = arith.constant 0 : i32
    %c0_i32_0 = arith.constant 0 : i32
    %c0_i32_1 = arith.constant 0 : i32
    return %c0_i32, %c0_i32_0 : i32, i32
  }
  func.func @transform_13(%arg0: i32) -> (i32, i32) {
    %c0_i32 = arith.constant 0 : i32
    %c0_i32_0 = arith.constant 0 : i32
    %c0_i32_1 = arith.constant 0 : i32
    return %c0_i32, %c0_i32_0 : i32, i32
  }
  func.func @transform_14(%arg0: i32) -> (i32, i32) {
    %c0_i32 = arith.constant 0 : i32
    %c0_i32_0 = arith.constant 0 : i32
    %c0_i32_1 = arith.constant 0 : i32
    return %c0_i32, %c0_i32_0 : i32, i32
  }
  func.func @transform_15(%arg0: i32) -> (i32, i32) {
    %c0_i32 = arith.constant 0 : i32
    %c0_i32_0 = arith.constant 0 : i32
    %c0_i32_1 = arith.constant 0 : i32
    return %c0_i32, %c0_i32_0 : i32, i32
  }
  func.func @transform_16(%arg0: i32) -> (i32, i32) {
    %c0_i32 = arith.constant 0 : i32
    %c0_i32_0 = arith.constant 0 : i32
    %c0_i32_1 = arith.constant 0 : i32
    return %c0_i32, %c0_i32_0 : i32, i32
  }
  func.func @transform_17(%arg0: i32) -> (i32, i32, i32, i32) {
    %c0_i32 = arith.constant 0 : i32
    %c0_i32_0 = arith.constant 0 : i32
    %c0_i32_1 = arith.constant 0 : i32
    %c0_i32_2 = arith.constant 0 : i32
    return %arg0, %c0_i32, %c0_i32_0, %c0_i32_1 : i32, i32, i32, i32
  }
}

module attributes {stable_mosaic.version = 11 : i64} {
  func.func @kernel(%arg0: i32, %arg1: memref<2x8x8x32xf32, #tpu.memory_space<vmem>>, %arg2: memref<1x32xf32, #tpu.memory_space<vmem>>, %arg3: memref<1x32xf32, #tpu.memory_space<vmem>>, %arg4: memref<1x32xf32, #tpu.memory_space<vmem>>, %arg5: memref<1x32xf32, #tpu.memory_space<vmem>>, %arg6: memref<1x32xf32, #tpu.memory_space<vmem>>, %arg7: memref<288x32xbf16, #tpu.memory_space<vmem>>, %arg8: memref<288x32xbf16, #tpu.memory_space<vmem>>, %arg9: memref<2x8x8x32xf32, #tpu.memory_space<vmem>>) attributes {dimension_semantics = [#tpu.dimension_semantics<parallel>], iteration_bounds = array<i64: 2>, scalar_prefetch = 0 : i64, scratch_operands = 0 : i64, tpu.core_type = #tpu.core_type<tc>, window_params = [{transform_indices = @transform_0, window_bounds = array<i64: 2, 8, 8, 32>}, {pipeline_mode = #tpu.pipeline_mode<synchronous>, transform_indices = @transform_1, window_bounds = array<i64: 1, 32>}, {pipeline_mode = #tpu.pipeline_mode<synchronous>, transform_indices = @transform_2, window_bounds = array<i64: 1, 32>}, {pipeline_mode = #tpu.pipeline_mode<synchronous>, transform_indices = @transform_3, window_bounds = array<i64: 1, 32>}, {pipeline_mode = #tpu.pipeline_mode<synchronous>, transform_indices = @transform_4, window_bounds = array<i64: 1, 32>}, {pipeline_mode = #tpu.pipeline_mode<synchronous>, transform_indices = @transform_5, window_bounds = array<i64: 1, 32>}, {pipeline_mode = #tpu.pipeline_mode<synchronous>, transform_indices = @transform_6, window_bounds = array<i64: 288, 32>}, {pipeline_mode = #tpu.pipeline_mode<synchronous>, transform_indices = @transform_7, window_bounds = array<i64: 288, 32>}, {transform_indices = @transform_8, window_bounds = array<i64: 2, 8, 8, 32>}]} {
    %c0 = arith.constant 0 : index
    %c0_0 = arith.constant 0 : index
    %c0_1 = arith.constant 0 : index
    %c0_2 = arith.constant 0 : index
    %0 = vector.load %arg1[%c0, %c0_0, %c0_1, %c0_2] : memref<2x8x8x32xf32, #tpu.memory_space<vmem>>, vector<2x8x8x32xf32>
    %c0_3 = arith.constant 0 : index
    %c0_4 = arith.constant 0 : index
    %1 = vector.load %arg2[%c0_3, %c0_4] : memref<1x32xf32, #tpu.memory_space<vmem>>, vector<1x32xf32>
    %2 = vector.shape_cast %1 : vector<1x32xf32> to vector<1x1x1x32xf32>
    %3 = vector.broadcast %2 : vector<1x1x1x32xf32> to vector<2x8x8x32xf32>
    %4 = arith.mulf %0, %3 : vector<2x8x8x32xf32>
    %c0_5 = arith.constant 0 : index
    %c0_6 = arith.constant 0 : index
    %5 = vector.load %arg3[%c0_5, %c0_6] : memref<1x32xf32, #tpu.memory_space<vmem>>, vector<1x32xf32>
    %6 = vector.shape_cast %5 : vector<1x32xf32> to vector<1x1x1x32xf32>
    %7 = vector.broadcast %6 : vector<1x1x1x32xf32> to vector<2x8x8x32xf32>
    %8 = arith.addf %4, %7 : vector<2x8x8x32xf32>
    %cst = arith.constant 0.000000e+00 : f32
    %9 = vector.broadcast %cst : f32 to vector<2x8x8x32xf32>
    %10 = arith.maximumf %8, %9 : vector<2x8x8x32xf32>
    %cst_7 = arith.constant 0.000000e+00 : f32
    %11 = vector.broadcast %cst_7 : f32 to vector<2x8x1x32xf32>
    %12 = tpu.concatenate %11, %10, %11 in 2 : vector<2x8x1x32xf32>, vector<2x8x8x32xf32>, vector<2x8x1x32xf32> -> vector<2x8x10x32xf32>
    %cst_8 = arith.constant 0.000000e+00 : f32
    %13 = vector.broadcast %cst_8 : f32 to vector<2x1x10x32xf32>
    %14 = tpu.concatenate %13, %12, %13 in 1 : vector<2x1x10x32xf32>, vector<2x8x10x32xf32>, vector<2x1x10x32xf32> -> vector<2x10x10x32xf32>
    %15 = vector.extract_strided_slice %14 {offsets = [0, 0, 0, 0], sizes = [2, 8, 8, 32], strides = [1, 1, 1, 1]} : vector<2x10x10x32xf32> to vector<2x8x8x32xf32>
    %16 = vector.shape_cast %15 : vector<2x8x8x32xf32> to vector<128x32xf32>
    %17 = vector.extract_strided_slice %14 {offsets = [0, 0, 1, 0], sizes = [2, 8, 8, 32], strides = [1, 1, 1, 1]} : vector<2x10x10x32xf32> to vector<2x8x8x32xf32>
    %18 = vector.shape_cast %17 : vector<2x8x8x32xf32> to vector<128x32xf32>
    %19 = vector.extract_strided_slice %14 {offsets = [0, 0, 2, 0], sizes = [2, 8, 8, 32], strides = [1, 1, 1, 1]} : vector<2x10x10x32xf32> to vector<2x8x8x32xf32>
    %20 = vector.shape_cast %19 : vector<2x8x8x32xf32> to vector<128x32xf32>
    %21 = vector.extract_strided_slice %14 {offsets = [0, 1, 0, 0], sizes = [2, 8, 8, 32], strides = [1, 1, 1, 1]} : vector<2x10x10x32xf32> to vector<2x8x8x32xf32>
    %22 = vector.shape_cast %21 : vector<2x8x8x32xf32> to vector<128x32xf32>
    %23 = vector.extract_strided_slice %14 {offsets = [0, 1, 1, 0], sizes = [2, 8, 8, 32], strides = [1, 1, 1, 1]} : vector<2x10x10x32xf32> to vector<2x8x8x32xf32>
    %24 = vector.shape_cast %23 : vector<2x8x8x32xf32> to vector<128x32xf32>
    %25 = vector.extract_strided_slice %14 {offsets = [0, 1, 2, 0], sizes = [2, 8, 8, 32], strides = [1, 1, 1, 1]} : vector<2x10x10x32xf32> to vector<2x8x8x32xf32>
    %26 = vector.shape_cast %25 : vector<2x8x8x32xf32> to vector<128x32xf32>
    %27 = vector.extract_strided_slice %14 {offsets = [0, 2, 0, 0], sizes = [2, 8, 8, 32], strides = [1, 1, 1, 1]} : vector<2x10x10x32xf32> to vector<2x8x8x32xf32>
    %28 = vector.shape_cast %27 : vector<2x8x8x32xf32> to vector<128x32xf32>
    %29 = vector.extract_strided_slice %14 {offsets = [0, 2, 1, 0], sizes = [2, 8, 8, 32], strides = [1, 1, 1, 1]} : vector<2x10x10x32xf32> to vector<2x8x8x32xf32>
    %30 = vector.shape_cast %29 : vector<2x8x8x32xf32> to vector<128x32xf32>
    %31 = vector.extract_strided_slice %14 {offsets = [0, 2, 2, 0], sizes = [2, 8, 8, 32], strides = [1, 1, 1, 1]} : vector<2x10x10x32xf32> to vector<2x8x8x32xf32>
    %32 = vector.shape_cast %31 : vector<2x8x8x32xf32> to vector<128x32xf32>
    %33 = tpu.concatenate %16, %18, %20, %22, %24, %26, %28, %30, %32 in 1 : vector<128x32xf32>, vector<128x32xf32>, vector<128x32xf32>, vector<128x32xf32>, vector<128x32xf32>, vector<128x32xf32>, vector<128x32xf32>, vector<128x32xf32>, vector<128x32xf32> -> vector<128x288xf32>
    %34 = arith.truncf %33 : vector<128x288xf32> to vector<128x288xbf16>
    %c0_9 = arith.constant 0 : index
    %c0_10 = arith.constant 0 : index
    %35 = vector.load %arg7[%c0_9, %c0_10] : memref<288x32xbf16, #tpu.memory_space<vmem>>, vector<288x32xbf16>
    %cst_11 = arith.constant dense<0.000000e+00> : vector<128x32xf32>
    %36 = tpu.matmul %34, %35, %cst_11 {dimension_numbers = #tpu.dot_dimension_numbers<[1], [0], [0], [1], [0, 0, 1, 1], [], []>} : vector<128x288xbf16>, vector<288x32xbf16>, vector<128x32xf32> -> vector<128x32xf32>
    %c0_12 = arith.constant 0 : index
    %c0_13 = arith.constant 0 : index
    %37 = vector.load %arg4[%c0_12, %c0_13] : memref<1x32xf32, #tpu.memory_space<vmem>>, vector<1x32xf32>
    %38 = vector.broadcast %37 : vector<1x32xf32> to vector<128x32xf32>
    %39 = arith.mulf %36, %38 : vector<128x32xf32>
    %c0_14 = arith.constant 0 : index
    %c0_15 = arith.constant 0 : index
    %40 = vector.load %arg5[%c0_14, %c0_15] : memref<1x32xf32, #tpu.memory_space<vmem>>, vector<1x32xf32>
    %41 = vector.broadcast %40 : vector<1x32xf32> to vector<128x32xf32>
    %42 = arith.addf %39, %41 : vector<128x32xf32>
    %cst_16 = arith.constant 0.000000e+00 : f32
    %43 = vector.broadcast %cst_16 : f32 to vector<128x32xf32>
    %44 = arith.maximumf %42, %43 : vector<128x32xf32>
    %c0_17 = arith.constant 0 : index
    %c0_18 = arith.constant 0 : index
    %45 = vector.load %arg6[%c0_17, %c0_18] : memref<1x32xf32, #tpu.memory_space<vmem>>, vector<1x32xf32>
    %46 = vector.broadcast %45 : vector<1x32xf32> to vector<128x32xf32>
    %47 = arith.mulf %44, %46 : vector<128x32xf32>
    %48 = vector.shape_cast %47 : vector<128x32xf32> to vector<2x8x8x32xf32>
    %cst_19 = arith.constant 0.000000e+00 : f32
    %49 = vector.broadcast %cst_19 : f32 to vector<2x8x1x32xf32>
    %50 = tpu.concatenate %49, %48, %49 in 2 : vector<2x8x1x32xf32>, vector<2x8x8x32xf32>, vector<2x8x1x32xf32> -> vector<2x8x10x32xf32>
    %cst_20 = arith.constant 0.000000e+00 : f32
    %51 = vector.broadcast %cst_20 : f32 to vector<2x1x10x32xf32>
    %52 = tpu.concatenate %51, %50, %51 in 1 : vector<2x1x10x32xf32>, vector<2x8x10x32xf32>, vector<2x1x10x32xf32> -> vector<2x10x10x32xf32>
    %53 = vector.extract_strided_slice %52 {offsets = [0, 0, 0, 0], sizes = [2, 8, 8, 32], strides = [1, 1, 1, 1]} : vector<2x10x10x32xf32> to vector<2x8x8x32xf32>
    %54 = vector.shape_cast %53 : vector<2x8x8x32xf32> to vector<128x32xf32>
    %55 = vector.extract_strided_slice %52 {offsets = [0, 0, 1, 0], sizes = [2, 8, 8, 32], strides = [1, 1, 1, 1]} : vector<2x10x10x32xf32> to vector<2x8x8x32xf32>
    %56 = vector.shape_cast %55 : vector<2x8x8x32xf32> to vector<128x32xf32>
    %57 = vector.extract_strided_slice %52 {offsets = [0, 0, 2, 0], sizes = [2, 8, 8, 32], strides = [1, 1, 1, 1]} : vector<2x10x10x32xf32> to vector<2x8x8x32xf32>
    %58 = vector.shape_cast %57 : vector<2x8x8x32xf32> to vector<128x32xf32>
    %59 = vector.extract_strided_slice %52 {offsets = [0, 1, 0, 0], sizes = [2, 8, 8, 32], strides = [1, 1, 1, 1]} : vector<2x10x10x32xf32> to vector<2x8x8x32xf32>
    %60 = vector.shape_cast %59 : vector<2x8x8x32xf32> to vector<128x32xf32>
    %61 = vector.extract_strided_slice %52 {offsets = [0, 1, 1, 0], sizes = [2, 8, 8, 32], strides = [1, 1, 1, 1]} : vector<2x10x10x32xf32> to vector<2x8x8x32xf32>
    %62 = vector.shape_cast %61 : vector<2x8x8x32xf32> to vector<128x32xf32>
    %63 = vector.extract_strided_slice %52 {offsets = [0, 1, 2, 0], sizes = [2, 8, 8, 32], strides = [1, 1, 1, 1]} : vector<2x10x10x32xf32> to vector<2x8x8x32xf32>
    %64 = vector.shape_cast %63 : vector<2x8x8x32xf32> to vector<128x32xf32>
    %65 = vector.extract_strided_slice %52 {offsets = [0, 2, 0, 0], sizes = [2, 8, 8, 32], strides = [1, 1, 1, 1]} : vector<2x10x10x32xf32> to vector<2x8x8x32xf32>
    %66 = vector.shape_cast %65 : vector<2x8x8x32xf32> to vector<128x32xf32>
    %67 = vector.extract_strided_slice %52 {offsets = [0, 2, 1, 0], sizes = [2, 8, 8, 32], strides = [1, 1, 1, 1]} : vector<2x10x10x32xf32> to vector<2x8x8x32xf32>
    %68 = vector.shape_cast %67 : vector<2x8x8x32xf32> to vector<128x32xf32>
    %69 = vector.extract_strided_slice %52 {offsets = [0, 2, 2, 0], sizes = [2, 8, 8, 32], strides = [1, 1, 1, 1]} : vector<2x10x10x32xf32> to vector<2x8x8x32xf32>
    %70 = vector.shape_cast %69 : vector<2x8x8x32xf32> to vector<128x32xf32>
    %71 = tpu.concatenate %54, %56, %58, %60, %62, %64, %66, %68, %70 in 1 : vector<128x32xf32>, vector<128x32xf32>, vector<128x32xf32>, vector<128x32xf32>, vector<128x32xf32>, vector<128x32xf32>, vector<128x32xf32>, vector<128x32xf32>, vector<128x32xf32> -> vector<128x288xf32>
    %72 = arith.truncf %71 : vector<128x288xf32> to vector<128x288xbf16>
    %c0_21 = arith.constant 0 : index
    %c0_22 = arith.constant 0 : index
    %73 = vector.load %arg8[%c0_21, %c0_22] : memref<288x32xbf16, #tpu.memory_space<vmem>>, vector<288x32xbf16>
    %cst_23 = arith.constant dense<0.000000e+00> : vector<128x32xf32>
    %74 = tpu.matmul %72, %73, %cst_23 {dimension_numbers = #tpu.dot_dimension_numbers<[1], [0], [0], [1], [0, 0, 1, 1], [], []>} : vector<128x288xbf16>, vector<288x32xbf16>, vector<128x32xf32> -> vector<128x32xf32>
    %c0_24 = arith.constant 0 : index
    %c0_25 = arith.constant 0 : index
    %c0_26 = arith.constant 0 : index
    %c0_27 = arith.constant 0 : index
    %75 = vector.load %arg1[%c0_24, %c0_25, %c0_26, %c0_27] : memref<2x8x8x32xf32, #tpu.memory_space<vmem>>, vector<2x8x8x32xf32>
    %76 = vector.shape_cast %75 : vector<2x8x8x32xf32> to vector<128x32xf32>
    %77 = arith.addf %76, %74 : vector<128x32xf32>
    %78 = vector.shape_cast %77 : vector<128x32xf32> to vector<2x8x8x32xf32>
    %c0_28 = arith.constant 0 : index
    %c0_29 = arith.constant 0 : index
    %c0_30 = arith.constant 0 : index
    %c0_31 = arith.constant 0 : index
    %79 = vector.load %arg9[%c0_28, %c0_29, %c0_30, %c0_31] : memref<2x8x8x32xf32, #tpu.memory_space<vmem>>, vector<2x8x8x32xf32>
    tpu.vector_store %arg9[%c0_28, %c0_29, %c0_30, %c0_31], %78 {strides = array<i32>} : memref<2x8x8x32xf32, #tpu.memory_space<vmem>>, vector<2x8x8x32xf32>,
    return
  }
  func.func @transform_0(%arg0: i32) -> (i32, i32, i32, i32) {
    %c0_i32 = arith.constant 0 : i32
    %c0_i32_0 = arith.constant 0 : i32
    %c0_i32_1 = arith.constant 0 : i32
    %c0_i32_2 = arith.constant 0 : i32
    return %arg0, %c0_i32, %c0_i32_0, %c0_i32_1 : i32, i32, i32, i32
  }
  func.func @transform_1(%arg0: i32) -> (i32, i32) {
    %c0_i32 = arith.constant 0 : i32
    %c0_i32_0 = arith.constant 0 : i32
    %c0_i32_1 = arith.constant 0 : i32
    return %c0_i32, %c0_i32_0 : i32, i32
  }
  func.func @transform_2(%arg0: i32) -> (i32, i32) {
    %c0_i32 = arith.constant 0 : i32
    %c0_i32_0 = arith.constant 0 : i32
    %c0_i32_1 = arith.constant 0 : i32
    return %c0_i32, %c0_i32_0 : i32, i32
  }
  func.func @transform_3(%arg0: i32) -> (i32, i32) {
    %c0_i32 = arith.constant 0 : i32
    %c0_i32_0 = arith.constant 0 : i32
    %c0_i32_1 = arith.constant 0 : i32
    return %c0_i32, %c0_i32_0 : i32, i32
  }
  func.func @transform_4(%arg0: i32) -> (i32, i32) {
    %c0_i32 = arith.constant 0 : i32
    %c0_i32_0 = arith.constant 0 : i32
    %c0_i32_1 = arith.constant 0 : i32
    return %c0_i32, %c0_i32_0 : i32, i32
  }
  func.func @transform_5(%arg0: i32) -> (i32, i32) {
    %c0_i32 = arith.constant 0 : i32
    %c0_i32_0 = arith.constant 0 : i32
    %c0_i32_1 = arith.constant 0 : i32
    return %c0_i32, %c0_i32_0 : i32, i32
  }
  func.func @transform_6(%arg0: i32) -> (i32, i32) {
    %c0_i32 = arith.constant 0 : i32
    %c0_i32_0 = arith.constant 0 : i32
    %c0_i32_1 = arith.constant 0 : i32
    return %c0_i32, %c0_i32_0 : i32, i32
  }
  func.func @transform_7(%arg0: i32) -> (i32, i32) {
    %c0_i32 = arith.constant 0 : i32
    %c0_i32_0 = arith.constant 0 : i32
    %c0_i32_1 = arith.constant 0 : i32
    return %c0_i32, %c0_i32_0 : i32, i32
  }
  func.func @transform_8(%arg0: i32) -> (i32, i32, i32, i32) {
    %c0_i32 = arith.constant 0 : i32
    %c0_i32_0 = arith.constant 0 : i32
    %c0_i32_1 = arith.constant 0 : i32
    %c0_i32_2 = arith.constant 0 : i32
    return %arg0, %c0_i32, %c0_i32_0, %c0_i32_1 : i32, i32, i32, i32
  }
}

</mosaic_0001>

<llo_original>
// kernel: _lambda_.3
$region0: #{_lambda_.3}
  #allocation0 [shape = 'u32[]', space=smem, size = 0x4, offset = 0x4, fixed_abs, tag = 'smem constant byte address 0x4 - core index']
  #allocation1 [shape = 'u32[144,128]{1,0:T(1,128)}', space=vmem, size = 0x12000, scoped, tag = 'internal scratch']
  %s0 = inlined_call_operand.vmem [shape: f32[4,8,8,32], index: 0, kind: input, shape index: {}]
  %s1 = inlined_call_operand.vmem [shape: f32[1,32], index: 1, kind: input, shape index: {}]
  %s2 = inlined_call_operand.vmem [shape: f32[1,32], index: 2, kind: input, shape index: {}]
  %s3 = inlined_call_operand.vmem [shape: f32[1,32], index: 3, kind: input, shape index: {}]
  %s4 = inlined_call_operand.vmem [shape: f32[1,32], index: 4, kind: input, shape index: {}]
  %s5 = inlined_call_operand.vmem [shape: f32[1,32], index: 5, kind: input, shape index: {}]
  %s6 = inlined_call_operand.vmem [shape: bf16[288,32], index: 6, kind: input, shape index: {}]
  %s7 = inlined_call_operand.vmem [shape: bf16[288,32], index: 7, kind: input, shape index: {}]
  %s8 = inlined_call_operand.hbm [shape: f32[4,8,8,32], index: 8, kind: output, shape index: {}]
  %s9 = sld [smem:[#allocation0]]
  $region65: #{_lambda_.3} parent=0
    _
  %s11 = ssub.s32 1, %s9
  %s12 = scalar_select 0, %s11, %s9
  $region1: #{_lambda_.3} parent=0
    #allocation2 [shape = 'u8[131072]{0}', space=vmem, size = 0x20000, scoped, tag = 'output window, operand 0']
    #allocation3 [shape = 's32[2]{0}', space=sflag, size = 0x8, scoped, tag = 'scoped memory for _lambda_.3']
    %13 = vsyncpa [#allocation3], 0
    %s14 = scalar_lea.sflag [#allocation3], 1
    %15 = vsyncpa %s14, 0
    loop: start=0, step=1, limit=4
    $region2: #{_lambda_.3} parent=1 // loop_pre_header
      _
    $region3: #{_lambda_.3} parent=1 // loop_header
      %s17 = sphi 0, %s21
      %p18 = scmp.ge.s32.totalorder %s17, 4
      %s27 = sphi 0, %s29
      %s30 = sphi 0, %s27
      %s31 = sphi 0, %s30
      %s47 = sphi 0, %s31
      %s51 = sphi 0, %s51
      %s53 = sphi 0, %s51
      %s54 = sphi 0, %s53
      %s68 = sphi 0, %s54
      %s72 = sphi 0, %s72
      %s74 = sphi 0, %s72
      %s75 = sphi 0, %s74
      %s89 = sphi 0, %s75
      %s93 = sphi 0, %s93
      %s95 = sphi 0, %s93
      %s96 = sphi 0, %s95
      %s110 = sphi 0, %s96
      %s114 = sphi 0, %s114
      %s116 = sphi 0, %s114
      %s117 = sphi 0, %s116
      %s131 = sphi 0, %s117
      %s135 = sphi 0, %s135
      %s137 = sphi 0, %s135
      %s138 = sphi 0, %s137
      %s152 = sphi 0, %s138
      %s156 = sphi 0, %s156
      %s158 = sphi 0, %s156
      %s159 = sphi 0, %s158
      %s173 = sphi 0, %s159
      %s177 = sphi 0, %s177
      %s179 = sphi 0, %s177
      %s180 = sphi 0, %s179
      %s194 = sphi 0, %s180
      %s200 = sphi 0, %s202
      %s203 = sphi 0, %s200
      %s204 = sphi 0, %s203
      %s220 = sphi 0, %s204
    $region4: #{_lambda_.3} parent=1 // loop_header_branch
      %20 = sbr.rel (%p18) target = $region8
    $region5: #{_lambda_.3} parent=1 // loop_body
      %s22 = ssub.s32 %s17, 1
      %s23 = ssub.s32 %s17, 2
      %s24 = sadd.s32 %s17, 1
      %s25 = ssub.s32 %s17, %s24
      %p26 = scmp.eq.s32.totalorder %s25, 0
      %s28 = sadd.s32 %s27, 1
      %s29 = scalar_select %p26, %s27, %s28
      %p32 = pneg %p26
      %p33 = scmp.eq.s32.totalorder %s17, 1
      %p34 = por %p32, %p33
      %p35 = scmp.ne.s32.totalorder %s27, %s30
      %p36 = scmp.eq.s32.totalorder %s17, 0
      %p37 = por %p35, %p36
      %p38 = scmp.ne.s32.totalorder %s27, %s30
      %p39 = scmp.eq.s32.totalorder %s22, 1
      %p40 = por %p38, %p39
      %p41 = scmp.ne.s32.totalorder %s30, %s31
      %p42 = scmp.eq.s32.totalorder %s22, 0
      %p43 = por %p41, %p42
      %p44 = scmp.ne.s32.totalorder %s30, %s31
      %p45 = scmp.eq.s32.totalorder %s23, 1
      %p46 = por %p44, %p45
      %p48 = scmp.ne.s32.totalorder %s31, %s47
      %p49 = scmp.eq.s32.totalorder %s23, 0
      %p50 = por %p48, %p49
      %s52 = sadd.s32 %s51, 1
      %p55 = scmp.eq.s32.totalorder %s17, 1
      %p56 = scmp.ne.s32.totalorder %s51, %s53
      %p57 = scmp.eq.s32.totalorder %s17, 0
      %p58 = por %p56, %p57
      %p59 = scmp.ne.s32.totalorder %s51, %s53
      %p60 = scmp.eq.s32.totalorder %s22, 1
      %p61 = por %p59, %p60
      %p62 = scmp.ne.s32.totalorder %s53, %s54
      %p63 = scmp.eq.s32.totalorder %s22, 0
      %p64 = por %p62, %p63
      %p65 = scmp.ne.s32.totalorder %s53, %s54
      %p66 = scmp.eq.s32.totalorder %s23, 1
      %p67 = por %p65, %p66
      %p69 = scmp.ne.s32.totalorder %s54, %s68
      %p70 = scmp.eq.s32.totalorder %s23, 0
      %p71 = por %p69, %p70
      %s73 = sadd.s32 %s72, 1
      %p76 = scmp.eq.s32.totalorder %s17, 1
      %p77 = scmp.ne.s32.totalorder %s72, %s74
      %p78 = scmp.eq.s32.totalorder %s17, 0
      %p79 = por %p77, %p78
      %p80 = scmp.ne.s32.totalorder %s72, %s74
      %p81 = scmp.eq.s32.totalorder %s22, 1
      %p82 = por %p80, %p81
      %p83 = scmp.ne.s32.totalorder %s74, %s75
      %p84 = scmp.eq.s32.totalorder %s22, 0
      %p85 = por %p83, %p84
      %p86 = scmp.ne.s32.totalorder %s74, %s75
      %p87 = scmp.eq.s32.totalorder %s23, 1
      %p88 = por %p86, %p87
      %p90 = scmp.ne.s32.totalorder %s75, %s89
      %p91 = scmp.eq.s32.totalorder %s23, 0
      %p92 = por %p90, %p91
      %s94 = sadd.s32 %s93, 1
      %p97 = scmp.eq.s32.totalorder %s17, 1
      %p98 = scmp.ne.s32.totalorder %s93, %s95
      %p99 = scmp.eq.s32.totalorder %s17, 0
      %p100 = por %p98, %p99
      %p101 = scmp.ne.s32.totalorder %s93, %s95
      %p102 = scmp.eq.s32.totalorder %s22, 1
      %p103 = por %p101, %p102
      %p104 = scmp.ne.s32.totalorder %s95, %s96
      %p105 = scmp.eq.s32.totalorder %s22, 0
      %p106 = por %p104, %p105
      %p107 = scmp.ne.s32.totalorder %s95, %s96
      %p108 = scmp.eq.s32.totalorder %s23, 1
      %p109 = por %p107, %p108
      %p111 = scmp.ne.s32.totalorder %s96, %s110
      %p112 = scmp.eq.s32.totalorder %s23, 0
      %p113 = por %p111, %p112
      %s115 = sadd.s32 %s114, 1
      %p118 = scmp.eq.s32.totalorder %s17, 1
      %p119 = scmp.ne.s32.totalorder %s114, %s116
      %p120 = scmp.eq.s32.totalorder %s17, 0
      %p121 = por %p119, %p120
      %p122 = scmp.ne.s32.totalorder %s114, %s116
      %p123 = scmp.eq.s32.totalorder %s22, 1
      %p124 = por %p122, %p123
      %p125 = scmp.ne.s32.totalorder %s116, %s117
      %p126 = scmp.eq.s32.totalorder %s22, 0
      %p127 = por %p125, %p126
      %p128 = scmp.ne.s32.totalorder %s116, %s117
      %p129 = scmp.eq.s32.totalorder %s23, 1
      %p130 = por %p128, %p129
      %p132 = scmp.ne.s32.totalorder %s117, %s131
      %p133 = scmp.eq.s32.totalorder %s23, 0
      %p134 = por %p132, %p133
      %s136 = sadd.s32 %s135, 1
      %p139 = scmp.eq.s32.totalorder %s17, 1
      %p140 = scmp.ne.s32.totalorder %s135, %s137
      %p141 = scmp.eq.s32.totalorder %s17, 0
      %p142 = por %p140, %p141
      %p143 = scmp.ne.s32.totalorder %s135, %s137
      %p144 = scmp.eq.s32.totalorder %s22, 1
      %p145 = por %p143, %p144
      %p146 = scmp.ne.s32.totalorder %s137, %s138
      %p147 = scmp.eq.s32.totalorder %s22, 0
      %p148 = por %p146, %p147
      %p149 = scmp.ne.s32.totalorder %s137, %s138
      %p150 = scmp.eq.s32.totalorder %s23, 1
      %p151 = por %p149, %p150
      %p153 = scmp.ne.s32.totalorder %s138, %s152
      %p154 = scmp.eq.s32.totalorder %s23, 0
      %p155 = por %p153, %p154
      %s157 = sadd.s32 %s156, 1
      %p160 = scmp.eq.s32.totalorder %s17, 1
      %p161 = scmp.ne.s32.totalorder %s156, %s158
      %p162 = scmp.eq.s32.totalorder %s17, 0
      %p163 = por %p161, %p162
      %p164 = scmp.ne.s32.totalorder %s156, %s158
      %p165 = scmp.eq.s32.totalorder %s22, 1
      %p166 = por %p164, %p165
      %p167 = scmp.ne.s32.totalorder %s158, %s159
      %p168 = scmp.eq.s32.totalorder %s22, 0
      %p169 = por %p167, %p168
      %p170 = scmp.ne.s32.totalorder %s158, %s159
      %p171 = scmp.eq.s32.totalorder %s23, 1
      %p172 = por %p170, %p171
      %p174 = scmp.ne.s32.totalorder %s159, %s173
      %p175 = scmp.eq.s32.totalorder %s23, 0
      %p176 = por %p174, %p175
      %s178 = sadd.s32 %s177, 1
      %p181 = scmp.eq.s32.totalorder %s17, 1
      %p182 = scmp.ne.s32.totalorder %s177, %s179
      %p183 = scmp.eq.s32.totalorder %s17, 0
      %p184 = por %p182, %p183
      %p185 = scmp.ne.s32.totalorder %s177, %s179
      %p186 = scmp.eq.s32.totalorder %s22, 1
      %p187 = por %p185, %p186
      %p188 = scmp.ne.s32.totalorder %s179, %s180
      %p189 = scmp.eq.s32.totalorder %s22, 0
      %p190 = por %p188, %p189
      %p191 = scmp.ne.s32.totalorder %s179, %s180
      %p192 = scmp.eq.s32.totalorder %s23, 1
      %p193 = por %p191, %p192
      %p195 = scmp.ne.s32.totalorder %s180, %s194
      %p196 = scmp.eq.s32.totalorder %s23, 0
      %p197 = por %p195, %p196
      %s198 = ssub.s32 %s17, %s24
      %p199 = scmp.eq.s32.totalorder %s198, 0
      %s201 = sadd.s32 %s200, 1
      %s202 = scalar_select %p199, %s200, %s201
      %p205 = pneg %p199
      %p206 = scmp.eq.s32.totalorder %s17, 1
      %p207 = por %p205, %p206
      %p208 = scmp.ne.s32.totalorder %s200, %s203
      %p209 = scmp.eq.s32.totalorder %s17, 0
      %p210 = por %p208, %p209
      %p211 = scmp.ne.s32.totalorder %s200, %s203
      %p212 = scmp.eq.s32.totalorder %s22, 1
      %p213 = por %p211, %p212
      %p214 = scmp.ne.s32.totalorder %s203, %s204
      %p215 = scmp.eq.s32.totalorder %s22, 0
      %p216 = por %p214, %p215
      %p217 = scmp.ne.s32.totalorder %s203, %s204
      %p218 = scmp.eq.s32.totalorder %s23, 1
      %p219 = por %p217, %p218
      %p221 = scmp.ne.s32.totalorder %s204, %s220
      %p222 = scmp.eq.s32.totalorder %s23, 0
      %p223 = por %p221, %p222
      %p224 = scmp.le.s32.totalorder 1, %s17
      %p225 = scmp.lt.s32.totalorder %s17, 3
      %p226 = pnand %p224, %p225
      %p227 = pneg %p226
      // Predicated region
      $region9: #{_lambda_.3} parent=5 // pred_check
        _
      $region10: #{_lambda_.3} parent=5 // pred_check_branch
        %229 = sbr.rel (%p226) target = $region12
      $region11: #{_lambda_.3} parent=5 // pred_region
        %s230 = ssub.s32 %s17, 1
        // Predicated region
        $region13: #{_lambda_.3} parent=11 // pred_check
          %p231 = pneg %p64
        $region14: #{_lambda_.3} parent=11 // pred_check_branch
          %233 = sbr.rel (%p231) target = $region16
        $region15: #{_lambda_.3} parent=11 // pred_region
          _
        $region16: #{_lambda_.3} parent=11 // pred_fallthru
          _
        // Predicated region
        $region17: #{_lambda_.3} parent=11 // pred_check
          %p234 = pneg %p85
        $region18: #{_lambda_.3} parent=11 // pred_check_branch
          %236 = sbr.rel (%p234) target = $region20
        $region19: #{_lambda_.3} parent=11 // pred_region
          _
        $region20: #{_lambda_.3} parent=11 // pred_fallthru
          _
        // Predicated region
        $region21: #{_lambda_.3} parent=11 // pred_check
          %p237 = pneg %p106
        $region22: #{_lambda_.3} parent=11 // pred_check_branch
          %239 = sbr.rel (%p237) target = $region24
        $region23: #{_lambda_.3} parent=11 // pred_region
          _
        $region24: #{_lambda_.3} parent=11 // pred_fallthru
          _
        // Predicated region
        $region25: #{_lambda_.3} parent=11 // pred_check
          %p240 = pneg %p127
        $region26: #{_lambda_.3} parent=11 // pred_check_branch
          %242 = sbr.rel (%p240) target = $region28
        $region27: #{_lambda_.3} parent=11 // pred_region
          _
        $region28: #{_lambda_.3} parent=11 // pred_fallthru
          _
        // Predicated region
        $region29: #{_lambda_.3} parent=11 // pred_check
          %p243 = pneg %p148
        $region30: #{_lambda_.3} parent=11 // pred_check_branch
          %245 = sbr.rel (%p243) target = $region32
        $region31: #{_lambda_.3} parent=11 // pred_region
          _
        $region32: #{_lambda_.3} parent=11 // pred_fallthru
          _
        // Predicated region
        $region33: #{_lambda_.3} parent=11 // pred_check
          %p246 = pneg %p169
        $region34: #{_lambda_.3} parent=11 // pred_check_branch
          %248 = sbr.rel (%p246) target = $region36
        $region35: #{_lambda_.3} parent=11 // pred_region
          _
        $region36: #{_lambda_.3} parent=11 // pred_fallthru
          _
        // Predicated region
        $region37: #{_lambda_.3} parent=11 // pred_check
          %p249 = pneg %p190
        $region38: #{_lambda_.3} parent=11 // pred_check_branch
          %251 = sbr.rel (%p249) target = $region40
        $region39: #{_lambda_.3} parent=11 // pred_region
          _
        $region40: #{_lambda_.3} parent=11 // pred_fallthru
          _
      $region12: #{_lambda_.3} parent=5 // pred_fallthru
        _
      %p252 = scmp.lt.s32.totalorder %s17, 2
      // Predicated region
      $region41: #{_lambda_.3} parent=5 // pred_check
        %p253 = pneg %p252
      $region42: #{_lambda_.3} parent=5 // pred_check_branch
        %255 = sbr.rel (%p253) target = $region44
      $region43: #{_lambda_.3} parent=5 // pred_region
        // Predicated region
        $region45: #{_lambda_.3} parent=43 // pred_check
          %p256 = pneg %p37
        $region46: #{_lambda_.3} parent=43 // pred_check_branch
          %258 = sbr.rel (%p256) target = $region48
        $region47: #{_lambda_.3} parent=43 // pred_region
          %s259 = smul.u32 2, %s17
          %p260 = scmp.lt.s32.totalorder %s259, 3
          %s261 = scalar_select %p260, %s259, 3
          %s262 = smul.addr %s261, 8
          %s263 = smul.addr %s262, 8
          %s264 = scalar_lea.vmem %s0, %s263
          %s265 = smul.u32 2, %s17
        $region48: #{_lambda_.3} parent=43 // pred_fallthru
          _
      $region44: #{_lambda_.3} parent=5 // pred_fallthru
        _
      %p266 = scmp.le.s32.totalorder 1, %s17
      %p267 = scmp.lt.s32.totalorder %s17, 3
      %p268 = pnand %p266, %p267
      %p269 = pneg %p268
      // Predicated region
      $region49: #{_lambda_.3} parent=5 // pred_check
        _
      $region50: #{_lambda_.3} parent=5 // pred_check_branch
        %271 = sbr.rel (%p268) target = $region52
      $region51: #{_lambda_.3} parent=5 // pred_region
        %s272 = ssub.s32 %s17, 1
        %s273 = smul.u32 2, %s22
        %p274 = scmp.lt.s32.totalorder %s273, 3
        %s275 = scalar_select %p274, %s273, 3
        %s276 = smul.addr %s275, 8
        %s277 = smul.addr %s276, 8
        %s278 = scalar_lea.vmem %s0, %s277
        %p279 = pneg %p43
        %p280 = pneg %p40
        %p281 = pneg %p64
        %p282 = pneg %p61
        %p283 = pneg %p85
        %p284 = pneg %p82
        %p285 = pneg %p106
        %p286 = pneg %p103
        %p287 = pneg %p127
        %p288 = pneg %p124
        %p289 = pneg %p148
        %p290 = pneg %p145
        %p291 = pneg %p169
        %p292 = pneg %p166
        %p293 = pneg %p190
        %p294 = pneg %p187
        %p295 = pneg %p216
        %p296 = pneg %p213
        %s297 = sand.u32 %s203, 1
        %s298 = scalar_lea.sflag [#allocation3], %s297
        %s299 = sand.u32 %s203, 1
        %s300 = smul.addr %s299, 128
        %s301 = scalar_lea.vmem [#allocation2], %s300
        %s302 = smul.u32 2, %s22
        %p303 = scmp.lt.s32.totalorder %s302, 3
        %s304 = scalar_select %p303, %s302, 3
        %s305 = smul.addr %s304, 8
        %s306 = smul.addr %s305, 8
        %s307 = scalar_lea.vmem %s0, %s306
        %s308 = smul.u32 2, %s22
        %s309 = smul.u32 2, %s22
        %v311 = vld [vmem:[%s307] sm:$0xff]
        %v312 = vld [vmem:[%s307 + $0x8] sm:$0xff]
        %v313 = vld [vmem:[%s307 + $0x10] sm:$0xff]
        %v314 = vld [vmem:[%s307 + $0x18] sm:$0xff]
        %v315 = vld [vmem:[%s307 + $0x20] sm:$0xff]
        %v316 = vld [vmem:[%s307 + $0x28] sm:$0xff]
        %v317 = vld [vmem:[%s307 + $0x30] sm:$0xff]
        %v318 = vld [vmem:[%s307 + $0x38] sm:$0xff]
        %v319 = vld [vmem:[%s307 + $0x40] sm:$0xff]
        %v320 = vld [vmem:[%s307 + $0x48] sm:$0xff]
        %v321 = vld [vmem:[%s307 + $0x50] sm:$0xff]
        %v322 = vld [vmem:[%s307 + $0x58] sm:$0xff]
        %v323 = vld [vmem:[%s307 + $0x60] sm:$0xff]
        %v324 = vld [vmem:[%s307 + $0x68] sm:$0xff]
        %v325 = vld [vmem:[%s307 + $0x70] sm:$0xff]
        %v326 = vld [vmem:[%s307 + $0x78] sm:$0xff]
        %v327 = vld [vmem:[%s1] sm:$0x1]
        %v329 = vlaneseq
        %v330 = vshrl.u32 %v329, 7
        %v331 = vsub.s32 0, %v330
        %v332 = vrot.slane %v327, %v331
        %v334 = vmul.f32 %v311, %v332
        %v335 = vmul.f32 %v312, %v332
        %v336 = vmul.f32 %v313, %v332
        %v337 = vmul.f32 %v314, %v332
        %v338 = vmul.f32 %v315, %v332
        %v339 = vmul.f32 %v316, %v332
        %v340 = vmul.f32 %v317, %v332
        %v341 = vmul.f32 %v318, %v332
        %v342 = vmul.f32 %v319, %v332
        %v343 = vmul.f32 %v320, %v332
        %v344 = vmul.f32 %v321, %v332
        %v345 = vmul.f32 %v322, %v332
        %v346 = vmul.f32 %v323, %v332
        %v347 = vmul.f32 %v324, %v332
        %v348 = vmul.f32 %v325, %v332
        %v349 = vmul.f32 %v326, %v332
        %v350 = vld [vmem:[%s2] sm:$0x1]
        %v352 = vlaneseq
        %v353 = vshrl.u32 %v352, 7
        %v354 = vsub.s32 0, %v353
        %v355 = vrot.slane %v350, %v354
        %v357 = vadd.f32 %v334, %v355
        %v358 = vadd.f32 %v335, %v355
        %v359 = vadd.f32 %v336, %v355
        %v360 = vadd.f32 %v337, %v355
        %v361 = vadd.f32 %v338, %v355
        %v362 = vadd.f32 %v339, %v355
        %v363 = vadd.f32 %v340, %v355
        %v364 = vadd.f32 %v341, %v355
        %v365 = vadd.f32 %v342, %v355
        %v366 = vadd.f32 %v343, %v355
        %v367 = vadd.f32 %v344, %v355
        %v368 = vadd.f32 %v345, %v355
        %v369 = vadd.f32 %v346, %v355
        %v370 = vadd.f32 %v347, %v355
        %v371 = vadd.f32 %v348, %v355
        %v372 = vadd.f32 %v349, %v355
        %v373 = vmax.f32 %v357, 0.0
        %v374 = vmax.f32 %v358, 0.0
        %v375 = vmax.f32 %v359, 0.0
        %v376 = vmax.f32 %v360, 0.0
        %v377 = vmax.f32 %v361, 0.0
        %v378 = vmax.f32 %v362, 0.0
        %v379 = vmax.f32 %v363, 0.0
        %v380 = vmax.f32 %v364, 0.0
        %v381 = vmax.f32 %v365, 0.0
        %v382 = vmax.f32 %v366, 0.0
        %v383 = vmax.f32 %v367, 0.0
        %v384 = vmax.f32 %v368, 0.0
        %v385 = vmax.f32 %v369, 0.0
        %v386 = vmax.f32 %v370, 0.0
        %v387 = vmax.f32 %v371, 0.0
        %v388 = vmax.f32 %v372, 0.0
        %v405 = vrot.slane %v373, 7
        %v406 = vrot.slane %v374, 7
        %v407 = vrot.slane %v375, 7
        %v408 = vrot.slane %v376, 7
        %v409 = vrot.slane %v377, 7
        %v410 = vrot.slane %v378, 7
        %v411 = vrot.slane %v379, 7
        %v412 = vrot.slane %v380, 7
        %v413 = vrot.slane %v381, 7
        %v414 = vrot.slane %v382, 7
        %v415 = vrot.slane %v383, 7
        %v416 = vrot.slane %v384, 7
        %v417 = vrot.slane %v385, 7
        %v418 = vrot.slane %v386, 7
        %v419 = vrot.slane %v387, 7
        %v420 = vrot.slane %v388, 7
        %vm437 = vcmask 1040384
        %v438 = vsel %vm437, 0.0, %v405
        %v439 = vsel %vm437, 0.0, %v406
        %v440 = vsel %vm437, 0.0, %v407
        %v441 = vsel %vm437, 0.0, %v408
        %v442 = vsel %vm437, 0.0, %v409
        %v443 = vsel %vm437, 0.0, %v410
        %v444 = vsel %vm437, 0.0, %v411
        %v445 = vsel %vm437, 0.0, %v412
        %v446 = vsel %vm437, 0.0, %v413
        %v447 = vsel %vm437, 0.0, %v414
        %v448 = vsel %vm437, 0.0, %v415
        %v449 = vsel %vm437, 0.0, %v416
        %v450 = vsel %vm437, 0.0, %v417
        %v451 = vsel %vm437, 0.0, %v418
        %v452 = vsel %vm437, 0.0, %v419
        %v453 = vsel %vm437, 0.0, %v420
        %v454 = vsel %vm437, %v405, 0.0
        %v455 = vsel %vm437, %v406, 0.0
        %v456 = vsel %vm437, %v407, 0.0
        %v457 = vsel %vm437, %v408, 0.0
        %v458 = vsel %vm437, %v409, 0.0
        %v459 = vsel %vm437, %v410, 0.0
        %v460 = vsel %vm437, %v411, 0.0
        %v461 = vsel %vm437, %v412, 0.0
        %v462 = vsel %vm437, %v413, 0.0
        %v463 = vsel %vm437, %v414, 0.0
        %v464 = vsel %vm437, %v415, 0.0
        %v465 = vsel %vm437, %v416, 0.0
        %v466 = vsel %vm437, %v417, 0.0
        %v467 = vsel %vm437, %v418, 0.0
        %v468 = vsel %vm437, %v419, 0.0
        %v469 = vsel %vm437, %v420, 0.0
        %vm499 = vcmask 1046528
        %v500 = vrot.slane 0.0, 1
        %v501 = vsel %vm499, %v500, %v500
        %v502 = vrot.slane %v438, 1
        %v503 = vrot.slane %v454, 1
        %v504 = vsel %vm499, %v502, %v503
        %v505 = vrot.slane %v439, 1
        %v506 = vrot.slane %v455, 1
        %v507 = vsel %vm499, %v505, %v506
        %v508 = vrot.slane %v440, 1
        %v509 = vrot.slane %v456, 1
        %v510 = vsel %vm499, %v508, %v509
        %v511 = vrot.slane %v441, 1
        %v512 = vrot.slane %v457, 1
        %v513 = vsel %vm499, %v511, %v512
        %v514 = vrot.slane %v442, 1
        %v515 = vrot.slane %v458, 1
        %v516 = vsel %vm499, %v514, %v515
        %v517 = vrot.slane %v443, 1
        %v518 = vrot.slane %v459, 1
        %v519 = vsel %vm499, %v517, %v518
        %v520 = vrot.slane %v444, 1
        %v521 = vrot.slane %v460, 1
        %v522 = vsel %vm499, %v520, %v521
        %v523 = vrot.slane %v446, 1
        %v524 = vrot.slane %v462, 1
        %v525 = vsel %vm499, %v523, %v524
        %v526 = vrot.slane %v447, 1
        %v527 = vrot.slane %v463, 1
        %v528 = vsel %vm499, %v526, %v527
        %v529 = vrot.slane %v448, 1
        %v530 = vrot.slane %v464, 1
        %v531 = vsel %vm499, %v529, %v530
        %v532 = vrot.slane %v449, 1
        %v533 = vrot.slane %v465, 1
        %v534 = vsel %vm499, %v532, %v533
        %v535 = vrot.slane %v450, 1
        %v536 = vrot.slane %v466, 1
        %v537 = vsel %vm499, %v535, %v536
        %v538 = vrot.slane %v451, 1
        %v539 = vrot.slane %v467, 1
        %v540 = vsel %vm499, %v538, %v539
        %v541 = vrot.slane %v452, 1
        %v542 = vrot.slane %v468, 1
        %v543 = vsel %vm499, %v541, %v542
        %vm544 = vcmask 1045504
        %v545 = vrot.slane 0.0, 2
        %v546 = vsel %vm544, %v545, %v545
        %v547 = vrot.slane %v438, 2
        %v548 = vrot.slane %v454, 2
        %v549 = vsel %vm544, %v547, %v548
        %v550 = vrot.slane %v439, 2
        %v551 = vrot.slane %v455, 2
        %v552 = vsel %vm544, %v550, %v551
        %v553 = vrot.slane %v440, 2
        %v554 = vrot.slane %v456, 2
        %v555 = vsel %vm544, %v553, %v554
        %v556 = vrot.slane %v441, 2
        %v557 = vrot.slane %v457, 2
        %v558 = vsel %vm544, %v556, %v557
        %v559 = vrot.slane %v442, 2
        %v560 = vrot.slane %v458, 2
        %v561 = vsel %vm544, %v559, %v560
        %v562 = vrot.slane %v443, 2
        %v563 = vrot.slane %v459, 2
        %v564 = vsel %vm544, %v562, %v563
        %v565 = vrot.slane %v444, 2
        %v566 = vrot.slane %v460, 2
        %v567 = vsel %vm544, %v565, %v566
        %v568 = vrot.slane %v446, 2
        %v569 = vrot.slane %v462, 2
        %v570 = vsel %vm544, %v568, %v569
        %v571 = vrot.slane %v447, 2
        %v572 = vrot.slane %v463, 2
        %v573 = vsel %vm544, %v571, %v572
        %v574 = vrot.slane %v448, 2
        %v575 = vrot.slane %v464, 2
        %v576 = vsel %vm544, %v574, %v575
        %v577 = vrot.slane %v449, 2
        %v578 = vrot.slane %v465, 2
        %v579 = vsel %vm544, %v577, %v578
        %v580 = vrot.slane %v450, 2
        %v581 = vrot.slane %v466, 2
        %v582 = vsel %vm544, %v580, %v581
        %v583 = vrot.slane %v451, 2
        %v584 = vrot.slane %v467, 2
        %v585 = vsel %vm544, %v583, %v584
        %v586 = vrot.slane %v452, 2
        %v587 = vrot.slane %v468, 2
        %v588 = vsel %vm544, %v586, %v587
        %v593 = vrot.slane %v445, 1
        %v594 = vrot.slane %v461, 1
        %v595 = vsel %vm499, %v593, %v594
        %v596 = vrot.slane %v453, 1
        %v597 = vrot.slane %v469, 1
        %v598 = vsel %vm499, %v596, %v597
        %v615 = vrot.slane %v445, 2
        %v616 = vrot.slane %v461, 2
        %v617 = vsel %vm544, %v615, %v616
        %v618 = vrot.slane %v453, 2
        %v619 = vrot.slane %v469, 2
        %v620 = vsel %vm544, %v618, %v619
        %636 = vrot.lane.b32.xlu0 %v501, 32
        %v637 = vpop.permute.xlu0 %636
        %638 = vrot.lane.b32.xlu0 %v504, 32
        %v639 = vpop.permute.xlu0 %638
        %640 = vrot.lane.b32.xlu0 %v507, 32
        %v641 = vpop.permute.xlu0 %640
        %642 = vrot.lane.b32.xlu0 %v510, 32
        %v643 = vpop.permute.xlu0 %642
        %644 = vrot.lane.b32.xlu0 %v513, 32
        %v645 = vpop.permute.xlu0 %644
        %646 = vrot.lane.b32.xlu0 %v516, 32
        %v647 = vpop.permute.xlu0 %646
        %648 = vrot.lane.b32.xlu0 %v519, 32
        %v649 = vpop.permute.xlu0 %648
        %650 = vrot.lane.b32.xlu0 %v522, 32
        %v651 = vpop.permute.xlu0 %650
        %652 = vrot.lane.b32.xlu0 %v525, 32
        %v653 = vpop.permute.xlu0 %652
        %654 = vrot.lane.b32.xlu0 %v528, 32
        %v655 = vpop.permute.xlu0 %654
        %656 = vrot.lane.b32.xlu0 %v531, 32
        %v657 = vpop.permute.xlu0 %656
        %658 = vrot.lane.b32.xlu0 %v534, 32
        %v659 = vpop.permute.xlu0 %658
        %660 = vrot.lane.b32.xlu0 %v537, 32
        %v661 = vpop.permute.xlu0 %660
        %662 = vrot.lane.b32.xlu0 %v540, 32
        %v663 = vpop.permute.xlu0 %662
        %664 = vrot.lane.b32.xlu0 %v543, 32
        %v665 = vpop.permute.xlu0 %664
        %681 = vrot.lane.b32.xlu0 %v546, 64
        %v682 = vpop.permute.xlu0 %681
        %683 = vrot.lane.b32.xlu0 %v549, 64
        %v684 = vpop.permute.xlu0 %683
        %685 = vrot.lane.b32.xlu0 %v552, 64
        %v686 = vpop.permute.xlu0 %685
        %687 = vrot.lane.b32.xlu0 %v555, 64
        %v688 = vpop.permute.xlu0 %687
        %689 = vrot.lane.b32.xlu0 %v558, 64
        %v690 = vpop.permute.xlu0 %689
        %691 = vrot.lane.b32.xlu0 %v561, 64
        %v692 = vpop.permute.xlu0 %691
        %693 = vrot.lane.b32.xlu0 %v564, 64
        %v694 = vpop.permute.xlu0 %693
        %695 = vrot.lane.b32.xlu0 %v567, 64
        %v696 = vpop.permute.xlu0 %695
        %697 = vrot.lane.b32.xlu0 %v570, 64
        %v698 = vpop.permute.xlu0 %697
        %699 = vrot.lane.b32.xlu0 %v573, 64
        %v700 = vpop.permute.xlu0 %699
        %701 = vrot.lane.b32.xlu0 %v576, 64
        %v702 = vpop.permute.xlu0 %701
        %703 = vrot.lane.b32.xlu0 %v579, 64
        %v704 = vpop.permute.xlu0 %703
        %705 = vrot.lane.b32.xlu0 %v582, 64
        %v706 = vpop.permute.xlu0 %705
        %707 = vrot.lane.b32.xlu0 %v585, 64
        %v708 = vpop.permute.xlu0 %707
        %709 = vrot.lane.b32.xlu0 %v588, 64
        %v710 = vpop.permute.xlu0 %709
        %726 = vrot.lane.b32.xlu0 %v438, 96
        %v727 = vpop.permute.xlu0 %726
        %728 = vrot.lane.b32.xlu0 %v439, 96
        %v729 = vpop.permute.xlu0 %728
        %730 = vrot.lane.b32.xlu0 %v440, 96
        %v731 = vpop.permute.xlu0 %730
        %732 = vrot.lane.b32.xlu0 %v441, 96
        %v733 = vpop.permute.xlu0 %732
        %734 = vrot.lane.b32.xlu0 %v442, 96
        %v735 = vpop.permute.xlu0 %734
        %736 = vrot.lane.b32.xlu0 %v443, 96
        %v737 = vpop.permute.xlu0 %736
        %738 = vrot.lane.b32.xlu0 %v444, 96
        %v739 = vpop.permute.xlu0 %738
        %740 = vrot.lane.b32.xlu0 %v445, 96
        %v741 = vpop.permute.xlu0 %740
        %742 = vrot.lane.b32.xlu0 %v446, 96
        %v743 = vpop.permute.xlu0 %742
        %744 = vrot.lane.b32.xlu0 %v447, 96
        %v745 = vpop.permute.xlu0 %744
        %746 = vrot.lane.b32.xlu0 %v448, 96
        %v747 = vpop.permute.xlu0 %746
        %748 = vrot.lane.b32.xlu0 %v449, 96
        %v749 = vpop.permute.xlu0 %748
        %750 = vrot.lane.b32.xlu0 %v450, 96
        %v751 = vpop.permute.xlu0 %750
        %752 = vrot.lane.b32.xlu0 %v451, 96
        %v753 = vpop.permute.xlu0 %752
        %754 = vrot.lane.b32.xlu0 %v452, 96
        %v755 = vpop.permute.xlu0 %754
        %756 = vrot.lane.b32.xlu0 %v453, 96
        %v757 = vpop.permute.xlu0 %756
        %774 = vrot.lane.b32.xlu0 %v549, 32
        %v775 = vpop.permute.xlu0 %774
        %776 = vrot.lane.b32.xlu0 %v552, 32
        %v777 = vpop.permute.xlu0 %776
        %778 = vrot.lane.b32.xlu0 %v555, 32
        %v779 = vpop.permute.xlu0 %778
        %780 = vrot.lane.b32.xlu0 %v558, 32
        %v781 = vpop.permute.xlu0 %780
        %782 = vrot.lane.b32.xlu0 %v561, 32
        %v783 = vpop.permute.xlu0 %782
        %784 = vrot.lane.b32.xlu0 %v564, 32
        %v785 = vpop.permute.xlu0 %784
        %786 = vrot.lane.b32.xlu0 %v567, 32
        %v787 = vpop.permute.xlu0 %786
        %788 = vrot.lane.b32.xlu0 %v617, 32
        %v789 = vpop.permute.xlu0 %788
        %790 = vrot.lane.b32.xlu0 %v570, 32
        %v791 = vpop.permute.xlu0 %790
        %792 = vrot.lane.b32.xlu0 %v573, 32
        %v793 = vpop.permute.xlu0 %792
        %794 = vrot.lane.b32.xlu0 %v576, 32
        %v795 = vpop.permute.xlu0 %794
        %796 = vrot.lane.b32.xlu0 %v579, 32
        %v797 = vpop.permute.xlu0 %796
        %798 = vrot.lane.b32.xlu0 %v582, 32
        %v799 = vpop.permute.xlu0 %798
        %800 = vrot.lane.b32.xlu0 %v585, 32
        %v801 = vpop.permute.xlu0 %800
        %802 = vrot.lane.b32.xlu0 %v588, 32
        %v803 = vpop.permute.xlu0 %802
        %804 = vrot.lane.b32.xlu0 %v620, 32
        %v805 = vpop.permute.xlu0 %804
        %822 = vrot.lane.b32.xlu0 %v439, 64
        %v823 = vpop.permute.xlu0 %822
        %824 = vrot.lane.b32.xlu0 %v440, 64
        %v825 = vpop.permute.xlu0 %824
        %826 = vrot.lane.b32.xlu0 %v441, 64
        %v827 = vpop.permute.xlu0 %826
        %828 = vrot.lane.b32.xlu0 %v442, 64
        %v829 = vpop.permute.xlu0 %828
        %830 = vrot.lane.b32.xlu0 %v443, 64
        %v831 = vpop.permute.xlu0 %830
        %832 = vrot.lane.b32.xlu0 %v444, 64
        %v833 = vpop.permute.xlu0 %832
        %834 = vrot.lane.b32.xlu0 %v445, 64
        %v835 = vpop.permute.xlu0 %834
        %836 = vrot.lane.b32.xlu0 0.0, 64
        %v837 = vpop.permute.xlu0 %836
        %838 = vrot.lane.b32.xlu0 %v447, 64
        %v839 = vpop.permute.xlu0 %838
        %840 = vrot.lane.b32.xlu0 %v448, 64
        %v841 = vpop.permute.xlu0 %840
        %842 = vrot.lane.b32.xlu0 %v449, 64
        %v843 = vpop.permute.xlu0 %842
        %844 = vrot.lane.b32.xlu0 %v450, 64
        %v845 = vpop.permute.xlu0 %844
        %846 = vrot.lane.b32.xlu0 %v451, 64
        %v847 = vpop.permute.xlu0 %846
        %848 = vrot.lane.b32.xlu0 %v452, 64
        %v849 = vpop.permute.xlu0 %848
        %850 = vrot.lane.b32.xlu0 %v453, 64
        %v851 = vpop.permute.xlu0 %850
        %867 = vrot.lane.b32.xlu0 %v507, 96
        %v868 = vpop.permute.xlu0 %867
        %869 = vrot.lane.b32.xlu0 %v510, 96
        %v870 = vpop.permute.xlu0 %869
        %871 = vrot.lane.b32.xlu0 %v513, 96
        %v872 = vpop.permute.xlu0 %871
        %873 = vrot.lane.b32.xlu0 %v516, 96
        %v874 = vpop.permute.xlu0 %873
        %875 = vrot.lane.b32.xlu0 %v519, 96
        %v876 = vpop.permute.xlu0 %875
        %877 = vrot.lane.b32.xlu0 %v522, 96
        %v878 = vpop.permute.xlu0 %877
        %879 = vrot.lane.b32.xlu0 %v595, 96
        %v880 = vpop.permute.xlu0 %879
        %881 = vrot.lane.b32.xlu0 %v501, 96
        %v882 = vpop.permute.xlu0 %881
        %883 = vrot.lane.b32.xlu0 %v528, 96
        %v884 = vpop.permute.xlu0 %883
        %885 = vrot.lane.b32.xlu0 %v531, 96
        %v886 = vpop.permute.xlu0 %885
        %887 = vrot.lane.b32.xlu0 %v534, 96
        %v888 = vpop.permute.xlu0 %887
        %889 = vrot.lane.b32.xlu0 %v537, 96
        %v890 = vpop.permute.xlu0 %889
        %891 = vrot.lane.b32.xlu0 %v540, 96
        %v892 = vpop.permute.xlu0 %891
        %893 = vrot.lane.b32.xlu0 %v543, 96
        %v894 = vpop.permute.xlu0 %893
        %895 = vrot.lane.b32.xlu0 %v598, 96
        %v896 = vpop.permute.xlu0 %895
        %vm912 = vcmask 261120
        %v913 = vsel %vm912, 0.0, %v637
        %v914 = vsel %vm912, %v438, %v639
        %v915 = vsel %vm912, %v439, %v641
        %v916 = vsel %vm912, %v440, %v643
        %v917 = vsel %vm912, %v441, %v645
        %v918 = vsel %vm912, %v442, %v647
        %v919 = vsel %vm912, %v443, %v649
        %v920 = vsel %vm912, %v444, %v651
        %v921 = vsel %vm912, %v446, %v653
        %v922 = vsel %vm912, %v447, %v655
        %v923 = vsel %vm912, %v448, %v657
        %v924 = vsel %vm912, %v449, %v659
        %v925 = vsel %vm912, %v450, %v661
        %v926 = vsel %vm912, %v451, %v663
        %v927 = vsel %vm912, %v452, %v665
        %vm928 = vcmask 523264
        %v929 = vsel %vm928, %v913, %v682
        %v930 = vsel %vm928, %v914, %v684
        %v931 = vsel %vm928, %v915, %v686
        %v932 = vsel %vm928, %v916, %v688
        %v933 = vsel %vm928, %v917, %v690
        %v934 = vsel %vm928, %v918, %v692
        %v935 = vsel %vm928, %v919, %v694
        %v936 = vsel %vm928, %v920, %v696
        %v937 = vsel %vm928, %v921, %v698
        %v938 = vsel %vm928, %v922, %v700
        %v939 = vsel %vm928, %v923, %v702
        %v940 = vsel %vm928, %v924, %v704
        %v941 = vsel %vm928, %v925, %v706
        %v942 = vsel %vm928, %v926, %v708
        %v943 = vsel %vm928, %v927, %v710
        %vm944 = vcmask 785408
        %v945 = vsel %vm944, %v929, %v727
        %v946 = vsel %vm944, %v930, %v729
        %v947 = vsel %vm944, %v931, %v731
        %v948 = vsel %vm944, %v932, %v733
        %v949 = vsel %vm944, %v933, %v735
        %v950 = vsel %vm944, %v934, %v737
        %v951 = vsel %vm944, %v935, %v739
        %v952 = vsel %vm944, %v936, %v741
        %v953 = vsel %vm944, %v929, %v743
        %v954 = vsel %vm944, %v937, %v745
        %v955 = vsel %vm944, %v938, %v747
        %v956 = vsel %vm944, %v939, %v749
        %v957 = vsel %vm944, %v940, %v751
        %v958 = vsel %vm944, %v941, %v753
        %v959 = vsel %vm944, %v942, %v755
        %v960 = vsel %vm944, %v943, %v757
        %v961 = vsel %vm912, %v504, %v775
        %v962 = vsel %vm912, %v507, %v777
        %v963 = vsel %vm912, %v510, %v779
        %v964 = vsel %vm912, %v513, %v781
        %v965 = vsel %vm912, %v516, %v783
        %v966 = vsel %vm912, %v519, %v785
        %v967 = vsel %vm912, %v522, %v787
        %v968 = vsel %vm912, %v595, %v789
        %v969 = vsel %vm912, %v525, %v791
        %v970 = vsel %vm912, %v528, %v793
        %v971 = vsel %vm912, %v531, %v795
        %v972 = vsel %vm912, %v534, %v797
        %v973 = vsel %vm912, %v537, %v799
        %v974 = vsel %vm912, %v540, %v801
        %v975 = vsel %vm912, %v543, %v803
        %v976 = vsel %vm912, %v598, %v805
        %v977 = vsel %vm928, %v961, %v823
        %v978 = vsel %vm928, %v962, %v825
        %v979 = vsel %vm928, %v963, %v827
        %v980 = vsel %vm928, %v964, %v829
        %v981 = vsel %vm928, %v965, %v831
        %v982 = vsel %vm928, %v966, %v833
        %v983 = vsel %vm928, %v967, %v835
        %v984 = vsel %vm928, %v968, %v837
        %v985 = vsel %vm928, %v969, %v839
        %v986 = vsel %vm928, %v970, %v841
        %v987 = vsel %vm928, %v971, %v843
        %v988 = vsel %vm928, %v972, %v845
        %v989 = vsel %vm928, %v973, %v847
        %v990 = vsel %vm928, %v974, %v849
        %v991 = vsel %vm928, %v975, %v851
        %v992 = vsel %vm928, %v976, %v837
        %v993 = vsel %vm944, %v977, %v868
        %v994 = vsel %vm944, %v978, %v870
        %v995 = vsel %vm944, %v979, %v872
        %v996 = vsel %vm944, %v980, %v874
        %v997 = vsel %vm944, %v981, %v876
        %v998 = vsel %vm944, %v982, %v878
        %v999 = vsel %vm944, %v983, %v880
        %v1000 = vsel %vm944, %v984, %v882
        %v1001 = vsel %vm944, %v985, %v884
        %v1002 = vsel %vm944, %v986, %v886
        %v1003 = vsel %vm944, %v987, %v888
        %v1004 = vsel %vm944, %v988, %v890
        %v1005 = vsel %vm944, %v989, %v892
        %v1006 = vsel %vm944, %v990, %v894
        %v1007 = vsel %vm944, %v991, %v896
        %v1008 = vsel %vm944, %v992, %v882
        %v1009 = vpack.c.bf16 %v946, %v945
        %v1010 = vpack.c.bf16 %v994, %v993
        %v1011 = vpack.c.bf16 %v555, %v552
        %v1012 = vpack.c.bf16 %v948, %v947
        %v1013 = vpack.c.bf16 %v996, %v995
        %v1014 = vpack.c.bf16 %v561, %v558
        %v1015 = vpack.c.bf16 %v950, %v949
        %v1016 = vpack.c.bf16 %v998, %v997
        %v1017 = vpack.c.bf16 %v567, %v564
        %v1018 = vpack.c.bf16 %v952, %v951
        %v1019 = vpack.c.bf16 %v1000, %v999
        %v1020 = vpack.c.bf16 %v546, %v617
        %v1021 = vpack.c.bf16 %v954, %v953
        %v1022 = vpack.c.bf16 %v1002, %v1001
        %v1023 = vpack.c.bf16 %v576, %v573
        %v1024 = vpack.c.bf16 %v956, %v955
        %v1025 = vpack.c.bf16 %v1004, %v1003
        %v1026 = vpack.c.bf16 %v582, %v579
        %v1027 = vpack.c.bf16 %v958, %v957
        %v1028 = vpack.c.bf16 %v1006, %v1005
        %v1029 = vpack.c.bf16 %v588, %v585
        %v1030 = vpack.c.bf16 %v960, %v959
        %v1031 = vpack.c.bf16 %v1008, %v1007
        %v1032 = vpack.c.bf16 %v546, %v620
        %v1033 = vld [vmem:[%s6] sm:$0xf]
        %v1034 = vld [vmem:[%s6 + $0x4] sm:$0xf]
        %v1035 = vld [vmem:[%s6 + $0x8] sm:$0xf]
        %v1036 = vld [vmem:[%s6 + $0xc] sm:$0xf]
        %v1037 = vld [vmem:[%s6 + $0x10] sm:$0xf]
        %v1038 = vld [vmem:[%s6 + $0x14] sm:$0xf]
        %v1039 = vld [vmem:[%s6 + $0x18] sm:$0xf]
        %v1040 = vld [vmem:[%s6 + $0x1c] sm:$0xf]
        %v1041 = vld [vmem:[%s6 + $0x20] sm:$0xf]
        %v1042 = vld [vmem:[%s6 + $0x24] sm:$0xf]
        %v1043 = vld [vmem:[%s6 + $0x28] sm:$0xf]
        %v1044 = vld [vmem:[%s6 + $0x2c] sm:$0xf]
        %v1045 = vld [vmem:[%s6 + $0x30] sm:$0xf]
        %v1046 = vld [vmem:[%s6 + $0x34] sm:$0xf]
        %v1047 = vld [vmem:[%s6 + $0x38] sm:$0xf]
        %v1048 = vld [vmem:[%s6 + $0x3c] sm:$0xf]
        %v1049 = vld [vmem:[%s6 + $0x40] sm:$0xf]
        %v1050 = vld [vmem:[%s6 + $0x44] sm:$0xf]
        %v1051 = vld [vmem:[%s6 + $0x48] sm:$0xf]
        %v1052 = vld [vmem:[%s6 + $0x4c] sm:$0xf]
        %v1053 = vld [vmem:[%s6 + $0x50] sm:$0xf]
        %v1054 = vld [vmem:[%s6 + $0x54] sm:$0xf]
        %v1055 = vld [vmem:[%s6 + $0x58] sm:$0xf]
        %v1056 = vld [vmem:[%s6 + $0x5c] sm:$0xf]
        %v1057 = vld [vmem:[%s6 + $0x60] sm:$0xf]
        %v1058 = vld [vmem:[%s6 + $0x64] sm:$0xf]
        %v1059 = vld [vmem:[%s6 + $0x68] sm:$0xf]
        %v1060 = vld [vmem:[%s6 + $0x6c] sm:$0xf]
        %v1061 = vld [vmem:[%s6 + $0x70] sm:$0xf]
        %v1062 = vld [vmem:[%s6 + $0x74] sm:$0xf]
        %v1063 = vld [vmem:[%s6 + $0x78] sm:$0xf]
        %v1064 = vld [vmem:[%s6 + $0x7c] sm:$0xf]
        %v1065 = vld [vmem:[%s6 + $0x80] sm:$0xf]
        %v1066 = vld [vmem:[%s6 + $0x84] sm:$0xf]
        %v1067 = vld [vmem:[%s6 + $0x88] sm:$0xf]
        %v1068 = vld [vmem:[%s6 + $0x8c] sm:$0xf]
        %v1105 = vunpack.c.l.b16 %v1033
        %v1106 = vunpack.c.l.b16 %v1034
        %v1107 = vunpack.c.l.b16 %v1035
        %v1108 = vunpack.c.l.b16 %v1036
        %v1109 = vunpack.c.l.b16 %v1037
        %v1110 = vunpack.c.l.b16 %v1038
        %v1111 = vunpack.c.l.b16 %v1039
        %v1112 = vunpack.c.l.b16 %v1040
        %v1113 = vunpack.c.l.b16 %v1041
        %v1114 = vunpack.c.l.b16 %v1042
        %v1115 = vunpack.c.l.b16 %v1043
        %v1116 = vunpack.c.l.b16 %v1044
        %v1117 = vunpack.c.l.b16 %v1045
        %v1118 = vunpack.c.l.b16 %v1046
        %v1119 = vunpack.c.l.b16 %v1047
        %v1120 = vunpack.c.l.b16 %v1048
        %v1121 = vunpack.c.l.b16 %v1049
        %v1122 = vunpack.c.l.b16 %v1050
        %v1123 = vunpack.c.l.b16 %v1051
        %v1124 = vunpack.c.l.b16 %v1052
        %v1125 = vunpack.c.l.b16 %v1053
        %v1126 = vunpack.c.l.b16 %v1054
        %v1127 = vunpack.c.l.b16 %v1055
        %v1128 = vunpack.c.l.b16 %v1056
        %v1129 = vunpack.c.l.b16 %v1057
        %v1130 = vunpack.c.l.b16 %v1058
        %v1131 = vunpack.c.l.b16 %v1059
        %v1132 = vunpack.c.l.b16 %v1060
        %v1133 = vunpack.c.l.b16 %v1061
        %v1134 = vunpack.c.l.b16 %v1062
        %v1135 = vunpack.c.l.b16 %v1063
        %v1136 = vunpack.c.l.b16 %v1064
        %v1137 = vunpack.c.l.b16 %v1065
        %v1138 = vunpack.c.l.b16 %v1066
        %v1139 = vunpack.c.l.b16 %v1067
        %v1140 = vunpack.c.l.b16 %v1068
        %v1141 = vpack.c.b16 %v1106, %v1105
        %v1142 = vpack.c.b16 %v1108, %v1107
        %v1143 = vpack.c.b16 %v1110, %v1109
        %v1144 = vpack.c.b16 %v1112, %v1111
        %v1145 = vpack.c.b16 %v1114, %v1113
        %v1146 = vpack.c.b16 %v1116, %v1115
        %v1147 = vpack.c.b16 %v1118, %v1117
        %v1148 = vpack.c.b16 %v1120, %v1119
        %v1149 = vpack.c.b16 %v1122, %v1121
        %v1150 = vpack.c.b16 %v1124, %v1123
        %v1151 = vpack.c.b16 %v1126, %v1125
        %v1152 = vpack.c.b16 %v1128, %v1127
        %v1153 = vpack.c.b16 %v1130, %v1129
        %v1154 = vpack.c.b16 %v1132, %v1131
        %v1155 = vpack.c.b16 %v1134, %v1133
        %v1156 = vpack.c.b16 %v1136, %v1135
        %v1157 = vpack.c.b16 %v1138, %v1137
        %v1158 = vpack.c.b16 %v1140, %v1139
        %v1178 = vsel %vm912, %v1011, 0
        %v1181 = vsel %vm912, %v1014, 0
        %v1184 = vsel %vm912, %v1017, 0
        %v1187 = vsel %vm912, %v1020, 0
        %v1190 = vsel %vm912, %v1023, 0
        %v1193 = vsel %vm912, %v1026, 0
        %v1196 = vsel %vm912, %v1029, 0
        %v1199 = vsel %vm912, %v1032, 0
        %1201 = vmatprep.subr.bf16.mxu0 0
        %1202 = vmatpush1.bf16.msra.mxu0 %v1148
        %1203 = vmatprep.subr.bf16.mxu0 0
        %1204 = vmatpush1.bf16.msra.mxu0 %v1147
        %1205 = vmatprep.subr.bf16.mxu0 0
        %1206 = vmatpush1.bf16.msra.mxu0 %v1146
        %1207 = vmatprep.subr.bf16.mxu0 0
        %1208 = vmatpush1.bf16.msra.mxu0 %v1145
        %1209 = vmatprep.subr.bf16.mxu0 0
        %1210 = vmatpush1.bf16.msra.mxu0 %v1144
        %1211 = vmatprep.subr.bf16.mxu0 0
        %1212 = vmatpush1.bf16.msra.mxu0 %v1143
        %1213 = vmatprep.subr.bf16.mxu0 0
        %1214 = vmatpush1.bf16.msra.mxu0 %v1142
        %1215 = vmatprep.subr.bf16.mxu0 0
        %1216 = vmatpush1.bf16.msra.mxu0 %v1141
        %1217 = vmatprep.subr.bf16.mxu0 0
        %1218 = vmatpush2.bf16.msra.mxu0 %v1156
        %1219 = vmatprep.subr.bf16.mxu0 0
        %1220 = vmatpush2.bf16.msra.mxu0 %v1155
        %1221 = vmatprep.subr.bf16.mxu0 0
        %1222 = vmatpush2.bf16.msra.mxu0 %v1154
        %1223 = vmatprep.subr.bf16.mxu0 0
        %1224 = vmatpush2.bf16.msra.mxu0 %v1153
        %1225 = vmatprep.subr.bf16.mxu0 0
        %1226 = vmatpush2.bf16.msra.mxu0 %v1152
        %1227 = vmatprep.subr.bf16.mxu0 0
        %1228 = vmatpush2.bf16.msra.mxu0 %v1151
        %1229 = vmatprep.subr.bf16.mxu0 0
        %1230 = vmatpush2.bf16.msra.mxu0 %v1150
        %1231 = vmatprep.subr.bf16.mxu0 0
        %1232 = vmatpush2.bf16.msra.mxu0 %v1149
        %1233 = vmatprep.mubr.bf16.mxu0 %v1010
        %1234 = vmatmul.mubr.bf16.gmra.mxu0 %v1009
        %v1235 = vpop.f32.mrf.mxu0
        %v1236 = vadd.f32 0.0, %v1235
        %v1237 = vpop.f32.mrf.mxu0
        %v1238 = vpop.f32.mrf.mxu0
        %v1239 = vadd.f32 0.0, %v1238
        %v1240 = vpop.f32.mrf.mxu0
        %1241 = vmatprep.mubr.bf16.mxu0 %v1013
        %1242 = vmatmul.mubr.bf16.gmra.mxu0 %v1012
        %v1243 = vpop.f32.mrf.mxu0
        %v1244 = vadd.f32 0.0, %v1243
        %v1245 = vpop.f32.mrf.mxu0
        %v1246 = vpop.f32.mrf.mxu0
        %v1247 = vadd.f32 0.0, %v1246
        %v1248 = vpop.f32.mrf.mxu0
        %1249 = vmatprep.mubr.bf16.mxu0 %v1016
        %1250 = vmatmul.mubr.bf16.gmra.mxu0 %v1015
        %v1251 = vpop.f32.mrf.mxu0
        %v1252 = vadd.f32 0.0, %v1251
        %v1253 = vpop.f32.mrf.mxu0
        %v1254 = vpop.f32.mrf.mxu0
        %v1255 = vadd.f32 0.0, %v1254
        %v1256 = vpop.f32.mrf.mxu0
        %1257 = vmatprep.mubr.bf16.mxu0 %v1019
        %1258 = vmatmul.mubr.bf16.gmra.mxu0 %v1018
        %v1259 = vpop.f32.mrf.mxu0
        %v1260 = vadd.f32 0.0, %v1259
        %v1261 = vpop.f32.mrf.mxu0
        %v1262 = vpop.f32.mrf.mxu0
        %v1263 = vadd.f32 0.0, %v1262
        %v1264 = vpop.f32.mrf.mxu0
        %1265 = vmatprep.mubr.bf16.mxu0 %v1022
        %1266 = vmatmul.mubr.bf16.gmra.mxu0 %v1021
        %v1267 = vpop.f32.mrf.mxu0
        %v1268 = vadd.f32 0.0, %v1267
        %v1269 = vpop.f32.mrf.mxu0
        %v1270 = vpop.f32.mrf.mxu0
        %v1271 = vadd.f32 0.0, %v1270
        %v1272 = vpop.f32.mrf.mxu0
        %1273 = vmatprep.mubr.bf16.mxu0 %v1025
        %1274 = vmatmul.mubr.bf16.gmra.mxu0 %v1024
        %v1275 = vpop.f32.mrf.mxu0
        %v1276 = vadd.f32 0.0, %v1275
        %v1277 = vpop.f32.mrf.mxu0
        %v1278 = vpop.f32.mrf.mxu0
        %v1279 = vadd.f32 0.0, %v1278
        %v1280 = vpop.f32.mrf.mxu0
        %1281 = vmatprep.mubr.bf16.mxu0 %v1028
        %1282 = vmatmul.mubr.bf16.gmra.mxu0 %v1027
        %v1283 = vpop.f32.mrf.mxu0
        %v1284 = vadd.f32 0.0, %v1283
        %v1285 = vpop.f32.mrf.mxu0
        %v1286 = vpop.f32.mrf.mxu0
        %v1287 = vadd.f32 0.0, %v1286
        %v1288 = vpop.f32.mrf.mxu0
        %1289 = vmatprep.mubr.bf16.mxu0 %v1031
        %1290 = vmatmul.mubr.bf16.gmra.mxu0 %v1030
        %v1291 = vpop.f32.mrf.mxu0
        %v1292 = vadd.f32 0.0, %v1291
        %v1293 = vpop.f32.mrf.mxu0
        %v1294 = vpop.f32.mrf.mxu0
        %v1295 = vadd.f32 0.0, %v1294
        %v1296 = vpop.f32.mrf.mxu0
        %1297 = vdwg.mxu0
        %1298 = vmatprep.subr.bf16.mxu0 0
        %1299 = vmatpush1.bf16.msra.mxu0 0
        %1300 = vmatprep.subr.bf16.mxu0 0
        %1301 = vmatpush1.bf16.msra.mxu0 0
        %1302 = vmatprep.subr.bf16.mxu0 0
        %1303 = vmatpush1.bf16.msra.mxu0 0
        %1304 = vmatprep.subr.bf16.mxu0 0
        %1305 = vmatpush1.bf16.msra.mxu0 0
        %1306 = vmatprep.subr.bf16.mxu0 0
        %1307 = vmatpush1.bf16.msra.mxu0 0
        %1308 = vmatprep.subr.bf16.mxu0 0
        %1309 = vmatpush1.bf16.msra.mxu0 0
        %1310 = vmatprep.subr.bf16.mxu0 0
        %1311 = vmatpush1.bf16.msra.mxu0 %v1158
        %1312 = vmatprep.subr.bf16.mxu0 0
        %1313 = vmatpush1.bf16.msra.mxu0 %v1157
        %1314 = vmatprep.subr.bf16.mxu0 0
        %1315 = vmatpush2.bf16.msra.mxu0 0
        %1316 = vmatprep.subr.bf16.mxu0 0
        %1317 = vmatpush2.bf16.msra.mxu0 0
        %1318 = vmatprep.subr.bf16.mxu0 0
        %1319 = vmatpush2.bf16.msra.mxu0 0
        %1320 = vmatprep.subr.bf16.mxu0 0
        %1321 = vmatpush2.bf16.msra.mxu0 0
        %1322 = vmatprep.subr.bf16.mxu0 0
        %1323 = vmatpush2.bf16.msra.mxu0 0
        %1324 = vmatprep.subr.bf16.mxu0 0
        %1325 = vmatpush2.bf16.msra.mxu0 0
        %1326 = vmatprep.subr.bf16.mxu0 0
        %1327 = vmatpush2.bf16.msra.mxu0 0
        %1328 = vmatprep.subr.bf16.mxu0 0
        %1329 = vmatpush2.bf16.msra.mxu0 0
        %1330 = vmatprep.mubr.bf16.mxu0 0
        %1331 = vmatmul.mubr.bf16.gmra.mxu0 %v1178
        %v1332 = vpop.f32.mrf.mxu0
        %v1333 = vadd.f32 %v1236, %v1332
        %v1334 = vpop.f32.mrf.mxu0
        %v1335 = vpop.f32.mrf.mxu0
        %v1336 = vadd.f32 %v1239, %v1335
        %v1337 = vpop.f32.mrf.mxu0
        %1338 = vmatprep.mubr.bf16.mxu0 0
        %1339 = vmatmul.mubr.bf16.gmra.mxu0 %v1181
        %v1340 = vpop.f32.mrf.mxu0
        %v1341 = vadd.f32 %v1244, %v1340
        %v1342 = vpop.f32.mrf.mxu0
        %v1343 = vpop.f32.mrf.mxu0
        %v1344 = vadd.f32 %v1247, %v1343
        %v1345 = vpop.f32.mrf.mxu0
        %1346 = vmatprep.mubr.bf16.mxu0 0
        %1347 = vmatmul.mubr.bf16.gmra.mxu0 %v1184
        %v1348 = vpop.f32.mrf.mxu0
        %v1349 = vadd.f32 %v1252, %v1348
        %v1350 = vpop.f32.mrf.mxu0
        %v1351 = vpop.f32.mrf.mxu0
        %v1352 = vadd.f32 %v1255, %v1351
        %v1353 = vpop.f32.mrf.mxu0
        %1354 = vmatprep.mubr.bf16.mxu0 0
        %1355 = vmatmul.mubr.bf16.gmra.mxu0 %v1187
        %v1356 = vpop.f32.mrf.mxu0
        %v1357 = vadd.f32 %v1260, %v1356
        %v1358 = vpop.f32.mrf.mxu0
        %v1359 = vpop.f32.mrf.mxu0
        %v1360 = vadd.f32 %v1263, %v1359
        %v1361 = vpop.f32.mrf.mxu0
        %1362 = vmatprep.mubr.bf16.mxu0 0
        %1363 = vmatmul.mubr.bf16.gmra.mxu0 %v1190
        %v1364 = vpop.f32.mrf.mxu0
        %v1365 = vadd.f32 %v1268, %v1364
        %v1366 = vpop.f32.mrf.mxu0
        %v1367 = vpop.f32.mrf.mxu0
        %v1368 = vadd.f32 %v1271, %v1367
        %v1369 = vpop.f32.mrf.mxu0
        %1370 = vmatprep.mubr.bf16.mxu0 0
        %1371 = vmatmul.mubr.bf16.gmra.mxu0 %v1193
        %v1372 = vpop.f32.mrf.mxu0
        %v1373 = vadd.f32 %v1276, %v1372
        %v1374 = vpop.f32.mrf.mxu0
        %v1375 = vpop.f32.mrf.mxu0
        %v1376 = vadd.f32 %v1279, %v1375
        %v1377 = vpop.f32.mrf.mxu0
        %1378 = vmatprep.mubr.bf16.mxu0 0
        %1379 = vmatmul.mubr.bf16.gmra.mxu0 %v1196
        %v1380 = vpop.f32.mrf.mxu0
        %v1381 = vadd.f32 %v1284, %v1380
        %v1382 = vpop.f32.mrf.mxu0
        %v1383 = vpop.f32.mrf.mxu0
        %v1384 = vadd.f32 %v1287, %v1383
        %v1385 = vpop.f32.mrf.mxu0
        %1386 = vmatprep.mubr.bf16.mxu0 0
        %1387 = vmatmul.mubr.bf16.gmra.mxu0 %v1199
        %v1388 = vpop.f32.mrf.mxu0
        %v1389 = vadd.f32 %v1292, %v1388
        %v1390 = vpop.f32.mrf.mxu0
        %v1391 = vpop.f32.mrf.mxu0
        %v1392 = vadd.f32 %v1295, %v1391
        %v1393 = vpop.f32.mrf.mxu0
        %1394 = vdwg.mxu0
        %v1395 = vld [vmem:[%s3] sm:$0x1]
        %v1397 = vlaneseq
        %v1398 = vshrl.u32 %v1397, 7
        %v1399 = vsub.s32 0, %v1398
        %v1400 = vrot.slane %v1395, %v1399
        %v1402 = vmul.f32 %v1333, %v1400
        %v1403 = vmul.f32 %v1336, %v1400
        %v1404 = vmul.f32 %v1341, %v1400
        %v1405 = vmul.f32 %v1344, %v1400
        %v1406 = vmul.f32 %v1349, %v1400
        %v1407 = vmul.f32 %v1352, %v1400
        %v1408 = vmul.f32 %v1357, %v1400
        %v1409 = vmul.f32 %v1360, %v1400
        %v1410 = vmul.f32 %v1365, %v1400
        %v1411 = vmul.f32 %v1368, %v1400
        %v1412 = vmul.f32 %v1373, %v1400
        %v1413 = vmul.f32 %v1376, %v1400
        %v1414 = vmul.f32 %v1381, %v1400
        %v1415 = vmul.f32 %v1384, %v1400
        %v1416 = vmul.f32 %v1389, %v1400
        %v1417 = vmul.f32 %v1392, %v1400
        %v1418 = vld [vmem:[%s4] sm:$0x1]
        %v1420 = vlaneseq
        %v1421 = vshrl.u32 %v1420, 7
        %v1422 = vsub.s32 0, %v1421
        %v1423 = vrot.slane %v1418, %v1422
        %v1425 = vadd.f32 %v1402, %v1423
        %v1426 = vadd.f32 %v1403, %v1423
        %v1427 = vadd.f32 %v1404, %v1423
        %v1428 = vadd.f32 %v1405, %v1423
        %v1429 = vadd.f32 %v1406, %v1423
        %v1430 = vadd.f32 %v1407, %v1423
        %v1431 = vadd.f32 %v1408, %v1423
        %v1432 = vadd.f32 %v1409, %v1423
        %v1433 = vadd.f32 %v1410, %v1423
        %v1434 = vadd.f32 %v1411, %v1423
        %v1435 = vadd.f32 %v1412, %v1423
        %v1436 = vadd.f32 %v1413, %v1423
        %v1437 = vadd.f32 %v1414, %v1423
        %v1438 = vadd.f32 %v1415, %v1423
        %v1439 = vadd.f32 %v1416, %v1423
        %v1440 = vadd.f32 %v1417, %v1423
        %v1441 = vmax.f32 %v1425, 0.0
        %v1442 = vmax.f32 %v1426, 0.0
        %v1443 = vmax.f32 %v1427, 0.0
        %v1444 = vmax.f32 %v1428, 0.0
        %v1445 = vmax.f32 %v1429, 0.0
        %v1446 = vmax.f32 %v1430, 0.0
        %v1447 = vmax.f32 %v1431, 0.0
        %v1448 = vmax.f32 %v1432, 0.0
        %v1449 = vmax.f32 %v1433, 0.0
        %v1450 = vmax.f32 %v1434, 0.0
        %v1451 = vmax.f32 %v1435, 0.0
        %v1452 = vmax.f32 %v1436, 0.0
        %v1453 = vmax.f32 %v1437, 0.0
        %v1454 = vmax.f32 %v1438, 0.0
        %v1455 = vmax.f32 %v1439, 0.0
        %v1456 = vmax.f32 %v1440, 0.0
        %v1457 = vld [vmem:[%s5] sm:$0x1]
        %v1459 = vlaneseq
        %v1460 = vshrl.u32 %v1459, 7
        %v1461 = vsub.s32 0, %v1460
        %v1462 = vrot.slane %v1457, %v1461
        %v1464 = vmul.f32 %v1441, %v1462
        %v1465 = vmul.f32 %v1442, %v1462
        %v1466 = vmul.f32 %v1443, %v1462
        %v1467 = vmul.f32 %v1444, %v1462
        %v1468 = vmul.f32 %v1445, %v1462
        %v1469 = vmul.f32 %v1446, %v1462
        %v1470 = vmul.f32 %v1447, %v1462
        %v1471 = vmul.f32 %v1448, %v1462
        %v1472 = vmul.f32 %v1449, %v1462
        %v1473 = vmul.f32 %v1450, %v1462
        %v1474 = vmul.f32 %v1451, %v1462
        %v1475 = vmul.f32 %v1452, %v1462
        %v1476 = vmul.f32 %v1453, %v1462
        %v1477 = vmul.f32 %v1454, %v1462
        %v1478 = vmul.f32 %v1455, %v1462
        %v1479 = vmul.f32 %v1456, %v1462
        %v1496 = vrot.slane %v1464, 7
        %v1497 = vrot.slane %v1465, 7
        %v1498 = vrot.slane %v1466, 7
        %v1499 = vrot.slane %v1467, 7
        %v1500 = vrot.slane %v1468, 7
        %v1501 = vrot.slane %v1469, 7
        %v1502 = vrot.slane %v1470, 7
        %v1503 = vrot.slane %v1471, 7
        %v1504 = vrot.slane %v1472, 7
        %v1505 = vrot.slane %v1473, 7
        %v1506 = vrot.slane %v1474, 7
        %v1507 = vrot.slane %v1475, 7
        %v1508 = vrot.slane %v1476, 7
        %v1509 = vrot.slane %v1477, 7
        %v1510 = vrot.slane %v1478, 7
        %v1511 = vrot.slane %v1479, 7
        %v1528 = vsel %vm437, 0.0, %v1496
        %v1529 = vsel %vm437, 0.0, %v1497
        %v1530 = vsel %vm437, 0.0, %v1498
        %v1531 = vsel %vm437, 0.0, %v1499
        %v1532 = vsel %vm437, 0.0, %v1500
        %v1533 = vsel %vm437, 0.0, %v1501
        %v1534 = vsel %vm437, 0.0, %v1502
        %v1535 = vsel %vm437, 0.0, %v1503
        %v1536 = vsel %vm437, 0.0, %v1504
        %v1537 = vsel %vm437, 0.0, %v1505
        %v1538 = vsel %vm437, 0.0, %v1506
        %v1539 = vsel %vm437, 0.0, %v1507
        %v1540 = vsel %vm437, 0.0, %v1508
        %v1541 = vsel %vm437, 0.0, %v1509
        %v1542 = vsel %vm437, 0.0, %v1510
        %v1543 = vsel %vm437, 0.0, %v1511
        %v1544 = vsel %vm437, %v1496, 0.0
        %v1545 = vsel %vm437, %v1497, 0.0
        %v1546 = vsel %vm437, %v1498, 0.0
        %v1547 = vsel %vm437, %v1499, 0.0
        %v1548 = vsel %vm437, %v1500, 0.0
        %v1549 = vsel %vm437, %v1501, 0.0
        %v1550 = vsel %vm437, %v1502, 0.0
        %v1551 = vsel %vm437, %v1503, 0.0
        %v1552 = vsel %vm437, %v1504, 0.0
        %v1553 = vsel %vm437, %v1505, 0.0
        %v1554 = vsel %vm437, %v1506, 0.0
        %v1555 = vsel %vm437, %v1507, 0.0
        %v1556 = vsel %vm437, %v1508, 0.0
        %v1557 = vsel %vm437, %v1509, 0.0
        %v1558 = vsel %vm437, %v1510, 0.0
        %v1559 = vsel %vm437, %v1511, 0.0
        %v1588 = vrot.slane %v1528, 1
        %v1589 = vrot.slane %v1544, 1
        %v1590 = vsel %vm499, %v1588, %v1589
        %v1591 = vrot.slane %v1529, 1
        %v1592 = vrot.slane %v1545, 1
        %v1593 = vsel %vm499, %v1591, %v1592
        %v1594 = vrot.slane %v1530, 1
        %v1595 = vrot.slane %v1546, 1
        %v1596 = vsel %vm499, %v1594, %v1595
        %v1597 = vrot.slane %v1531, 1
        %v1598 = vrot.slane %v1547, 1
        %v1599 = vsel %vm499, %v1597, %v1598
        %v1600 = vrot.slane %v1532, 1
        %v1601 = vrot.slane %v1548, 1
        %v1602 = vsel %vm499, %v1600, %v1601
        %v1603 = vrot.slane %v1533, 1
        %v1604 = vrot.slane %v1549, 1
        %v1605 = vsel %vm499, %v1603, %v1604
        %v1606 = vrot.slane %v1534, 1
        %v1607 = vrot.slane %v1550, 1
        %v1608 = vsel %vm499, %v1606, %v1607
        %v1609 = vrot.slane %v1536, 1
        %v1610 = vrot.slane %v1552, 1
        %v1611 = vsel %vm499, %v1609, %v1610
        %v1612 = vrot.slane %v1537, 1
        %v1613 = vrot.slane %v1553, 1
        %v1614 = vsel %vm499, %v1612, %v1613
        %v1615 = vrot.slane %v1538, 1
        %v1616 = vrot.slane %v1554, 1
        %v1617 = vsel %vm499, %v1615, %v1616
        %v1618 = vrot.slane %v1539, 1
        %v1619 = vrot.slane %v1555, 1
        %v1620 = vsel %vm499, %v1618, %v1619
        %v1621 = vrot.slane %v1540, 1
        %v1622 = vrot.slane %v1556, 1
        %v1623 = vsel %vm499, %v1621, %v1622
        %v1624 = vrot.slane %v1541, 1
        %v1625 = vrot.slane %v1557, 1
        %v1626 = vsel %vm499, %v1624, %v1625
        %v1627 = vrot.slane %v1542, 1
        %v1628 = vrot.slane %v1558, 1
        %v1629 = vsel %vm499, %v1627, %v1628
        %v1630 = vrot.slane %v1528, 2
        %v1631 = vrot.slane %v1544, 2
        %v1632 = vsel %vm544, %v1630, %v1631
        %v1633 = vrot.slane %v1529, 2
        %v1634 = vrot.slane %v1545, 2
        %v1635 = vsel %vm544, %v1633, %v1634
        %v1636 = vrot.slane %v1530, 2
        %v1637 = vrot.slane %v1546, 2
        %v1638 = vsel %vm544, %v1636, %v1637
        %v1639 = vrot.slane %v1531, 2
        %v1640 = vrot.slane %v1547, 2
        %v1641 = vsel %vm544, %v1639, %v1640
        %v1642 = vrot.slane %v1532, 2
        %v1643 = vrot.slane %v1548, 2
        %v1644 = vsel %vm544, %v1642, %v1643
        %v1645 = vrot.slane %v1533, 2
        %v1646 = vrot.slane %v1549, 2
        %v1647 = vsel %vm544, %v1645, %v1646
        %v1648 = vrot.slane %v1534, 2
        %v1649 = vrot.slane %v1550, 2
        %v1650 = vsel %vm544, %v1648, %v1649
        %v1651 = vrot.slane %v1536, 2
        %v1652 = vrot.slane %v1552, 2
        %v1653 = vsel %vm544, %v1651, %v1652
        %v1654 = vrot.slane %v1537, 2
        %v1655 = vrot.slane %v1553, 2
        %v1656 = vsel %vm544, %v1654, %v1655
        %v1657 = vrot.slane %v1538, 2
        %v1658 = vrot.slane %v1554, 2
        %v1659 = vsel %vm544, %v1657, %v1658
        %v1660 = vrot.slane %v1539, 2
        %v1661 = vrot.slane %v1555, 2
        %v1662 = vsel %vm544, %v1660, %v1661
        %v1663 = vrot.slane %v1540, 2
        %v1664 = vrot.slane %v1556, 2
        %v1665 = vsel %vm544, %v1663, %v1664
        %v1666 = vrot.slane %v1541, 2
        %v1667 = vrot.slane %v1557, 2
        %v1668 = vsel %vm544, %v1666, %v1667
        %v1669 = vrot.slane %v1542, 2
        %v1670 = vrot.slane %v1558, 2
        %v1671 = vsel %vm544, %v1669, %v1670
        %v1676 = vrot.slane %v1535, 1
        %v1677 = vrot.slane %v1551, 1
        %v1678 = vsel %vm499, %v1676, %v1677
        %v1679 = vrot.slane %v1543, 1
        %v1680 = vrot.slane %v1559, 1
        %v1681 = vsel %vm499, %v1679, %v1680
        %v1698 = vrot.slane %v1535, 2
        %v1699 = vrot.slane %v1551, 2
        %v1700 = vsel %vm544, %v1698, %v1699
        %v1701 = vrot.slane %v1543, 2
        %v1702 = vrot.slane %v1559, 2
        %v1703 = vsel %vm544, %v1701, %v1702
        %1718 = vrot.lane.b32.xlu0 %v1590, 32
        %v1719 = vpop.permute.xlu0 %1718
        %1720 = vrot.lane.b32.xlu0 %v1593, 32
        %v1721 = vpop.permute.xlu0 %1720
        %1722 = vrot.lane.b32.xlu0 %v1596, 32
        %v1723 = vpop.permute.xlu0 %1722
        %1724 = vrot.lane.b32.xlu0 %v1599, 32
        %v1725 = vpop.permute.xlu0 %1724
        %1726 = vrot.lane.b32.xlu0 %v1602, 32
        %v1727 = vpop.permute.xlu0 %1726
        %1728 = vrot.lane.b32.xlu0 %v1605, 32
        %v1729 = vpop.permute.xlu0 %1728
        %1730 = vrot.lane.b32.xlu0 %v1608, 32
        %v1731 = vpop.permute.xlu0 %1730
        %1732 = vrot.lane.b32.xlu0 %v1611, 32
        %v1733 = vpop.permute.xlu0 %1732
        %1734 = vrot.lane.b32.xlu0 %v1614, 32
        %v1735 = vpop.permute.xlu0 %1734
        %1736 = vrot.lane.b32.xlu0 %v1617, 32
        %v1737 = vpop.permute.xlu0 %1736
        %1738 = vrot.lane.b32.xlu0 %v1620, 32
        %v1739 = vpop.permute.xlu0 %1738
        %1740 = vrot.lane.b32.xlu0 %v1623, 32
        %v1741 = vpop.permute.xlu0 %1740
        %1742 = vrot.lane.b32.xlu0 %v1626, 32
        %v1743 = vpop.permute.xlu0 %1742
        %1744 = vrot.lane.b32.xlu0 %v1629, 32
        %v1745 = vpop.permute.xlu0 %1744
        %1760 = vrot.lane.b32.xlu0 %v1632, 64
        %v1761 = vpop.permute.xlu0 %1760
        %1762 = vrot.lane.b32.xlu0 %v1635, 64
        %v1763 = vpop.permute.xlu0 %1762
        %1764 = vrot.lane.b32.xlu0 %v1638, 64
        %v1765 = vpop.permute.xlu0 %1764
        %1766 = vrot.lane.b32.xlu0 %v1641, 64
        %v1767 = vpop.permute.xlu0 %1766
        %1768 = vrot.lane.b32.xlu0 %v1644, 64
        %v1769 = vpop.permute.xlu0 %1768
        %1770 = vrot.lane.b32.xlu0 %v1647, 64
        %v1771 = vpop.permute.xlu0 %1770
        %1772 = vrot.lane.b32.xlu0 %v1650, 64
        %v1773 = vpop.permute.xlu0 %1772
        %1774 = vrot.lane.b32.xlu0 %v1653, 64
        %v1775 = vpop.permute.xlu0 %1774
        %1776 = vrot.lane.b32.xlu0 %v1656, 64
        %v1777 = vpop.permute.xlu0 %1776
        %1778 = vrot.lane.b32.xlu0 %v1659, 64
        %v1779 = vpop.permute.xlu0 %1778
        %1780 = vrot.lane.b32.xlu0 %v1662, 64
        %v1781 = vpop.permute.xlu0 %1780
        %1782 = vrot.lane.b32.xlu0 %v1665, 64
        %v1783 = vpop.permute.xlu0 %1782
        %1784 = vrot.lane.b32.xlu0 %v1668, 64
        %v1785 = vpop.permute.xlu0 %1784
        %1786 = vrot.lane.b32.xlu0 %v1671, 64
        %v1787 = vpop.permute.xlu0 %1786
        %1802 = vrot.lane.b32.xlu0 %v1528, 96
        %v1803 = vpop.permute.xlu0 %1802
        %1804 = vrot.lane.b32.xlu0 %v1529, 96
        %v1805 = vpop.permute.xlu0 %1804
        %1806 = vrot.lane.b32.xlu0 %v1530, 96
        %v1807 = vpop.permute.xlu0 %1806
        %1808 = vrot.lane.b32.xlu0 %v1531, 96
        %v1809 = vpop.permute.xlu0 %1808
        %1810 = vrot.lane.b32.xlu0 %v1532, 96
        %v1811 = vpop.permute.xlu0 %1810
        %1812 = vrot.lane.b32.xlu0 %v1533, 96
        %v1813 = vpop.permute.xlu0 %1812
        %1814 = vrot.lane.b32.xlu0 %v1534, 96
        %v1815 = vpop.permute.xlu0 %1814
        %1816 = vrot.lane.b32.xlu0 %v1535, 96
        %v1817 = vpop.permute.xlu0 %1816
        %1818 = vrot.lane.b32.xlu0 %v1536, 96
        %v1819 = vpop.permute.xlu0 %1818
        %1820 = vrot.lane.b32.xlu0 %v1537, 96
        %v1821 = vpop.permute.xlu0 %1820
        %1822 = vrot.lane.b32.xlu0 %v1538, 96
        %v1823 = vpop.permute.xlu0 %1822
        %1824 = vrot.lane.b32.xlu0 %v1539, 96
        %v1825 = vpop.permute.xlu0 %1824
        %1826 = vrot.lane.b32.xlu0 %v1540, 96
        %v1827 = vpop.permute.xlu0 %1826
        %1828 = vrot.lane.b32.xlu0 %v1541, 96
        %v1829 = vpop.permute.xlu0 %1828
        %1830 = vrot.lane.b32.xlu0 %v1542, 96
        %v1831 = vpop.permute.xlu0 %1830
        %1832 = vrot.lane.b32.xlu0 %v1543, 96
        %v1833 = vpop.permute.xlu0 %1832
        %1850 = vrot.lane.b32.xlu0 %v1632, 32
        %v1851 = vpop.permute.xlu0 %1850
        %1852 = vrot.lane.b32.xlu0 %v1635, 32
        %v1853 = vpop.permute.xlu0 %1852
        %1854 = vrot.lane.b32.xlu0 %v1638, 32
        %v1855 = vpop.permute.xlu0 %1854
        %1856 = vrot.lane.b32.xlu0 %v1641, 32
        %v1857 = vpop.permute.xlu0 %1856
        %1858 = vrot.lane.b32.xlu0 %v1644, 32
        %v1859 = vpop.permute.xlu0 %1858
        %1860 = vrot.lane.b32.xlu0 %v1647, 32
        %v1861 = vpop.permute.xlu0 %1860
        %1862 = vrot.lane.b32.xlu0 %v1650, 32
        %v1863 = vpop.permute.xlu0 %1862
        %1864 = vrot.lane.b32.xlu0 %v1700, 32
        %v1865 = vpop.permute.xlu0 %1864
        %1866 = vrot.lane.b32.xlu0 %v1653, 32
        %v1867 = vpop.permute.xlu0 %1866
        %1868 = vrot.lane.b32.xlu0 %v1656, 32
        %v1869 = vpop.permute.xlu0 %1868
        %1870 = vrot.lane.b32.xlu0 %v1659, 32
        %v1871 = vpop.permute.xlu0 %1870
        %1872 = vrot.lane.b32.xlu0 %v1662, 32
        %v1873 = vpop.permute.xlu0 %1872
        %1874 = vrot.lane.b32.xlu0 %v1665, 32
        %v1875 = vpop.permute.xlu0 %1874
        %1876 = vrot.lane.b32.xlu0 %v1668, 32
        %v1877 = vpop.permute.xlu0 %1876
        %1878 = vrot.lane.b32.xlu0 %v1671, 32
        %v1879 = vpop.permute.xlu0 %1878
        %1880 = vrot.lane.b32.xlu0 %v1703, 32
        %v1881 = vpop.permute.xlu0 %1880
        %1898 = vrot.lane.b32.xlu0 %v1529, 64
        %v1899 = vpop.permute.xlu0 %1898
        %1900 = vrot.lane.b32.xlu0 %v1530, 64
        %v1901 = vpop.permute.xlu0 %1900
        %1902 = vrot.lane.b32.xlu0 %v1531, 64
        %v1903 = vpop.permute.xlu0 %1902
        %1904 = vrot.lane.b32.xlu0 %v1532, 64
        %v1905 = vpop.permute.xlu0 %1904
        %1906 = vrot.lane.b32.xlu0 %v1533, 64
        %v1907 = vpop.permute.xlu0 %1906
        %1908 = vrot.lane.b32.xlu0 %v1534, 64
        %v1909 = vpop.permute.xlu0 %1908
        %1910 = vrot.lane.b32.xlu0 %v1535, 64
        %v1911 = vpop.permute.xlu0 %1910
        %1912 = vrot.lane.b32.xlu0 %v1537, 64
        %v1913 = vpop.permute.xlu0 %1912
        %1914 = vrot.lane.b32.xlu0 %v1538, 64
        %v1915 = vpop.permute.xlu0 %1914
        %1916 = vrot.lane.b32.xlu0 %v1539, 64
        %v1917 = vpop.permute.xlu0 %1916
        %1918 = vrot.lane.b32.xlu0 %v1540, 64
        %v1919 = vpop.permute.xlu0 %1918
        %1920 = vrot.lane.b32.xlu0 %v1541, 64
        %v1921 = vpop.permute.xlu0 %1920
        %1922 = vrot.lane.b32.xlu0 %v1542, 64
        %v1923 = vpop.permute.xlu0 %1922
        %1924 = vrot.lane.b32.xlu0 %v1543, 64
        %v1925 = vpop.permute.xlu0 %1924
        %1940 = vrot.lane.b32.xlu0 %v1593, 96
        %v1941 = vpop.permute.xlu0 %1940
        %1942 = vrot.lane.b32.xlu0 %v1596, 96
        %v1943 = vpop.permute.xlu0 %1942
        %1944 = vrot.lane.b32.xlu0 %v1599, 96
        %v1945 = vpop.permute.xlu0 %1944
        %1946 = vrot.lane.b32.xlu0 %v1602, 96
        %v1947 = vpop.permute.xlu0 %1946
        %1948 = vrot.lane.b32.xlu0 %v1605, 96
        %v1949 = vpop.permute.xlu0 %1948
        %1950 = vrot.lane.b32.xlu0 %v1608, 96
        %v1951 = vpop.permute.xlu0 %1950
        %1952 = vrot.lane.b32.xlu0 %v1678, 96
        %v1953 = vpop.permute.xlu0 %1952
        %1954 = vrot.lane.b32.xlu0 %v1614, 96
        %v1955 = vpop.permute.xlu0 %1954
        %1956 = vrot.lane.b32.xlu0 %v1617, 96
        %v1957 = vpop.permute.xlu0 %1956
        %1958 = vrot.lane.b32.xlu0 %v1620, 96
        %v1959 = vpop.permute.xlu0 %1958
        %1960 = vrot.lane.b32.xlu0 %v1623, 96
        %v1961 = vpop.permute.xlu0 %1960
        %1962 = vrot.lane.b32.xlu0 %v1626, 96
        %v1963 = vpop.permute.xlu0 %1962
        %1964 = vrot.lane.b32.xlu0 %v1629, 96
        %v1965 = vpop.permute.xlu0 %1964
        %1966 = vrot.lane.b32.xlu0 %v1681, 96
        %v1967 = vpop.permute.xlu0 %1966
        %v1982 = vsel %vm912, %v1528, %v1719
        %v1983 = vsel %vm912, %v1529, %v1721
        %v1984 = vsel %vm912, %v1530, %v1723
        %v1985 = vsel %vm912, %v1531, %v1725
        %v1986 = vsel %vm912, %v1532, %v1727
        %v1987 = vsel %vm912, %v1533, %v1729
        %v1988 = vsel %vm912, %v1534, %v1731
        %v1989 = vsel %vm912, %v1536, %v1733
        %v1990 = vsel %vm912, %v1537, %v1735
        %v1991 = vsel %vm912, %v1538, %v1737
        %v1992 = vsel %vm912, %v1539, %v1739
        %v1993 = vsel %vm912, %v1540, %v1741
        %v1994 = vsel %vm912, %v1541, %v1743
        %v1995 = vsel %vm912, %v1542, %v1745
        %v1996 = vsel %vm928, %v1982, %v1761
        %v1997 = vsel %vm928, %v1983, %v1763
        %v1998 = vsel %vm928, %v1984, %v1765
        %v1999 = vsel %vm928, %v1985, %v1767
        %v2000 = vsel %vm928, %v1986, %v1769
        %v2001 = vsel %vm928, %v1987, %v1771
        %v2002 = vsel %vm928, %v1988, %v1773
        %v2003 = vsel %vm928, %v1989, %v1775
        %v2004 = vsel %vm928, %v1990, %v1777
        %v2005 = vsel %vm928, %v1991, %v1779
        %v2006 = vsel %vm928, %v1992, %v1781
        %v2007 = vsel %vm928, %v1993, %v1783
        %v2008 = vsel %vm928, %v1994, %v1785
        %v2009 = vsel %vm928, %v1995, %v1787
        %v2010 = vsel %vm944, %v929, %v1803
        %v2011 = vsel %vm944, %v1996, %v1805
        %v2012 = vsel %vm944, %v1997, %v1807
        %v2013 = vsel %vm944, %v1998, %v1809
        %v2014 = vsel %vm944, %v1999, %v1811
        %v2015 = vsel %vm944, %v2000, %v1813
        %v2016 = vsel %vm944, %v2001, %v1815
        %v2017 = vsel %vm944, %v2002, %v1817
        %v2018 = vsel %vm944, %v929, %v1819
        %v2019 = vsel %vm944, %v2003, %v1821
        %v2020 = vsel %vm944, %v2004, %v1823
        %v2021 = vsel %vm944, %v2005, %v1825
        %v2022 = vsel %vm944, %v2006, %v1827
        %v2023 = vsel %vm944, %v2007, %v1829
        %v2024 = vsel %vm944, %v2008, %v1831
        %v2025 = vsel %vm944, %v2009, %v1833
        %v2026 = vsel %vm912, %v1590, %v1851
        %v2027 = vsel %vm912, %v1593, %v1853
        %v2028 = vsel %vm912, %v1596, %v1855
        %v2029 = vsel %vm912, %v1599, %v1857
        %v2030 = vsel %vm912, %v1602, %v1859
        %v2031 = vsel %vm912, %v1605, %v1861
        %v2032 = vsel %vm912, %v1608, %v1863
        %v2033 = vsel %vm912, %v1678, %v1865
        %v2034 = vsel %vm912, %v1611, %v1867
        %v2035 = vsel %vm912, %v1614, %v1869
        %v2036 = vsel %vm912, %v1617, %v1871
        %v2037 = vsel %vm912, %v1620, %v1873
        %v2038 = vsel %vm912, %v1623, %v1875
        %v2039 = vsel %vm912, %v1626, %v1877
        %v2040 = vsel %vm912, %v1629, %v1879
        %v2041 = vsel %vm912, %v1681, %v1881
        %v2042 = vsel %vm928, %v2026, %v1899
        %v2043 = vsel %vm928, %v2027, %v1901
        %v2044 = vsel %vm928, %v2028, %v1903
        %v2045 = vsel %vm928, %v2029, %v1905
        %v2046 = vsel %vm928, %v2030, %v1907
        %v2047 = vsel %vm928, %v2031, %v1909
        %v2048 = vsel %vm928, %v2032, %v1911
        %v2049 = vsel %vm928, %v2033, %v837
        %v2050 = vsel %vm928, %v2034, %v1913
        %v2051 = vsel %vm928, %v2035, %v1915
        %v2052 = vsel %vm928, %v2036, %v1917
        %v2053 = vsel %vm928, %v2037, %v1919
        %v2054 = vsel %vm928, %v2038, %v1921
        %v2055 = vsel %vm928, %v2039, %v1923
        %v2056 = vsel %vm928, %v2040, %v1925
        %v2057 = vsel %vm928, %v2041, %v837
        %v2058 = vsel %vm944, %v2042, %v1941
        %v2059 = vsel %vm944, %v2043, %v1943
        %v2060 = vsel %vm944, %v2044, %v1945
        %v2061 = vsel %vm944, %v2045, %v1947
        %v2062 = vsel %vm944, %v2046, %v1949
        %v2063 = vsel %vm944, %v2047, %v1951
        %v2064 = vsel %vm944, %v2048, %v1953
        %v2065 = vsel %vm944, %v2049, %v882
        %v2066 = vsel %vm944, %v2050, %v1955
        %v2067 = vsel %vm944, %v2051, %v1957
        %v2068 = vsel %vm944, %v2052, %v1959
        %v2069 = vsel %vm944, %v2053, %v1961
        %v2070 = vsel %vm944, %v2054, %v1963
        %v2071 = vsel %vm944, %v2055, %v1965
        %v2072 = vsel %vm944, %v2056, %v1967
        %v2073 = vsel %vm944, %v2057, %v882
        %v2074 = vpack.c.bf16 %v2011, %v2010
        %v2075 = vpack.c.bf16 %v2059, %v2058
        %v2076 = vpack.c.bf16 %v1638, %v1635
        %v2077 = vpack.c.bf16 %v2013, %v2012
        %v2078 = vpack.c.bf16 %v2061, %v2060
        %v2079 = vpack.c.bf16 %v1644, %v1641
        %v2080 = vpack.c.bf16 %v2015, %v2014
        %v2081 = vpack.c.bf16 %v2063, %v2062
        %v2082 = vpack.c.bf16 %v1650, %v1647
        %v2083 = vpack.c.bf16 %v2017, %v2016
        %v2084 = vpack.c.bf16 %v2065, %v2064
        %v2085 = vpack.c.bf16 %v546, %v1700
        %v2086 = vpack.c.bf16 %v2019, %v2018
        %v2087 = vpack.c.bf16 %v2067, %v2066
        %v2088 = vpack.c.bf16 %v1659, %v1656
        %v2089 = vpack.c.bf16 %v2021, %v2020
        %v2090 = vpack.c.bf16 %v2069, %v2068
        %v2091 = vpack.c.bf16 %v1665, %v1662
        %v2092 = vpack.c.bf16 %v2023, %v2022
        %v2093 = vpack.c.bf16 %v2071, %v2070
        %v2094 = vpack.c.bf16 %v1671, %v1668
        %v2095 = vpack.c.bf16 %v2025, %v2024
        %v2096 = vpack.c.bf16 %v2073, %v2072
        %v2097 = vpack.c.bf16 %v546, %v1703
        %v2098 = vld [vmem:[%s7] sm:$0xf]
        %v2099 = vld [vmem:[%s7 + $0x4] sm:$0xf]
        %v2100 = vld [vmem:[%s7 + $0x8] sm:$0xf]
        %v2101 = vld [vmem:[%s7 + $0xc] sm:$0xf]
        %v2102 = vld [vmem:[%s7 + $0x10] sm:$0xf]
        %v2103 = vld [vmem:[%s7 + $0x14] sm:$0xf]
        %v2104 = vld [vmem:[%s7 + $0x18] sm:$0xf]
        %v2105 = vld [vmem:[%s7 + $0x1c] sm:$0xf]
        %v2106 = vld [vmem:[%s7 + $0x20] sm:$0xf]
        %v2107 = vld [vmem:[%s7 + $0x24] sm:$0xf]
        %v2108 = vld [vmem:[%s7 + $0x28] sm:$0xf]
        %v2109 = vld [vmem:[%s7 + $0x2c] sm:$0xf]
        %v2110 = vld [vmem:[%s7 + $0x30] sm:$0xf]
        %v2111 = vld [vmem:[%s7 + $0x34] sm:$0xf]
        %v2112 = vld [vmem:[%s7 + $0x38] sm:$0xf]
        %v2113 = vld [vmem:[%s7 + $0x3c] sm:$0xf]
        %v2114 = vld [vmem:[%s7 + $0x40] sm:$0xf]
        %v2115 = vld [vmem:[%s7 + $0x44] sm:$0xf]
        %v2116 = vld [vmem:[%s7 + $0x48] sm:$0xf]
        %v2117 = vld [vmem:[%s7 + $0x4c] sm:$0xf]
        %v2118 = vld [vmem:[%s7 + $0x50] sm:$0xf]
        %v2119 = vld [vmem:[%s7 + $0x54] sm:$0xf]
        %v2120 = vld [vmem:[%s7 + $0x58] sm:$0xf]
        %v2121 = vld [vmem:[%s7 + $0x5c] sm:$0xf]
        %v2122 = vld [vmem:[%s7 + $0x60] sm:$0xf]
        %v2123 = vld [vmem:[%s7 + $0x64] sm:$0xf]
        %v2124 = vld [vmem:[%s7 + $0x68] sm:$0xf]
        %v2125 = vld [vmem:[%s7 + $0x6c] sm:$0xf]
        %v2126 = vld [vmem:[%s7 + $0x70] sm:$0xf]
        %v2127 = vld [vmem:[%s7 + $0x74] sm:$0xf]
        %v2128 = vld [vmem:[%s7 + $0x78] sm:$0xf]
        %v2129 = vld [vmem:[%s7 + $0x7c] sm:$0xf]
        %v2130 = vld [vmem:[%s7 + $0x80] sm:$0xf]
        %v2131 = vld [vmem:[%s7 + $0x84] sm:$0xf]
        %v2132 = vld [vmem:[%s7 + $0x88] sm:$0xf]
        %v2133 = vld [vmem:[%s7 + $0x8c] sm:$0xf]
        %v2170 = vunpack.c.l.b16 %v2098
        %v2171 = vunpack.c.l.b16 %v2099
        %v2172 = vunpack.c.l.b16 %v2100
        %v2173 = vunpack.c.l.b16 %v2101
        %v2174 = vunpack.c.l.b16 %v2102
        %v2175 = vunpack.c.l.b16 %v2103
        %v2176 = vunpack.c.l.b16 %v2104
        %v2177 = vunpack.c.l.b16 %v2105
        %v2178 = vunpack.c.l.b16 %v2106
        %v2179 = vunpack.c.l.b16 %v2107
        %v2180 = vunpack.c.l.b16 %v2108
        %v2181 = vunpack.c.l.b16 %v2109
        %v2182 = vunpack.c.l.b16 %v2110
        %v2183 = vunpack.c.l.b16 %v2111
        %v2184 = vunpack.c.l.b16 %v2112
        %v2185 = vunpack.c.l.b16 %v2113
        %v2186 = vunpack.c.l.b16 %v2114
        %v2187 = vunpack.c.l.b16 %v2115
        %v2188 = vunpack.c.l.b16 %v2116
        %v2189 = vunpack.c.l.b16 %v2117
        %v2190 = vunpack.c.l.b16 %v2118
        %v2191 = vunpack.c.l.b16 %v2119
        %v2192 = vunpack.c.l.b16 %v2120
        %v2193 = vunpack.c.l.b16 %v2121
        %v2194 = vunpack.c.l.b16 %v2122
        %v2195 = vunpack.c.l.b16 %v2123
        %v2196 = vunpack.c.l.b16 %v2124
        %v2197 = vunpack.c.l.b16 %v2125
        %v2198 = vunpack.c.l.b16 %v2126
        %v2199 = vunpack.c.l.b16 %v2127
        %v2200 = vunpack.c.l.b16 %v2128
        %v2201 = vunpack.c.l.b16 %v2129
        %v2202 = vunpack.c.l.b16 %v2130
        %v2203 = vunpack.c.l.b16 %v2131
        %v2204 = vunpack.c.l.b16 %v2132
        %v2205 = vunpack.c.l.b16 %v2133
        %v2206 = vpack.c.b16 %v2171, %v2170
        %v2207 = vpack.c.b16 %v2173, %v2172
        %v2208 = vpack.c.b16 %v2175, %v2174
        %v2209 = vpack.c.b16 %v2177, %v2176
        %v2210 = vpack.c.b16 %v2179, %v2178
        %v2211 = vpack.c.b16 %v2181, %v2180
        %v2212 = vpack.c.b16 %v2183, %v2182
        %v2213 = vpack.c.b16 %v2185, %v2184
        %v2214 = vpack.c.b16 %v2187, %v2186
        %v2215 = vpack.c.b16 %v2189, %v2188
        %v2216 = vpack.c.b16 %v2191, %v2190
        %v2217 = vpack.c.b16 %v2193, %v2192
        %v2218 = vpack.c.b16 %v2195, %v2194
        %v2219 = vpack.c.b16 %v2197, %v2196
        %v2220 = vpack.c.b16 %v2199, %v2198
        %v2221 = vpack.c.b16 %v2201, %v2200
        %v2222 = vpack.c.b16 %v2203, %v2202
        %v2223 = vpack.c.b16 %v2205, %v2204
        %v2243 = vsel %vm912, %v2076, 0
        %v2246 = vsel %vm912, %v2079, 0
        %v2249 = vsel %vm912, %v2082, 0
        %v2252 = vsel %vm912, %v2085, 0
        %v2255 = vsel %vm912, %v2088, 0
        %v2258 = vsel %vm912, %v2091, 0
        %v2261 = vsel %vm912, %v2094, 0
        %v2264 = vsel %vm912, %v2097, 0
        %2266 = vmatprep.subr.bf16.mxu0 0
        %2267 = vmatpush1.bf16.msra.mxu0 %v2213
        %2268 = vmatprep.subr.bf16.mxu0 0
        %2269 = vmatpush1.bf16.msra.mxu0 %v2212
        %2270 = vmatprep.subr.bf16.mxu0 0
        %2271 = vmatpush1.bf16.msra.mxu0 %v2211
        %2272 = vmatprep.subr.bf16.mxu0 0
        %2273 = vmatpush1.bf16.msra.mxu0 %v2210
        %2274 = vmatprep.subr.bf16.mxu0 0
        %2275 = vmatpush1.bf16.msra.mxu0 %v2209
        %2276 = vmatprep.subr.bf16.mxu0 0
        %2277 = vmatpush1.bf16.msra.mxu0 %v2208
        %2278 = vmatprep.subr.bf16.mxu0 0
        %2279 = vmatpush1.bf16.msra.mxu0 %v2207
        %2280 = vmatprep.subr.bf16.mxu0 0
        %2281 = vmatpush1.bf16.msra.mxu0 %v2206
        %2282 = vmatprep.subr.bf16.mxu0 0
        %2283 = vmatpush2.bf16.msra.mxu0 %v2221
        %2284 = vmatprep.subr.bf16.mxu0 0
        %2285 = vmatpush2.bf16.msra.mxu0 %v2220
        %2286 = vmatprep.subr.bf16.mxu0 0
        %2287 = vmatpush2.bf16.msra.mxu0 %v2219
        %2288 = vmatprep.subr.bf16.mxu0 0
        %2289 = vmatpush2.bf16.msra.mxu0 %v2218
        %2290 = vmatprep.subr.bf16.mxu0 0
        %2291 = vmatpush2.bf16.msra.mxu0 %v2217
        %2292 = vmatprep.subr.bf16.mxu0 0
        %2293 = vmatpush2.bf16.msra.mxu0 %v2216
        %2294 = vmatprep.subr.bf16.mxu0 0
        %2295 = vmatpush2.bf16.msra.mxu0 %v2215
        %2296 = vmatprep.subr.bf16.mxu0 0
        %2297 = vmatpush2.bf16.msra.mxu0 %v2214
        %2298 = vmatprep.mubr.bf16.mxu0 %v2075
        %2299 = vmatmul.mubr.bf16.gmra.mxu0 %v2074
        %v2300 = vpop.f32.mrf.mxu0
        %v2301 = vadd.f32 0.0, %v2300
        %v2302 = vpop.f32.mrf.mxu0
        %v2303 = vpop.f32.mrf.mxu0
        %v2304 = vadd.f32 0.0, %v2303
        %v2305 = vpop.f32.mrf.mxu0
        %2306 = vmatprep.mubr.bf16.mxu0 %v2078
        %2307 = vmatmul.mubr.bf16.gmra.mxu0 %v2077
        %v2308 = vpop.f32.mrf.mxu0
        %v2309 = vadd.f32 0.0, %v2308
        %v2310 = vpop.f32.mrf.mxu0
        %v2311 = vpop.f32.mrf.mxu0
        %v2312 = vadd.f32 0.0, %v2311
        %v2313 = vpop.f32.mrf.mxu0
        %2314 = vmatprep.mubr.bf16.mxu0 %v2081
        %2315 = vmatmul.mubr.bf16.gmra.mxu0 %v2080
        %v2316 = vpop.f32.mrf.mxu0
        %v2317 = vadd.f32 0.0, %v2316
        %v2318 = vpop.f32.mrf.mxu0
        %v2319 = vpop.f32.mrf.mxu0
        %v2320 = vadd.f32 0.0, %v2319
        %v2321 = vpop.f32.mrf.mxu0
        %2322 = vmatprep.mubr.bf16.mxu0 %v2084
        %2323 = vmatmul.mubr.bf16.gmra.mxu0 %v2083
        %v2324 = vpop.f32.mrf.mxu0
        %v2325 = vadd.f32 0.0, %v2324
        %v2326 = vpop.f32.mrf.mxu0
        %v2327 = vpop.f32.mrf.mxu0
        %v2328 = vadd.f32 0.0, %v2327
        %v2329 = vpop.f32.mrf.mxu0
        %2330 = vmatprep.mubr.bf16.mxu0 %v2087
        %2331 = vmatmul.mubr.bf16.gmra.mxu0 %v2086
        %v2332 = vpop.f32.mrf.mxu0
        %v2333 = vadd.f32 0.0, %v2332
        %v2334 = vpop.f32.mrf.mxu0
        %v2335 = vpop.f32.mrf.mxu0
        %v2336 = vadd.f32 0.0, %v2335
        %v2337 = vpop.f32.mrf.mxu0
        %2338 = vmatprep.mubr.bf16.mxu0 %v2090
        %2339 = vmatmul.mubr.bf16.gmra.mxu0 %v2089
        %v2340 = vpop.f32.mrf.mxu0
        %v2341 = vadd.f32 0.0, %v2340
        %v2342 = vpop.f32.mrf.mxu0
        %v2343 = vpop.f32.mrf.mxu0
        %v2344 = vadd.f32 0.0, %v2343
        %v2345 = vpop.f32.mrf.mxu0
        %2346 = vmatprep.mubr.bf16.mxu0 %v2093
        %2347 = vmatmul.mubr.bf16.gmra.mxu0 %v2092
        %v2348 = vpop.f32.mrf.mxu0
        %v2349 = vadd.f32 0.0, %v2348
        %v2350 = vpop.f32.mrf.mxu0
        %v2351 = vpop.f32.mrf.mxu0
        %v2352 = vadd.f32 0.0, %v2351
        %v2353 = vpop.f32.mrf.mxu0
        %2354 = vmatprep.mubr.bf16.mxu0 %v2096
        %2355 = vmatmul.mubr.bf16.gmra.mxu0 %v2095
        %v2356 = vpop.f32.mrf.mxu0
        %v2357 = vadd.f32 0.0, %v2356
        %v2358 = vpop.f32.mrf.mxu0
        %v2359 = vpop.f32.mrf.mxu0
        %v2360 = vadd.f32 0.0, %v2359
        %v2361 = vpop.f32.mrf.mxu0
        %2362 = vdwg.mxu0
        %2363 = vmatprep.subr.bf16.mxu0 0
        %2364 = vmatpush1.bf16.msra.mxu0 0
        %2365 = vmatprep.subr.bf16.mxu0 0
        %2366 = vmatpush1.bf16.msra.mxu0 0
        %2367 = vmatprep.subr.bf16.mxu0 0
        %2368 = vmatpush1.bf16.msra.mxu0 0
        %2369 = vmatprep.subr.bf16.mxu0 0
        %2370 = vmatpush1.bf16.msra.mxu0 0
        %2371 = vmatprep.subr.bf16.mxu0 0
        %2372 = vmatpush1.bf16.msra.mxu0 0
        %2373 = vmatprep.subr.bf16.mxu0 0
        %2374 = vmatpush1.bf16.msra.mxu0 0
        %2375 = vmatprep.subr.bf16.mxu0 0
        %2376 = vmatpush1.bf16.msra.mxu0 %v2223
        %2377 = vmatprep.subr.bf16.mxu0 0
        %2378 = vmatpush1.bf16.msra.mxu0 %v2222
        %2379 = vmatprep.subr.bf16.mxu0 0
        %2380 = vmatpush2.bf16.msra.mxu0 0
        %2381 = vmatprep.subr.bf16.mxu0 0
        %2382 = vmatpush2.bf16.msra.mxu0 0
        %2383 = vmatprep.subr.bf16.mxu0 0
        %2384 = vmatpush2.bf16.msra.mxu0 0
        %2385 = vmatprep.subr.bf16.mxu0 0
        %2386 = vmatpush2.bf16.msra.mxu0 0
        %2387 = vmatprep.subr.bf16.mxu0 0
        %2388 = vmatpush2.bf16.msra.mxu0 0
        %2389 = vmatprep.subr.bf16.mxu0 0
        %2390 = vmatpush2.bf16.msra.mxu0 0
        %2391 = vmatprep.subr.bf16.mxu0 0
        %2392 = vmatpush2.bf16.msra.mxu0 0
        %2393 = vmatprep.subr.bf16.mxu0 0
        %2394 = vmatpush2.bf16.msra.mxu0 0
        %2395 = vmatprep.mubr.bf16.mxu0 0
        %2396 = vmatmul.mubr.bf16.gmra.mxu0 %v2243
        %v2397 = vpop.f32.mrf.mxu0
        %v2398 = vadd.f32 %v2301, %v2397
        %v2399 = vpop.f32.mrf.mxu0
        %v2400 = vpop.f32.mrf.mxu0
        %v2401 = vadd.f32 %v2304, %v2400
        %v2402 = vpop.f32.mrf.mxu0
        %2403 = vmatprep.mubr.bf16.mxu0 0
        %2404 = vmatmul.mubr.bf16.gmra.mxu0 %v2246
        %v2405 = vpop.f32.mrf.mxu0
        %v2406 = vadd.f32 %v2309, %v2405
        %v2407 = vpop.f32.mrf.mxu0
        %v2408 = vpop.f32.mrf.mxu0
        %v2409 = vadd.f32 %v2312, %v2408
        %v2410 = vpop.f32.mrf.mxu0
        %2411 = vmatprep.mubr.bf16.mxu0 0
        %2412 = vmatmul.mubr.bf16.gmra.mxu0 %v2249
        %v2413 = vpop.f32.mrf.mxu0
        %v2414 = vadd.f32 %v2317, %v2413
        %v2415 = vpop.f32.mrf.mxu0
        %v2416 = vpop.f32.mrf.mxu0
        %v2417 = vadd.f32 %v2320, %v2416
        %v2418 = vpop.f32.mrf.mxu0
        %2419 = vmatprep.mubr.bf16.mxu0 0
        %2420 = vmatmul.mubr.bf16.gmra.mxu0 %v2252
        %v2421 = vpop.f32.mrf.mxu0
        %v2422 = vadd.f32 %v2325, %v2421
        %v2423 = vpop.f32.mrf.mxu0
        %v2424 = vpop.f32.mrf.mxu0
        %v2425 = vadd.f32 %v2328, %v2424
        %v2426 = vpop.f32.mrf.mxu0
        %2427 = vmatprep.mubr.bf16.mxu0 0
        %2428 = vmatmul.mubr.bf16.gmra.mxu0 %v2255
        %v2429 = vpop.f32.mrf.mxu0
        %v2430 = vadd.f32 %v2333, %v2429
        %v2431 = vpop.f32.mrf.mxu0
        %v2432 = vpop.f32.mrf.mxu0
        %v2433 = vadd.f32 %v2336, %v2432
        %v2434 = vpop.f32.mrf.mxu0
        %2435 = vmatprep.mubr.bf16.mxu0 0
        %2436 = vmatmul.mubr.bf16.gmra.mxu0 %v2258
        %v2437 = vpop.f32.mrf.mxu0
        %v2438 = vadd.f32 %v2341, %v2437
        %v2439 = vpop.f32.mrf.mxu0
        %v2440 = vpop.f32.mrf.mxu0
        %v2441 = vadd.f32 %v2344, %v2440
        %v2442 = vpop.f32.mrf.mxu0
        %2443 = vmatprep.mubr.bf16.mxu0 0
        %2444 = vmatmul.mubr.bf16.gmra.mxu0 %v2261
        %v2445 = vpop.f32.mrf.mxu0
        %v2446 = vadd.f32 %v2349, %v2445
        %v2447 = vpop.f32.mrf.mxu0
        %v2448 = vpop.f32.mrf.mxu0
        %v2449 = vadd.f32 %v2352, %v2448
        %v2450 = vpop.f32.mrf.mxu0
        %2451 = vmatprep.mubr.bf16.mxu0 0
        %2452 = vmatmul.mubr.bf16.gmra.mxu0 %v2264
        %v2453 = vpop.f32.mrf.mxu0
        %v2454 = vadd.f32 %v2357, %v2453
        %v2455 = vpop.f32.mrf.mxu0
        %v2456 = vpop.f32.mrf.mxu0
        %v2457 = vadd.f32 %v2360, %v2456
        %v2458 = vpop.f32.mrf.mxu0
        %2459 = vdwg.mxu0
        %v2460 = vadd.f32 %v311, %v2398
        %v2461 = vadd.f32 %v312, %v2401
        %v2462 = vadd.f32 %v313, %v2406
        %v2463 = vadd.f32 %v314, %v2409
        %v2464 = vadd.f32 %v315, %v2414
        %v2465 = vadd.f32 %v316, %v2417
        %v2466 = vadd.f32 %v317, %v2422
        %v2467 = vadd.f32 %v318, %v2425
        %v2468 = vadd.f32 %v319, %v2430
        %v2469 = vadd.f32 %v320, %v2433
        %v2470 = vadd.f32 %v321, %v2438
        %v2471 = vadd.f32 %v322, %v2441
        %v2472 = vadd.f32 %v323, %v2446
        %v2473 = vadd.f32 %v324, %v2449
        %v2474 = vadd.f32 %v325, %v2454
        %v2475 = vadd.f32 %v326, %v2457
        %2476 = vst.msk [vmem:[%s301] sm:$0xff] %vm912, %v2460
        %2477 = vst.msk [vmem:[%s301 + $0x8] sm:$0xff] %vm912, %v2461
        %2478 = vst.msk [vmem:[%s301 + $0x10] sm:$0xff] %vm912, %v2462
        %2479 = vst.msk [vmem:[%s301 + $0x18] sm:$0xff] %vm912, %v2463
        %2480 = vst.msk [vmem:[%s301 + $0x20] sm:$0xff] %vm912, %v2464
        %2481 = vst.msk [vmem:[%s301 + $0x28] sm:$0xff] %vm912, %v2465
        %2482 = vst.msk [vmem:[%s301 + $0x30] sm:$0xff] %vm912, %v2466
        %2483 = vst.msk [vmem:[%s301 + $0x38] sm:$0xff] %vm912, %v2467
        %2484 = vst.msk [vmem:[%s301 + $0x40] sm:$0xff] %vm912, %v2468
        %2485 = vst.msk [vmem:[%s301 + $0x48] sm:$0xff] %vm912, %v2469
        %2486 = vst.msk [vmem:[%s301 + $0x50] sm:$0xff] %vm912, %v2470
        %2487 = vst.msk [vmem:[%s301 + $0x58] sm:$0xff] %vm912, %v2471
        %2488 = vst.msk [vmem:[%s301 + $0x60] sm:$0xff] %vm912, %v2472
        %2489 = vst.msk [vmem:[%s301 + $0x68] sm:$0xff] %vm912, %v2473
        %2490 = vst.msk [vmem:[%s301 + $0x70] sm:$0xff] %vm912, %v2474
        %2491 = vst.msk [vmem:[%s301 + $0x78] sm:$0xff] %vm912, %v2475
        %s2492 = sand.u32 %s203, 1
        %s2493 = scalar_lea.sflag [#allocation3], %s2492
        %s2494 = sand.u32 %s203, 1
        %s2495 = smul.addr %s2494, 128
        %s2496 = scalar_lea.vmem [#allocation2], %s2495
        // Predicated region
        $region53: #{_lambda_.3} parent=51 // pred_check
          %p2497 = pneg %p213
        $region54: #{_lambda_.3} parent=51 // pred_check_branch
          %2499 = sbr.rel (%p2497) target = $region56
        $region55: #{_lambda_.3} parent=51 // pred_region
          %s2500 = smul.u32 2, %s22
          %s2502 = ssub.s32 2048, 2048
          %2503 = vsyncadd %s2493, %s2502
          %s2504 = smul.addr %s2500, 8
          %s2505 = smul.addr %s2504, 128
          %s2506 = scalar_lea.hbm %s8, %s2505
          %s2507 = sshll.u32 %s2496, 4
          %s2508 = int_to_ptr.vmem [resolvable:$true] %s2507
          %2513 = dma.vmem_to_hbm [thread:$0]  %s2508, 2048, %s2506, %s2493, 128, 128, 8
        $region56: #{_lambda_.3} parent=51 // pred_fallthru
          _
      $region52: #{_lambda_.3} parent=5 // pred_fallthru
        _
      %p2514 = scmp.le.s32.totalorder 2, %s17
      // Predicated region
      $region57: #{_lambda_.3} parent=5 // pred_check
        %p2515 = pneg %p2514
      $region58: #{_lambda_.3} parent=5 // pred_check_branch
        %2517 = sbr.rel (%p2515) target = $region60
      $region59: #{_lambda_.3} parent=5 // pred_region
        %s2518 = ssub.s32 %s17, 2
        // Predicated region
        $region61: #{_lambda_.3} parent=59 // pred_check
          %p2519 = pneg %p219
        $region62: #{_lambda_.3} parent=59 // pred_check_branch
          %2521 = sbr.rel (%p2519) target = $region64
        $region63: #{_lambda_.3} parent=59 // pred_region
          %s2522 = sand.u32 %s204, 1
          %s2523 = scalar_lea.sflag [#allocation3], %s2522
          %s2524 = sand.u32 %s204, 1
          %s2525 = smul.addr %s2524, 128
          %s2526 = scalar_lea.vmem [#allocation2], %s2525
          %2527 = dma.done %s2523, 2048
        $region64: #{_lambda_.3} parent=59 // pred_fallthru
          _
      $region60: #{_lambda_.3} parent=5 // pred_fallthru
        _
    $region6: #{_lambda_.3} parent=1 // loop_footer
      %s21 = sadd.s32 1, %s17
    $region7: #{_lambda_.3} parent=1 // loop_footer_branch
      %16 = sbr.rel target = $region3
    $region8: #{_lambda_.3} parent=1 // loop_exit
      _
    %2528 = vsyncpa [#allocation3], 1
    %s2529 = scalar_lea.sflag [#allocation3], 1
    %2530 = vsyncpa %s2529, 1

// kernel: _lambda_.2
$region0: #{_lambda_.2}
  #allocation0 [shape = 'u32[]', space=smem, size = 0x4, offset = 0x4, fixed_abs, tag = 'smem constant byte address 0x4 - core index']
  #allocation1 [shape = 'u32[144,128]{1,0:T(1,128)}', space=vmem, size = 0x12000, scoped, tag = 'internal scratch']
  %s0 = inlined_call_operand.vmem [shape: f32[4,9,9,16], index: 0, kind: input, shape index: {}]
  %s1 = inlined_call_operand.vmem [shape: f32[4,9,9,16], index: 1, kind: input, shape index: {}]
  %s2 = inlined_call_operand.vmem [shape: f32[4,9,9,16], index: 2, kind: input, shape index: {}]
  %s3 = inlined_call_operand.vmem [shape: f32[4,9,9,16], index: 3, kind: input, shape index: {}]
  %s4 = inlined_call_operand.vmem [shape: f32[9,9,16], index: 4, kind: input, shape index: {}]
  %s5 = inlined_call_operand.vmem [shape: f32[9,9,16], index: 5, kind: input, shape index: {}]
  %s6 = inlined_call_operand.vmem [shape: f32[9,9,16], index: 6, kind: input, shape index: {}]
  %s7 = inlined_call_operand.vmem [shape: f32[9,9,16], index: 7, kind: input, shape index: {}]
  %s8 = inlined_call_operand.vmem [shape: f32[9,9,16], index: 8, kind: input, shape index: {}]
  %s9 = inlined_call_operand.vmem [shape: f32[9,9,16], index: 9, kind: input, shape index: {}]
  %s10 = inlined_call_operand.vmem [shape: f32[9,9,16], index: 10, kind: input, shape index: {}]
  %s11 = inlined_call_operand.vmem [shape: f32[9,9,16], index: 11, kind: input, shape index: {}]
  %s12 = inlined_call_operand.vmem [shape: f32[1,32], index: 12, kind: input, shape index: {}]
  %s13 = inlined_call_operand.vmem [shape: f32[1,32], index: 13, kind: input, shape index: {}]
  %s14 = inlined_call_operand.vmem [shape: f32[1,32], index: 14, kind: input, shape index: {}]
  %s15 = inlined_call_operand.vmem [shape: bf16[144,64], index: 15, kind: input, shape index: {}]
  %s16 = inlined_call_operand.vmem [shape: bf16[288,32], index: 16, kind: input, shape index: {}]
  %s17 = inlined_call_operand.vmem [shape: f32[4,8,8,32], index: 17, kind: output, shape index: {}]
  %s18 = sld [smem:[#allocation0]]
  $region101: #{_lambda_.2} parent=0
    _
  %s20 = ssub.s32 1, %s18
  %s21 = scalar_select 0, %s20, %s18
  loop: start=0, step=1, limit=4
  $region2: #{_lambda_.2} parent=0 // loop_pre_header
    _
  $region3: #{_lambda_.2} parent=0 // loop_header
    %s23 = sphi 0, %s27
    %p24 = scmp.ge.s32.totalorder %s23, 4
    %s33 = sphi 0, %s35
    %s36 = sphi 0, %s33
    %s37 = sphi 0, %s36
    %s53 = sphi 0, %s37
    %s59 = sphi 0, %s61
    %s62 = sphi 0, %s59
    %s63 = sphi 0, %s62
    %s79 = sphi 0, %s63
    %s85 = sphi 0, %s87
    %s88 = sphi 0, %s85
    %s89 = sphi 0, %s88
    %s105 = sphi 0, %s89
    %s111 = sphi 0, %s113
    %s114 = sphi 0, %s111
    %s115 = sphi 0, %s114
    %s131 = sphi 0, %s115
    %s135 = sphi 0, %s135
    %s137 = sphi 0, %s135
    %s138 = sphi 0, %s137
    %s152 = sphi 0, %s138
    %s156 = sphi 0, %s156
    %s158 = sphi 0, %s156
    %s159 = sphi 0, %s158
    %s173 = sphi 0, %s159
    %s177 = sphi 0, %s177
    %s179 = sphi 0, %s177
    %s180 = sphi 0, %s179
    %s194 = sphi 0, %s180
    %s198 = sphi 0, %s198
    %s200 = sphi 0, %s198
    %s201 = sphi 0, %s200
    %s215 = sphi 0, %s201
    %s219 = sphi 0, %s219
    %s221 = sphi 0, %s219
    %s222 = sphi 0, %s221
    %s236 = sphi 0, %s222
    %s240 = sphi 0, %s240
    %s242 = sphi 0, %s240
    %s243 = sphi 0, %s242
    %s257 = sphi 0, %s243
    %s261 = sphi 0, %s261
    %s263 = sphi 0, %s261
    %s264 = sphi 0, %s263
    %s278 = sphi 0, %s264
    %s282 = sphi 0, %s282
    %s284 = sphi 0, %s282
    %s285 = sphi 0, %s284
    %s299 = sphi 0, %s285
    %s303 = sphi 0, %s303
    %s305 = sphi 0, %s303
    %s306 = sphi 0, %s305
    %s320 = sphi 0, %s306
    %s324 = sphi 0, %s324
    %s326 = sphi 0, %s324
    %s327 = sphi 0, %s326
    %s341 = sphi 0, %s327
    %s345 = sphi 0, %s345
    %s347 = sphi 0, %s345
    %s348 = sphi 0, %s347
    %s362 = sphi 0, %s348
    %s366 = sphi 0, %s366
    %s368 = sphi 0, %s366
    %s369 = sphi 0, %s368
    %s383 = sphi 0, %s369
    %s387 = sphi 0, %s387
    %s389 = sphi 0, %s387
    %s390 = sphi 0, %s389
    %s404 = sphi 0, %s390
    %s410 = sphi 0, %s412
    %s413 = sphi 0, %s410
    %s414 = sphi 0, %s413
    %s430 = sphi 0, %s414
  $region4: #{_lambda_.2} parent=0 // loop_header_branch
    %26 = sbr.rel (%p24) target = $region8
  $region5: #{_lambda_.2} parent=0 // loop_body
    %s28 = ssub.s32 %s23, 1
    %s29 = ssub.s32 %s23, 2
    %s30 = sadd.s32 %s23, 1
    %s31 = ssub.s32 %s23, %s30
    %p32 = scmp.eq.s32.totalorder %s31, 0
    %s34 = sadd.s32 %s33, 1
    %s35 = scalar_select %p32, %s33, %s34
    %p38 = pneg %p32
    %p39 = scmp.eq.s32.totalorder %s23, 1
    %p40 = por %p38, %p39
    %p41 = scmp.ne.s32.totalorder %s33, %s36
    %p42 = scmp.eq.s32.totalorder %s23, 0
    %p43 = por %p41, %p42
    %p44 = scmp.ne.s32.totalorder %s33, %s36
    %p45 = scmp.eq.s32.totalorder %s28, 1
    %p46 = por %p44, %p45
    %p47 = scmp.ne.s32.totalorder %s36, %s37
    %p48 = scmp.eq.s32.totalorder %s28, 0
    %p49 = por %p47, %p48
    %p50 = scmp.ne.s32.totalorder %s36, %s37
    %p51 = scmp.eq.s32.totalorder %s29, 1
    %p52 = por %p50, %p51
    %p54 = scmp.ne.s32.totalorder %s37, %s53
    %p55 = scmp.eq.s32.totalorder %s29, 0
    %p56 = por %p54, %p55
    %s57 = ssub.s32 %s23, %s30
    %p58 = scmp.eq.s32.totalorder %s57, 0
    %s60 = sadd.s32 %s59, 1
    %s61 = scalar_select %p58, %s59, %s60
    %p64 = pneg %p58
    %p65 = scmp.eq.s32.totalorder %s23, 1
    %p66 = por %p64, %p65
    %p67 = scmp.ne.s32.totalorder %s59, %s62
    %p68 = scmp.eq.s32.totalorder %s23, 0
    %p69 = por %p67, %p68
    %p70 = scmp.ne.s32.totalorder %s59, %s62
    %p71 = scmp.eq.s32.totalorder %s28, 1
    %p72 = por %p70, %p71
    %p73 = scmp.ne.s32.totalorder %s62, %s63
    %p74 = scmp.eq.s32.totalorder %s28, 0
    %p75 = por %p73, %p74
    %p76 = scmp.ne.s32.totalorder %s62, %s63
    %p77 = scmp.eq.s32.totalorder %s29, 1
    %p78 = por %p76, %p77
    %p80 = scmp.ne.s32.totalorder %s63, %s79
    %p81 = scmp.eq.s32.totalorder %s29, 0
    %p82 = por %p80, %p81
    %s83 = ssub.s32 %s23, %s30
    %p84 = scmp.eq.s32.totalorder %s83, 0
    %s86 = sadd.s32 %s85, 1
    %s87 = scalar_select %p84, %s85, %s86
    %p90 = pneg %p84
    %p91 = scmp.eq.s32.totalorder %s23, 1
    %p92 = por %p90, %p91
    %p93 = scmp.ne.s32.totalorder %s85, %s88
    %p94 = scmp.eq.s32.totalorder %s23, 0
    %p95 = por %p93, %p94
    %p96 = scmp.ne.s32.totalorder %s85, %s88
    %p97 = scmp.eq.s32.totalorder %s28, 1
    %p98 = por %p96, %p97
    %p99 = scmp.ne.s32.totalorder %s88, %s89
    %p100 = scmp.eq.s32.totalorder %s28, 0
    %p101 = por %p99, %p100
    %p102 = scmp.ne.s32.totalorder %s88, %s89
    %p103 = scmp.eq.s32.totalorder %s29, 1
    %p104 = por %p102, %p103
    %p106 = scmp.ne.s32.totalorder %s89, %s105
    %p107 = scmp.eq.s32.totalorder %s29, 0
    %p108 = por %p106, %p107
    %s109 = ssub.s32 %s23, %s30
    %p110 = scmp.eq.s32.totalorder %s109, 0
    %s112 = sadd.s32 %s111, 1
    %s113 = scalar_select %p110, %s111, %s112
    %p116 = pneg %p110
    %p117 = scmp.eq.s32.totalorder %s23, 1
    %p118 = por %p116, %p117
    %p119 = scmp.ne.s32.totalorder %s111, %s114
    %p120 = scmp.eq.s32.totalorder %s23, 0
    %p121 = por %p119, %p120
    %p122 = scmp.ne.s32.totalorder %s111, %s114
    %p123 = scmp.eq.s32.totalorder %s28, 1
    %p124 = por %p122, %p123
    %p125 = scmp.ne.s32.totalorder %s114, %s115
    %p126 = scmp.eq.s32.totalorder %s28, 0
    %p127 = por %p125, %p126
    %p128 = scmp.ne.s32.totalorder %s114, %s115
    %p129 = scmp.eq.s32.totalorder %s29, 1
    %p130 = por %p128, %p129
    %p132 = scmp.ne.s32.totalorder %s115, %s131
    %p133 = scmp.eq.s32.totalorder %s29, 0
    %p134 = por %p132, %p133
    %s136 = sadd.s32 %s135, 1
    %p139 = scmp.eq.s32.totalorder %s23, 1
    %p140 = scmp.ne.s32.totalorder %s135, %s137
    %p141 = scmp.eq.s32.totalorder %s23, 0
    %p142 = por %p140, %p141
    %p143 = scmp.ne.s32.totalorder %s135, %s137
    %p144 = scmp.eq.s32.totalorder %s28, 1
    %p145 = por %p143, %p144
    %p146 = scmp.ne.s32.totalorder %s137, %s138
    %p147 = scmp.eq.s32.totalorder %s28, 0
    %p148 = por %p146, %p147
    %p149 = scmp.ne.s32.totalorder %s137, %s138
    %p150 = scmp.eq.s32.totalorder %s29, 1
    %p151 = por %p149, %p150
    %p153 = scmp.ne.s32.totalorder %s138, %s152
    %p154 = scmp.eq.s32.totalorder %s29, 0
    %p155 = por %p153, %p154
    %s157 = sadd.s32 %s156, 1
    %p160 = scmp.eq.s32.totalorder %s23, 1
    %p161 = scmp.ne.s32.totalorder %s156, %s158
    %p162 = scmp.eq.s32.totalorder %s23, 0
    %p163 = por %p161, %p162
    %p164 = scmp.ne.s32.totalorder %s156, %s158
    %p165 = scmp.eq.s32.totalorder %s28, 1
    %p166 = por %p164, %p165
    %p167 = scmp.ne.s32.totalorder %s158, %s159
    %p168 = scmp.eq.s32.totalorder %s28, 0
    %p169 = por %p167, %p168
    %p170 = scmp.ne.s32.totalorder %s158, %s159
    %p171 = scmp.eq.s32.totalorder %s29, 1
    %p172 = por %p170, %p171
    %p174 = scmp.ne.s32.totalorder %s159, %s173
    %p175 = scmp.eq.s32.totalorder %s29, 0
    %p176 = por %p174, %p175
    %s178 = sadd.s32 %s177, 1
    %p181 = scmp.eq.s32.totalorder %s23, 1
    %p182 = scmp.ne.s32.totalorder %s177, %s179
    %p183 = scmp.eq.s32.totalorder %s23, 0
    %p184 = por %p182, %p183
    %p185 = scmp.ne.s32.totalorder %s177, %s179
    %p186 = scmp.eq.s32.totalorder %s28, 1
    %p187 = por %p185, %p186
    %p188 = scmp.ne.s32.totalorder %s179, %s180
    %p189 = scmp.eq.s32.totalorder %s28, 0
    %p190 = por %p188, %p189
    %p191 = scmp.ne.s32.totalorder %s179, %s180
    %p192 = scmp.eq.s32.totalorder %s29, 1
    %p193 = por %p191, %p192
    %p195 = scmp.ne.s32.totalorder %s180, %s194
    %p196 = scmp.eq.s32.totalorder %s29, 0
    %p197 = por %p195, %p196
    %s199 = sadd.s32 %s198, 1
    %p202 = scmp.eq.s32.totalorder %s23, 1
    %p203 = scmp.ne.s32.totalorder %s198, %s200
    %p204 = scmp.eq.s32.totalorder %s23, 0
    %p205 = por %p203, %p204
    %p206 = scmp.ne.s32.totalorder %s198, %s200
    %p207 = scmp.eq.s32.totalorder %s28, 1
    %p208 = por %p206, %p207
    %p209 = scmp.ne.s32.totalorder %s200, %s201
    %p210 = scmp.eq.s32.totalorder %s28, 0
    %p211 = por %p209, %p210
    %p212 = scmp.ne.s32.totalorder %s200, %s201
    %p213 = scmp.eq.s32.totalorder %s29, 1
    %p214 = por %p212, %p213
    %p216 = scmp.ne.s32.totalorder %s201, %s215
    %p217 = scmp.eq.s32.totalorder %s29, 0
    %p218 = por %p216, %p217
    %s220 = sadd.s32 %s219, 1
    %p223 = scmp.eq.s32.totalorder %s23, 1
    %p224 = scmp.ne.s32.totalorder %s219, %s221
    %p225 = scmp.eq.s32.totalorder %s23, 0
    %p226 = por %p224, %p225
    %p227 = scmp.ne.s32.totalorder %s219, %s221
    %p228 = scmp.eq.s32.totalorder %s28, 1
    %p229 = por %p227, %p228
    %p230 = scmp.ne.s32.totalorder %s221, %s222
    %p231 = scmp.eq.s32.totalorder %s28, 0
    %p232 = por %p230, %p231
    %p233 = scmp.ne.s32.totalorder %s221, %s222
    %p234 = scmp.eq.s32.totalorder %s29, 1
    %p235 = por %p233, %p234
    %p237 = scmp.ne.s32.totalorder %s222, %s236
    %p238 = scmp.eq.s32.totalorder %s29, 0
    %p239 = por %p237, %p238
    %s241 = sadd.s32 %s240, 1
    %p244 = scmp.eq.s32.totalorder %s23, 1
    %p245 = scmp.ne.s32.totalorder %s240, %s242
    %p246 = scmp.eq.s32.totalorder %s23, 0
    %p247 = por %p245, %p246
    %p248 = scmp.ne.s32.totalorder %s240, %s242
    %p249 = scmp.eq.s32.totalorder %s28, 1
    %p250 = por %p248, %p249
    %p251 = scmp.ne.s32.totalorder %s242, %s243
    %p252 = scmp.eq.s32.totalorder %s28, 0
    %p253 = por %p251, %p252
    %p254 = scmp.ne.s32.totalorder %s242, %s243
    %p255 = scmp.eq.s32.totalorder %s29, 1
    %p256 = por %p254, %p255
    %p258 = scmp.ne.s32.totalorder %s243, %s257
    %p259 = scmp.eq.s32.totalorder %s29, 0
    %p260 = por %p258, %p259
    %s262 = sadd.s32 %s261, 1
    %p265 = scmp.eq.s32.totalorder %s23, 1
    %p266 = scmp.ne.s32.totalorder %s261, %s263
    %p267 = scmp.eq.s32.totalorder %s23, 0
    %p268 = por %p266, %p267
    %p269 = scmp.ne.s32.totalorder %s261, %s263
    %p270 = scmp.eq.s32.totalorder %s28, 1
    %p271 = por %p269, %p270
    %p272 = scmp.ne.s32.totalorder %s263, %s264
    %p273 = scmp.eq.s32.totalorder %s28, 0
    %p274 = por %p272, %p273
    %p275 = scmp.ne.s32.totalorder %s263, %s264
    %p276 = scmp.eq.s32.totalorder %s29, 1
    %p277 = por %p275, %p276
    %p279 = scmp.ne.s32.totalorder %s264, %s278
    %p280 = scmp.eq.s32.totalorder %s29, 0
    %p281 = por %p279, %p280
    %s283 = sadd.s32 %s282, 1
    %p286 = scmp.eq.s32.totalorder %s23, 1
    %p287 = scmp.ne.s32.totalorder %s282, %s284
    %p288 = scmp.eq.s32.totalorder %s23, 0
    %p289 = por %p287, %p288
    %p290 = scmp.ne.s32.totalorder %s282, %s284
    %p291 = scmp.eq.s32.totalorder %s28, 1
    %p292 = por %p290, %p291
    %p293 = scmp.ne.s32.totalorder %s284, %s285
    %p294 = scmp.eq.s32.totalorder %s28, 0
    %p295 = por %p293, %p294
    %p296 = scmp.ne.s32.totalorder %s284, %s285
    %p297 = scmp.eq.s32.totalorder %s29, 1
    %p298 = por %p296, %p297
    %p300 = scmp.ne.s32.totalorder %s285, %s299
    %p301 = scmp.eq.s32.totalorder %s29, 0
    %p302 = por %p300, %p301
    %s304 = sadd.s32 %s303, 1
    %p307 = scmp.eq.s32.totalorder %s23, 1
    %p308 = scmp.ne.s32.totalorder %s303, %s305
    %p309 = scmp.eq.s32.totalorder %s23, 0
    %p310 = por %p308, %p309
    %p311 = scmp.ne.s32.totalorder %s303, %s305
    %p312 = scmp.eq.s32.totalorder %s28, 1
    %p313 = por %p311, %p312
    %p314 = scmp.ne.s32.totalorder %s305, %s306
    %p315 = scmp.eq.s32.totalorder %s28, 0
    %p316 = por %p314, %p315
    %p317 = scmp.ne.s32.totalorder %s305, %s306
    %p318 = scmp.eq.s32.totalorder %s29, 1
    %p319 = por %p317, %p318
    %p321 = scmp.ne.s32.totalorder %s306, %s320
    %p322 = scmp.eq.s32.totalorder %s29, 0
    %p323 = por %p321, %p322
    %s325 = sadd.s32 %s324, 1
    %p328 = scmp.eq.s32.totalorder %s23, 1
    %p329 = scmp.ne.s32.totalorder %s324, %s326
    %p330 = scmp.eq.s32.totalorder %s23, 0
    %p331 = por %p329, %p330
    %p332 = scmp.ne.s32.totalorder %s324, %s326
    %p333 = scmp.eq.s32.totalorder %s28, 1
    %p334 = por %p332, %p333
    %p335 = scmp.ne.s32.totalorder %s326, %s327
    %p336 = scmp.eq.s32.totalorder %s28, 0
    %p337 = por %p335, %p336
    %p338 = scmp.ne.s32.totalorder %s326, %s327
    %p339 = scmp.eq.s32.totalorder %s29, 1
    %p340 = por %p338, %p339
    %p342 = scmp.ne.s32.totalorder %s327, %s341
    %p343 = scmp.eq.s32.totalorder %s29, 0
    %p344 = por %p342, %p343
    %s346 = sadd.s32 %s345, 1
    %p349 = scmp.eq.s32.totalorder %s23, 1
    %p350 = scmp.ne.s32.totalorder %s345, %s347
    %p351 = scmp.eq.s32.totalorder %s23, 0
    %p352 = por %p350, %p351
    %p353 = scmp.ne.s32.totalorder %s345, %s347
    %p354 = scmp.eq.s32.totalorder %s28, 1
    %p355 = por %p353, %p354
    %p356 = scmp.ne.s32.totalorder %s347, %s348
    %p357 = scmp.eq.s32.totalorder %s28, 0
    %p358 = por %p356, %p357
    %p359 = scmp.ne.s32.totalorder %s347, %s348
    %p360 = scmp.eq.s32.totalorder %s29, 1
    %p361 = por %p359, %p360
    %p363 = scmp.ne.s32.totalorder %s348, %s362
    %p364 = scmp.eq.s32.totalorder %s29, 0
    %p365 = por %p363, %p364
    %s367 = sadd.s32 %s366, 1
    %p370 = scmp.eq.s32.totalorder %s23, 1
    %p371 = scmp.ne.s32.totalorder %s366, %s368
    %p372 = scmp.eq.s32.totalorder %s23, 0
    %p373 = por %p371, %p372
    %p374 = scmp.ne.s32.totalorder %s366, %s368
    %p375 = scmp.eq.s32.totalorder %s28, 1
    %p376 = por %p374, %p375
    %p377 = scmp.ne.s32.totalorder %s368, %s369
    %p378 = scmp.eq.s32.totalorder %s28, 0
    %p379 = por %p377, %p378
    %p380 = scmp.ne.s32.totalorder %s368, %s369
    %p381 = scmp.eq.s32.totalorder %s29, 1
    %p382 = por %p380, %p381
    %p384 = scmp.ne.s32.totalorder %s369, %s383
    %p385 = scmp.eq.s32.totalorder %s29, 0
    %p386 = por %p384, %p385
    %s388 = sadd.s32 %s387, 1
    %p391 = scmp.eq.s32.totalorder %s23, 1
    %p392 = scmp.ne.s32.totalorder %s387, %s389
    %p393 = scmp.eq.s32.totalorder %s23, 0
    %p394 = por %p392, %p393
    %p395 = scmp.ne.s32.totalorder %s387, %s389
    %p396 = scmp.eq.s32.totalorder %s28, 1
    %p397 = por %p395, %p396
    %p398 = scmp.ne.s32.totalorder %s389, %s390
    %p399 = scmp.eq.s32.totalorder %s28, 0
    %p400 = por %p398, %p399
    %p401 = scmp.ne.s32.totalorder %s389, %s390
    %p402 = scmp.eq.s32.totalorder %s29, 1
    %p403 = por %p401, %p402
    %p405 = scmp.ne.s32.totalorder %s390, %s404
    %p406 = scmp.eq.s32.totalorder %s29, 0
    %p407 = por %p405, %p406
    %s408 = ssub.s32 %s23, %s30
    %p409 = scmp.eq.s32.totalorder %s408, 0
    %s411 = sadd.s32 %s410, 1
    %s412 = scalar_select %p409, %s410, %s411
    %p415 = pneg %p409
    %p416 = scmp.eq.s32.totalorder %s23, 1
    %p417 = por %p415, %p416
    %p418 = scmp.ne.s32.totalorder %s410, %s413
    %p419 = scmp.eq.s32.totalorder %s23, 0
    %p420 = por %p418, %p419
    %p421 = scmp.ne.s32.totalorder %s410, %s413
    %p422 = scmp.eq.s32.totalorder %s28, 1
    %p423 = por %p421, %p422
    %p424 = scmp.ne.s32.totalorder %s413, %s414
    %p425 = scmp.eq.s32.totalorder %s28, 0
    %p426 = por %p424, %p425
    %p427 = scmp.ne.s32.totalorder %s413, %s414
    %p428 = scmp.eq.s32.totalorder %s29, 1
    %p429 = por %p427, %p428
    %p431 = scmp.ne.s32.totalorder %s414, %s430
    %p432 = scmp.eq.s32.totalorder %s29, 0
    %p433 = por %p431, %p432
    %p434 = scmp.le.s32.totalorder 1, %s23
    %p435 = scmp.lt.s32.totalorder %s23, 3
    %p436 = pnand %p434, %p435
    %p437 = pneg %p436
    // Predicated region
    $region9: #{_lambda_.2} parent=5 // pred_check
      _
    $region10: #{_lambda_.2} parent=5 // pred_check_branch
      %439 = sbr.rel (%p436) target = $region12
    $region11: #{_lambda_.2} parent=5 // pred_region
      %s440 = ssub.s32 %s23, 1
      // Predicated region
      $region13: #{_lambda_.2} parent=11 // pred_check
        %p441 = pneg %p148
      $region14: #{_lambda_.2} parent=11 // pred_check_branch
        %443 = sbr.rel (%p441) target = $region16
      $region15: #{_lambda_.2} parent=11 // pred_region
        _
      $region16: #{_lambda_.2} parent=11 // pred_fallthru
        _
      // Predicated region
      $region17: #{_lambda_.2} parent=11 // pred_check
        %p444 = pneg %p169
      $region18: #{_lambda_.2} parent=11 // pred_check_branch
        %446 = sbr.rel (%p444) target = $region20
      $region19: #{_lambda_.2} parent=11 // pred_region
        _
      $region20: #{_lambda_.2} parent=11 // pred_fallthru
        _
      // Predicated region
      $region21: #{_lambda_.2} parent=11 // pred_check
        %p447 = pneg %p190
      $region22: #{_lambda_.2} parent=11 // pred_check_branch
        %449 = sbr.rel (%p447) target = $region24
      $region23: #{_lambda_.2} parent=11 // pred_region
        _
      $region24: #{_lambda_.2} parent=11 // pred_fallthru
        _
      // Predicated region
      $region25: #{_lambda_.2} parent=11 // pred_check
        %p450 = pneg %p211
      $region26: #{_lambda_.2} parent=11 // pred_check_branch
        %452 = sbr.rel (%p450) target = $region28
      $region27: #{_lambda_.2} parent=11 // pred_region
        _
      $region28: #{_lambda_.2} parent=11 // pred_fallthru
        _
      // Predicated region
      $region29: #{_lambda_.2} parent=11 // pred_check
        %p453 = pneg %p232
      $region30: #{_lambda_.2} parent=11 // pred_check_branch
        %455 = sbr.rel (%p453) target = $region32
      $region31: #{_lambda_.2} parent=11 // pred_region
        _
      $region32: #{_lambda_.2} parent=11 // pred_fallthru
        _
      // Predicated region
      $region33: #{_lambda_.2} parent=11 // pred_check
        %p456 = pneg %p253
      $region34: #{_lambda_.2} parent=11 // pred_check_branch
        %458 = sbr.rel (%p456) target = $region36
      $region35: #{_lambda_.2} parent=11 // pred_region
        _
      $region36: #{_lambda_.2} parent=11 // pred_fallthru
        _
      // Predicated region
      $region37: #{_lambda_.2} parent=11 // pred_check
        %p459 = pneg %p274
      $region38: #{_lambda_.2} parent=11 // pred_check_branch
        %461 = sbr.rel (%p459) target = $region40
      $region39: #{_lambda_.2} parent=11 // pred_region
        _
      $region40: #{_lambda_.2} parent=11 // pred_fallthru
        _
      // Predicated region
      $region41: #{_lambda_.2} parent=11 // pred_check
        %p462 = pneg %p295
      $region42: #{_lambda_.2} parent=11 // pred_check_branch
        %464 = sbr.rel (%p462) target = $region44
      $region43: #{_lambda_.2} parent=11 // pred_region
        _
      $region44: #{_lambda_.2} parent=11 // pred_fallthru
        _
      // Predicated region
      $region45: #{_lambda_.2} parent=11 // pred_check
        %p465 = pneg %p316
      $region46: #{_lambda_.2} parent=11 // pred_check_branch
        %467 = sbr.rel (%p465) target = $region48
      $region47: #{_lambda_.2} parent=11 // pred_region
        _
      $region48: #{_lambda_.2} parent=11 // pred_fallthru
        _
      // Predicated region
      $region49: #{_lambda_.2} parent=11 // pred_check
        %p468 = pneg %p337
      $region50: #{_lambda_.2} parent=11 // pred_check_branch
        %470 = sbr.rel (%p468) target = $region52
      $region51: #{_lambda_.2} parent=11 // pred_region
        _
      $region52: #{_lambda_.2} parent=11 // pred_fallthru
        _
      // Predicated region
      $region53: #{_lambda_.2} parent=11 // pred_check
        %p471 = pneg %p358
      $region54: #{_lambda_.2} parent=11 // pred_check_branch
        %473 = sbr.rel (%p471) target = $region56
      $region55: #{_lambda_.2} parent=11 // pred_region
        _
      $region56: #{_lambda_.2} parent=11 // pred_fallthru
        _
      // Predicated region
      $region57: #{_lambda_.2} parent=11 // pred_check
        %p474 = pneg %p379
      $region58: #{_lambda_.2} parent=11 // pred_check_branch
        %476 = sbr.rel (%p474) target = $region60
      $region59: #{_lambda_.2} parent=11 // pred_region
        _
      $region60: #{_lambda_.2} parent=11 // pred_fallthru
        _
      // Predicated region
      $region61: #{_lambda_.2} parent=11 // pred_check
        %p477 = pneg %p400
      $region62: #{_lambda_.2} parent=11 // pred_check_branch
        %479 = sbr.rel (%p477) target = $region64
      $region63: #{_lambda_.2} parent=11 // pred_region
        _
      $region64: #{_lambda_.2} parent=11 // pred_fallthru
        _
    $region12: #{_lambda_.2} parent=5 // pred_fallthru
      _
    %p480 = scmp.lt.s32.totalorder %s23, 2
    // Predicated region
    $region65: #{_lambda_.2} parent=5 // pred_check
      %p481 = pneg %p480
    $region66: #{_lambda_.2} parent=5 // pred_check_branch
      %483 = sbr.rel (%p481) target = $region68
    $region67: #{_lambda_.2} parent=5 // pred_region
      // Predicated region
      $region69: #{_lambda_.2} parent=67 // pred_check
        %p484 = pneg %p43
      $region70: #{_lambda_.2} parent=67 // pred_check_branch
        %486 = sbr.rel (%p484) target = $region72
      $region71: #{_lambda_.2} parent=67 // pred_region
        %s487 = smul.u32 2, %s23
        %p488 = scmp.lt.s32.totalorder %s487, 3
        %s489 = scalar_select %p488, %s487, 3
        %s490 = smul.addr %s489, 18
        %s491 = smul.addr %s490, 8
        %s492 = scalar_lea.vmem %s0, %s491
        %s493 = smul.u32 2, %s23
      $region72: #{_lambda_.2} parent=67 // pred_fallthru
        _
      // Predicated region
      $region73: #{_lambda_.2} parent=67 // pred_check
        %p494 = pneg %p69
      $region74: #{_lambda_.2} parent=67 // pred_check_branch
        %496 = sbr.rel (%p494) target = $region76
      $region75: #{_lambda_.2} parent=67 // pred_region
        %s497 = smul.u32 2, %s23
        %p498 = scmp.lt.s32.totalorder %s497, 3
        %s499 = scalar_select %p498, %s497, 3
        %s500 = smul.addr %s499, 18
        %s501 = smul.addr %s500, 8
        %s502 = scalar_lea.vmem %s1, %s501
        %s503 = smul.u32 2, %s23
      $region76: #{_lambda_.2} parent=67 // pred_fallthru
        _
      // Predicated region
      $region77: #{_lambda_.2} parent=67 // pred_check
        %p504 = pneg %p95
      $region78: #{_lambda_.2} parent=67 // pred_check_branch
        %506 = sbr.rel (%p504) target = $region80
      $region79: #{_lambda_.2} parent=67 // pred_region
        %s507 = smul.u32 2, %s23
        %p508 = scmp.lt.s32.totalorder %s507, 3
        %s509 = scalar_select %p508, %s507, 3
        %s510 = smul.addr %s509, 18
        %s511 = smul.addr %s510, 8
        %s512 = scalar_lea.vmem %s2, %s511
        %s513 = smul.u32 2, %s23
      $region80: #{_lambda_.2} parent=67 // pred_fallthru
        _
      // Predicated region
      $region81: #{_lambda_.2} parent=67 // pred_check
        %p514 = pneg %p121
      $region82: #{_lambda_.2} parent=67 // pred_check_branch
        %516 = sbr.rel (%p514) target = $region84
      $region83: #{_lambda_.2} parent=67 // pred_region
        %s517 = smul.u32 2, %s23
        %p518 = scmp.lt.s32.totalorder %s517, 3
        %s519 = scalar_select %p518, %s517, 3
        %s520 = smul.addr %s519, 18
        %s521 = smul.addr %s520, 8
        %s522 = scalar_lea.vmem %s3, %s521
        %s523 = smul.u32 2, %s23
      $region84: #{_lambda_.2} parent=67 // pred_fallthru
        _
    $region68: #{_lambda_.2} parent=5 // pred_fallthru
      _
    %p524 = scmp.le.s32.totalorder 1, %s23
    %p525 = scmp.lt.s32.totalorder %s23, 3
    %p526 = pnand %p524, %p525
    %p527 = pneg %p526
    // Predicated region
    $region85: #{_lambda_.2} parent=5 // pred_check
      _
    $region86: #{_lambda_.2} parent=5 // pred_check_branch
      %529 = sbr.rel (%p526) target = $region88
    $region87: #{_lambda_.2} parent=5 // pred_region
      %s530 = ssub.s32 %s23, 1
      %s531 = smul.u32 2, %s28
      %p532 = scmp.lt.s32.totalorder %s531, 3
      %s533 = scalar_select %p532, %s531, 3
      %s534 = smul.addr %s533, 18
      %s535 = smul.addr %s534, 8
      %s536 = scalar_lea.vmem %s0, %s535
      %p537 = pneg %p49
      %p538 = pneg %p46
      %s539 = smul.u32 2, %s28
      %p540 = scmp.lt.s32.totalorder %s539, 3
      %s541 = scalar_select %p540, %s539, 3
      %s542 = smul.addr %s541, 18
      %s543 = smul.addr %s542, 8
      %s544 = scalar_lea.vmem %s1, %s543
      %p545 = pneg %p75
      %p546 = pneg %p72
      %s547 = smul.u32 2, %s28
      %p548 = scmp.lt.s32.totalorder %s547, 3
      %s549 = scalar_select %p548, %s547, 3
      %s550 = smul.addr %s549, 18
      %s551 = smul.addr %s550, 8
      %s552 = scalar_lea.vmem %s2, %s551
      %p553 = pneg %p101
      %p554 = pneg %p98
      %s555 = smul.u32 2, %s28
      %p556 = scmp.lt.s32.totalorder %s555, 3
      %s557 = scalar_select %p556, %s555, 3
      %s558 = smul.addr %s557, 18
      %s559 = smul.addr %s558, 8
      %s560 = scalar_lea.vmem %s3, %s559
      %p561 = pneg %p127
      %p562 = pneg %p124
      %p563 = pneg %p148
      %p564 = pneg %p145
      %p565 = pneg %p169
      %p566 = pneg %p166
      %p567 = pneg %p190
      %p568 = pneg %p187
      %p569 = pneg %p211
      %p570 = pneg %p208
      %p571 = pneg %p232
      %p572 = pneg %p229
      %p573 = pneg %p253
      %p574 = pneg %p250
      %p575 = pneg %p274
      %p576 = pneg %p271
      %p577 = pneg %p295
      %p578 = pneg %p292
      %p579 = pneg %p316
      %p580 = pneg %p313
      %p581 = pneg %p337
      %p582 = pneg %p334
      %p583 = pneg %p358
      %p584 = pneg %p355
      %p585 = pneg %p379
      %p586 = pneg %p376
      %p587 = pneg %p400
      %p588 = pneg %p397
      %p589 = pneg %p426
      %p590 = pneg %p423
      %s591 = smul.u32 2, %s28
      %p592 = scmp.lt.s32.totalorder %s591, 3
      %s593 = scalar_select %p592, %s591, 3
      %s594 = smul.addr %s593, 8
      %s595 = smul.addr %s594, 8
      %s596 = scalar_lea.vmem %s17, %s595
      %s597 = smul.u32 2, %s28
      %p598 = scmp.lt.s32.totalorder %s597, 3
      %s599 = scalar_select %p598, %s597, 3
      %s600 = smul.addr %s599, 18
      %s601 = smul.addr %s600, 8
      %s602 = scalar_lea.vmem %s0, %s601
      %s603 = smul.u32 2, %s28
      %s604 = smul.u32 2, %s28
      %p605 = scmp.lt.s32.totalorder %s604, 3
      %s606 = scalar_select %p605, %s604, 3
      %s607 = smul.addr %s606, 18
      %s608 = smul.addr %s607, 8
      %s609 = scalar_lea.vmem %s1, %s608
      %s610 = smul.u32 2, %s28
      %s611 = smul.u32 2, %s28
      %p612 = scmp.lt.s32.totalorder %s611, 3
      %s613 = scalar_select %p612, %s611, 3
      %s614 = smul.addr %s613, 18
      %s615 = smul.addr %s614, 8
      %s616 = scalar_lea.vmem %s2, %s615
      %s617 = smul.u32 2, %s28
      %s618 = smul.u32 2, %s28
      %p619 = scmp.lt.s32.totalorder %s618, 3
      %s620 = scalar_select %p619, %s618, 3
      %s621 = smul.addr %s620, 18
      %s622 = smul.addr %s621, 8
      %s623 = scalar_lea.vmem %s3, %s622
      %s624 = smul.u32 2, %s28
      %s625 = smul.u32 2, %s28
      %p626 = scmp.lt.s32.totalorder %s625, 3
      %s627 = scalar_select %p626, %s625, 3
      %s628 = smul.addr %s627, 8
      %s629 = smul.addr %s628, 8
      %s630 = scalar_lea.vmem %s17, %s629
      %s631 = smul.u32 2, %s28
      %v633 = vld [vmem:[%s602] sm:$0xff]
      %v634 = vld [vmem:[%s602 + $0x8] sm:$0x1]
      %v635 = vld [vmem:[%s602 + $0x10] sm:$0xff]
      %v636 = vld [vmem:[%s602 + $0x18] sm:$0x1]
      %v637 = vld [vmem:[%s602 + $0x20] sm:$0xff]
      %v638 = vld [vmem:[%s602 + $0x28] sm:$0x1]
      %v639 = vld [vmem:[%s602 + $0x30] sm:$0xff]
      %v640 = vld [vmem:[%s602 + $0x38] sm:$0x1]
      %v641 = vld [vmem:[%s602 + $0x40] sm:$0xff]
      %v642 = vld [vmem:[%s602 + $0x48] sm:$0x1]
      %v643 = vld [vmem:[%s602 + $0x50] sm:$0xff]
      %v644 = vld [vmem:[%s602 + $0x58] sm:$0x1]
      %v645 = vld [vmem:[%s602 + $0x60] sm:$0xff]
      %v646 = vld [vmem:[%s602 + $0x68] sm:$0x1]
      %v647 = vld [vmem:[%s602 + $0x70] sm:$0xff]
      %v648 = vld [vmem:[%s602 + $0x78] sm:$0x1]
      %v649 = vld [vmem:[%s602 + $0x80] sm:$0xff]
      %v650 = vld [vmem:[%s602 + $0x88] sm:$0x1]
      %v651 = vld [vmem:[%s602 + $0x90] sm:$0xff]
      %v652 = vld [vmem:[%s602 + $0x98] sm:$0x1]
      %v653 = vld [vmem:[%s602 + $0xa0] sm:$0xff]
      %v654 = vld [vmem:[%s602 + $0xa8] sm:$0x1]
      %v655 = vld [vmem:[%s602 + $0xb0] sm:$0xff]
      %v656 = vld [vmem:[%s602 + $0xb8] sm:$0x1]
      %v657 = vld [vmem:[%s602 + $0xc0] sm:$0xff]
      %v658 = vld [vmem:[%s602 + $0xc8] sm:$0x1]
      %v659 = vld [vmem:[%s602 + $0xd0] sm:$0xff]
      %v660 = vld [vmem:[%s602 + $0xd8] sm:$0x1]
      %v661 = vld [vmem:[%s602 + $0xe0] sm:$0xff]
      %v662 = vld [vmem:[%s602 + $0xe8] sm:$0x1]
      %v663 = vld [vmem:[%s602 + $0xf0] sm:$0xff]
      %v664 = vld [vmem:[%s602 + $0xf8] sm:$0x1]
      %v665 = vld [vmem:[%s602 + $0x100] sm:$0xff]
      %v666 = vld [vmem:[%s602 + $0x108] sm:$0x1]
      %v667 = vld [vmem:[%s602 + $0x110] sm:$0xff]
      %v668 = vld [vmem:[%s602 + $0x118] sm:$0x1]
      %v669 = vld [vmem:[%s4] sm:$0xff]
      %v670 = vld [vmem:[%s4 + $0x8] sm:$0x1]
      %v671 = vld [vmem:[%s4 + $0x10] sm:$0xff]
      %v672 = vld [vmem:[%s4 + $0x18] sm:$0x1]
      %v673 = vld [vmem:[%s4 + $0x20] sm:$0xff]
      %v674 = vld [vmem:[%s4 + $0x28] sm:$0x1]
      %v675 = vld [vmem:[%s4 + $0x30] sm:$0xff]
      %v676 = vld [vmem:[%s4 + $0x38] sm:$0x1]
      %v677 = vld [vmem:[%s4 + $0x40] sm:$0xff]
      %v678 = vld [vmem:[%s4 + $0x48] sm:$0x1]
      %v679 = vld [vmem:[%s4 + $0x50] sm:$0xff]
      %v680 = vld [vmem:[%s4 + $0x58] sm:$0x1]
      %v681 = vld [vmem:[%s4 + $0x60] sm:$0xff]
      %v682 = vld [vmem:[%s4 + $0x68] sm:$0x1]
      %v683 = vld [vmem:[%s4 + $0x70] sm:$0xff]
      %v684 = vld [vmem:[%s4 + $0x78] sm:$0x1]
      %v685 = vld [vmem:[%s4 + $0x80] sm:$0xff]
      %v686 = vld [vmem:[%s4 + $0x88] sm:$0x1]
      %v687 = vmul.f32 %v633, %v669
      %v688 = vmul.f32 %v634, %v670
      %v689 = vmul.f32 %v635, %v671
      %v690 = vmul.f32 %v636, %v672
      %v691 = vmul.f32 %v637, %v673
      %v692 = vmul.f32 %v638, %v674
      %v693 = vmul.f32 %v639, %v675
      %v694 = vmul.f32 %v640, %v676
      %v695 = vmul.f32 %v641, %v677
      %v696 = vmul.f32 %v642, %v678
      %v697 = vmul.f32 %v643, %v679
      %v698 = vmul.f32 %v644, %v680
      %v699 = vmul.f32 %v645, %v681
      %v700 = vmul.f32 %v646, %v682
      %v701 = vmul.f32 %v647, %v683
      %v702 = vmul.f32 %v648, %v684
      %v703 = vmul.f32 %v649, %v685
      %v704 = vmul.f32 %v650, %v686
      %v705 = vmul.f32 %v651, %v669
      %v706 = vmul.f32 %v652, %v670
      %v707 = vmul.f32 %v653, %v671
      %v708 = vmul.f32 %v654, %v672
      %v709 = vmul.f32 %v655, %v673
      %v710 = vmul.f32 %v656, %v674
      %v711 = vmul.f32 %v657, %v675
      %v712 = vmul.f32 %v658, %v676
      %v713 = vmul.f32 %v659, %v677
      %v714 = vmul.f32 %v660, %v678
      %v715 = vmul.f32 %v661, %v679
      %v716 = vmul.f32 %v662, %v680
      %v717 = vmul.f32 %v663, %v681
      %v718 = vmul.f32 %v664, %v682
      %v719 = vmul.f32 %v665, %v683
      %v720 = vmul.f32 %v666, %v684
      %v721 = vmul.f32 %v667, %v685
      %v722 = vmul.f32 %v668, %v686
      %v723 = vld [vmem:[%s8] sm:$0xff]
      %v724 = vld [vmem:[%s8 + $0x8] sm:$0x1]
      %v725 = vld [vmem:[%s8 + $0x10] sm:$0xff]
      %v726 = vld [vmem:[%s8 + $0x18] sm:$0x1]
      %v727 = vld [vmem:[%s8 + $0x20] sm:$0xff]
      %v728 = vld [vmem:[%s8 + $0x28] sm:$0x1]
      %v729 = vld [vmem:[%s8 + $0x30] sm:$0xff]
      %v730 = vld [vmem:[%s8 + $0x38] sm:$0x1]
      %v731 = vld [vmem:[%s8 + $0x40] sm:$0xff]
      %v732 = vld [vmem:[%s8 + $0x48] sm:$0x1]
      %v733 = vld [vmem:[%s8 + $0x50] sm:$0xff]
      %v734 = vld [vmem:[%s8 + $0x58] sm:$0x1]
      %v735 = vld [vmem:[%s8 + $0x60] sm:$0xff]
      %v736 = vld [vmem:[%s8 + $0x68] sm:$0x1]
      %v737 = vld [vmem:[%s8 + $0x70] sm:$0xff]
      %v738 = vld [vmem:[%s8 + $0x78] sm:$0x1]
      %v739 = vld [vmem:[%s8 + $0x80] sm:$0xff]
      %v740 = vld [vmem:[%s8 + $0x88] sm:$0x1]
      %v741 = vadd.f32 %v687, %v723
      %v742 = vadd.f32 %v688, %v724
      %v743 = vadd.f32 %v689, %v725
      %v744 = vadd.f32 %v690, %v726
      %v745 = vadd.f32 %v691, %v727
      %v746 = vadd.f32 %v692, %v728
      %v747 = vadd.f32 %v693, %v729
      %v748 = vadd.f32 %v694, %v730
      %v749 = vadd.f32 %v695, %v731
      %v750 = vadd.f32 %v696, %v732
      %v751 = vadd.f32 %v697, %v733
      %v752 = vadd.f32 %v698, %v734
      %v753 = vadd.f32 %v699, %v735
      %v754 = vadd.f32 %v700, %v736
      %v755 = vadd.f32 %v701, %v737
      %v756 = vadd.f32 %v702, %v738
      %v757 = vadd.f32 %v703, %v739
      %v758 = vadd.f32 %v704, %v740
      %v759 = vadd.f32 %v705, %v723
      %v760 = vadd.f32 %v706, %v724
      %v761 = vadd.f32 %v707, %v725
      %v762 = vadd.f32 %v708, %v726
      %v763 = vadd.f32 %v709, %v727
      %v764 = vadd.f32 %v710, %v728
      %v765 = vadd.f32 %v711, %v729
      %v766 = vadd.f32 %v712, %v730
      %v767 = vadd.f32 %v713, %v731
      %v768 = vadd.f32 %v714, %v732
      %v769 = vadd.f32 %v715, %v733
      %v770 = vadd.f32 %v716, %v734
      %v771 = vadd.f32 %v717, %v735
      %v772 = vadd.f32 %v718, %v736
      %v773 = vadd.f32 %v719, %v737
      %v774 = vadd.f32 %v720, %v738
      %v775 = vadd.f32 %v721, %v739
      %v776 = vadd.f32 %v722, %v740
      %v777 = vmax.f32 %v741, 0.0
      %v778 = vmax.f32 %v742, 0.0
      %v779 = vmax.f32 %v743, 0.0
      %v780 = vmax.f32 %v744, 0.0
      %v781 = vmax.f32 %v745, 0.0
      %v782 = vmax.f32 %v746, 0.0
      %v783 = vmax.f32 %v747, 0.0
      %v784 = vmax.f32 %v748, 0.0
      %v785 = vmax.f32 %v749, 0.0
      %v786 = vmax.f32 %v750, 0.0
      %v787 = vmax.f32 %v751, 0.0
      %v788 = vmax.f32 %v752, 0.0
      %v789 = vmax.f32 %v753, 0.0
      %v790 = vmax.f32 %v754, 0.0
      %v791 = vmax.f32 %v755, 0.0
      %v792 = vmax.f32 %v756, 0.0
      %v793 = vmax.f32 %v757, 0.0
      %v794 = vmax.f32 %v758, 0.0
      %v795 = vmax.f32 %v759, 0.0
      %v796 = vmax.f32 %v760, 0.0
      %v797 = vmax.f32 %v761, 0.0
      %v798 = vmax.f32 %v762, 0.0
      %v799 = vmax.f32 %v763, 0.0
      %v800 = vmax.f32 %v764, 0.0
      %v801 = vmax.f32 %v765, 0.0
      %v802 = vmax.f32 %v766, 0.0
      %v803 = vmax.f32 %v767, 0.0
      %v804 = vmax.f32 %v768, 0.0
      %v805 = vmax.f32 %v769, 0.0
      %v806 = vmax.f32 %v770, 0.0
      %v807 = vmax.f32 %v771, 0.0
      %v808 = vmax.f32 %v772, 0.0
      %v809 = vmax.f32 %v773, 0.0
      %v810 = vmax.f32 %v774, 0.0
      %v811 = vmax.f32 %v775, 0.0
      %v812 = vmax.f32 %v776, 0.0
      %v813 = vld [vmem:[%s609] sm:$0xff]
      %v814 = vld [vmem:[%s609 + $0x10] sm:$0xff]
      %v815 = vld [vmem:[%s609 + $0x20] sm:$0xff]
      %v816 = vld [vmem:[%s609 + $0x30] sm:$0xff]
      %v817 = vld [vmem:[%s609 + $0x40] sm:$0xff]
      %v818 = vld [vmem:[%s609 + $0x50] sm:$0xff]
      %v819 = vld [vmem:[%s609 + $0x60] sm:$0xff]
      %v820 = vld [vmem:[%s609 + $0x70] sm:$0xff]
      %v821 = vld [vmem:[%s609 + $0x80] sm:$0xff]
      %v822 = vld [vmem:[%s609 + $0x90] sm:$0xff]
      %v823 = vld [vmem:[%s609 + $0xa0] sm:$0xff]
      %v824 = vld [vmem:[%s609 + $0xb0] sm:$0xff]
      %v825 = vld [vmem:[%s609 + $0xc0] sm:$0xff]
      %v826 = vld [vmem:[%s609 + $0xd0] sm:$0xff]
      %v827 = vld [vmem:[%s609 + $0xe0] sm:$0xff]
      %v828 = vld [vmem:[%s609 + $0xf0] sm:$0xff]
      %v829 = vld [vmem:[%s609 + $0x100] sm:$0xff]
      %v830 = vld [vmem:[%s609 + $0x110] sm:$0xff]
      %v831 = vld [vmem:[%s5] sm:$0xff]
      %v832 = vld [vmem:[%s5 + $0x10] sm:$0xff]
      %v833 = vld [vmem:[%s5 + $0x20] sm:$0xff]
      %v834 = vld [vmem:[%s5 + $0x30] sm:$0xff]
      %v835 = vld [vmem:[%s5 + $0x40] sm:$0xff]
      %v836 = vld [vmem:[%s5 + $0x50] sm:$0xff]
      %v837 = vld [vmem:[%s5 + $0x60] sm:$0xff]
      %v838 = vld [vmem:[%s5 + $0x70] sm:$0xff]
      %v839 = vld [vmem:[%s5 + $0x80] sm:$0xff]
      %v840 = vmul.f32 %v813, %v831
      %v841 = vmul.f32 %v814, %v832
      %v842 = vmul.f32 %v815, %v833
      %v843 = vmul.f32 %v816, %v834
      %v844 = vmul.f32 %v817, %v835
      %v845 = vmul.f32 %v818, %v836
      %v846 = vmul.f32 %v819, %v837
      %v847 = vmul.f32 %v820, %v838
      %v848 = vmul.f32 %v821, %v839
      %v849 = vmul.f32 %v822, %v831
      %v850 = vmul.f32 %v823, %v832
      %v851 = vmul.f32 %v824, %v833
      %v852 = vmul.f32 %v825, %v834
      %v853 = vmul.f32 %v826, %v835
      %v854 = vmul.f32 %v827, %v836
      %v855 = vmul.f32 %v828, %v837
      %v856 = vmul.f32 %v829, %v838
      %v857 = vmul.f32 %v830, %v839
      %v858 = vld [vmem:[%s9] sm:$0xff]
      %v859 = vld [vmem:[%s9 + $0x10] sm:$0xff]
      %v860 = vld [vmem:[%s9 + $0x20] sm:$0xff]
      %v861 = vld [vmem:[%s9 + $0x30] sm:$0xff]
      %v862 = vld [vmem:[%s9 + $0x40] sm:$0xff]
      %v863 = vld [vmem:[%s9 + $0x50] sm:$0xff]
      %v864 = vld [vmem:[%s9 + $0x60] sm:$0xff]
      %v865 = vld [vmem:[%s9 + $0x70] sm:$0xff]
      %v866 = vld [vmem:[%s9 + $0x80] sm:$0xff]
      %v867 = vadd.f32 %v840, %v858
      %v868 = vadd.f32 %v841, %v859
      %v869 = vadd.f32 %v842, %v860
      %v870 = vadd.f32 %v843, %v861
      %v871 = vadd.f32 %v844, %v862
      %v872 = vadd.f32 %v845, %v863
      %v873 = vadd.f32 %v846, %v864
      %v874 = vadd.f32 %v847, %v865
      %v875 = vadd.f32 %v848, %v866
      %v876 = vadd.f32 %v849, %v858
      %v877 = vadd.f32 %v850, %v859
      %v878 = vadd.f32 %v851, %v860
      %v879 = vadd.f32 %v852, %v861
      %v880 = vadd.f32 %v853, %v862
      %v881 = vadd.f32 %v854, %v863
      %v882 = vadd.f32 %v855, %v864
      %v883 = vadd.f32 %v856, %v865
      %v884 = vadd.f32 %v857, %v866
      %v885 = vmax.f32 %v867, 0.0
      %v886 = vmax.f32 %v868, 0.0
      %v887 = vmax.f32 %v869, 0.0
      %v888 = vmax.f32 %v870, 0.0
      %v889 = vmax.f32 %v871, 0.0
      %v890 = vmax.f32 %v872, 0.0
      %v891 = vmax.f32 %v873, 0.0
      %v892 = vmax.f32 %v874, 0.0
      %v893 = vmax.f32 %v875, 0.0
      %v894 = vmax.f32 %v876, 0.0
      %v895 = vmax.f32 %v877, 0.0
      %v896 = vmax.f32 %v878, 0.0
      %v897 = vmax.f32 %v879, 0.0
      %v898 = vmax.f32 %v880, 0.0
      %v899 = vmax.f32 %v881, 0.0
      %v900 = vmax.f32 %v882, 0.0
      %v901 = vmax.f32 %v883, 0.0
      %v902 = vmax.f32 %v884, 0.0
      %v903 = vld [vmem:[%s616] sm:$0xff]
      %v904 = vld [vmem:[%s616 + $0x8] sm:$0x1]
      %v905 = vld [vmem:[%s616 + $0x10] sm:$0xff]
      %v906 = vld [vmem:[%s616 + $0x18] sm:$0x1]
      %v907 = vld [vmem:[%s616 + $0x20] sm:$0xff]
      %v908 = vld [vmem:[%s616 + $0x28] sm:$0x1]
      %v909 = vld [vmem:[%s616 + $0x30] sm:$0xff]
      %v910 = vld [vmem:[%s616 + $0x38] sm:$0x1]
      %v911 = vld [vmem:[%s616 + $0x40] sm:$0xff]
      %v912 = vld [vmem:[%s616 + $0x48] sm:$0x1]
      %v913 = vld [vmem:[%s616 + $0x50] sm:$0xff]
      %v914 = vld [vmem:[%s616 + $0x58] sm:$0x1]
      %v915 = vld [vmem:[%s616 + $0x60] sm:$0xff]
      %v916 = vld [vmem:[%s616 + $0x68] sm:$0x1]
      %v917 = vld [vmem:[%s616 + $0x70] sm:$0xff]
      %v918 = vld [vmem:[%s616 + $0x78] sm:$0x1]
      %v919 = vld [vmem:[%s616 + $0x90] sm:$0xff]
      %v920 = vld [vmem:[%s616 + $0x98] sm:$0x1]
      %v921 = vld [vmem:[%s616 + $0xa0] sm:$0xff]
      %v922 = vld [vmem:[%s616 + $0xa8] sm:$0x1]
      %v923 = vld [vmem:[%s616 + $0xb0] sm:$0xff]
      %v924 = vld [vmem:[%s616 + $0xb8] sm:$0x1]
      %v925 = vld [vmem:[%s616 + $0xc0] sm:$0xff]
      %v926 = vld [vmem:[%s616 + $0xc8] sm:$0x1]
      %v927 = vld [vmem:[%s616 + $0xd0] sm:$0xff]
      %v928 = vld [vmem:[%s616 + $0xd8] sm:$0x1]
      %v929 = vld [vmem:[%s616 + $0xe0] sm:$0xff]
      %v930 = vld [vmem:[%s616 + $0xe8] sm:$0x1]
      %v931 = vld [vmem:[%s616 + $0xf0] sm:$0xff]
      %v932 = vld [vmem:[%s616 + $0xf8] sm:$0x1]
      %v933 = vld [vmem:[%s616 + $0x100] sm:$0xff]
      %v934 = vld [vmem:[%s616 + $0x108] sm:$0x1]
      %v935 = vld [vmem:[%s6] sm:$0xff]
      %v936 = vld [vmem:[%s6 + $0x8] sm:$0x1]
      %v937 = vld [vmem:[%s6 + $0x10] sm:$0xff]
      %v938 = vld [vmem:[%s6 + $0x18] sm:$0x1]
      %v939 = vld [vmem:[%s6 + $0x20] sm:$0xff]
      %v940 = vld [vmem:[%s6 + $0x28] sm:$0x1]
      %v941 = vld [vmem:[%s6 + $0x30] sm:$0xff]
      %v942 = vld [vmem:[%s6 + $0x38] sm:$0x1]
      %v943 = vld [vmem:[%s6 + $0x40] sm:$0xff]
      %v944 = vld [vmem:[%s6 + $0x48] sm:$0x1]
      %v945 = vld [vmem:[%s6 + $0x50] sm:$0xff]
      %v946 = vld [vmem:[%s6 + $0x58] sm:$0x1]
      %v947 = vld [vmem:[%s6 + $0x60] sm:$0xff]
      %v948 = vld [vmem:[%s6 + $0x68] sm:$0x1]
      %v949 = vld [vmem:[%s6 + $0x70] sm:$0xff]
      %v950 = vld [vmem:[%s6 + $0x78] sm:$0x1]
      %v951 = vmul.f32 %v903, %v935
      %v952 = vmul.f32 %v904, %v936
      %v953 = vmul.f32 %v905, %v937
      %v954 = vmul.f32 %v906, %v938
      %v955 = vmul.f32 %v907, %v939
      %v956 = vmul.f32 %v908, %v940
      %v957 = vmul.f32 %v909, %v941
      %v958 = vmul.f32 %v910, %v942
      %v959 = vmul.f32 %v911, %v943
      %v960 = vmul.f32 %v912, %v944
      %v961 = vmul.f32 %v913, %v945
      %v962 = vmul.f32 %v914, %v946
      %v963 = vmul.f32 %v915, %v947
      %v964 = vmul.f32 %v916, %v948
      %v965 = vmul.f32 %v917, %v949
      %v966 = vmul.f32 %v918, %v950
      %v967 = vmul.f32 %v919, %v935
      %v968 = vmul.f32 %v920, %v936
      %v969 = vmul.f32 %v921, %v937
      %v970 = vmul.f32 %v922, %v938
      %v971 = vmul.f32 %v923, %v939
      %v972 = vmul.f32 %v924, %v940
      %v973 = vmul.f32 %v925, %v941
      %v974 = vmul.f32 %v926, %v942
      %v975 = vmul.f32 %v927, %v943
      %v976 = vmul.f32 %v928, %v944
      %v977 = vmul.f32 %v929, %v945
      %v978 = vmul.f32 %v930, %v946
      %v979 = vmul.f32 %v931, %v947
      %v980 = vmul.f32 %v932, %v948
      %v981 = vmul.f32 %v933, %v949
      %v982 = vmul.f32 %v934, %v950
      %v983 = vld [vmem:[%s10] sm:$0xff]
      %v984 = vld [vmem:[%s10 + $0x8] sm:$0x1]
      %v985 = vld [vmem:[%s10 + $0x10] sm:$0xff]
      %v986 = vld [vmem:[%s10 + $0x18] sm:$0x1]
      %v987 = vld [vmem:[%s10 + $0x20] sm:$0xff]
      %v988 = vld [vmem:[%s10 + $0x28] sm:$0x1]
      %v989 = vld [vmem:[%s10 + $0x30] sm:$0xff]
      %v990 = vld [vmem:[%s10 + $0x38] sm:$0x1]
      %v991 = vld [vmem:[%s10 + $0x40] sm:$0xff]
      %v992 = vld [vmem:[%s10 + $0x48] sm:$0x1]
      %v993 = vld [vmem:[%s10 + $0x50] sm:$0xff]
      %v994 = vld [vmem:[%s10 + $0x58] sm:$0x1]
      %v995 = vld [vmem:[%s10 + $0x60] sm:$0xff]
      %v996 = vld [vmem:[%s10 + $0x68] sm:$0x1]
      %v997 = vld [vmem:[%s10 + $0x70] sm:$0xff]
      %v998 = vld [vmem:[%s10 + $0x78] sm:$0x1]
      %v999 = vadd.f32 %v951, %v983
      %v1000 = vadd.f32 %v952, %v984
      %v1001 = vadd.f32 %v953, %v985
      %v1002 = vadd.f32 %v954, %v986
      %v1003 = vadd.f32 %v955, %v987
      %v1004 = vadd.f32 %v956, %v988
      %v1005 = vadd.f32 %v957, %v989
      %v1006 = vadd.f32 %v958, %v990
      %v1007 = vadd.f32 %v959, %v991
      %v1008 = vadd.f32 %v960, %v992
      %v1009 = vadd.f32 %v961, %v993
      %v1010 = vadd.f32 %v962, %v994
      %v1011 = vadd.f32 %v963, %v995
      %v1012 = vadd.f32 %v964, %v996
      %v1013 = vadd.f32 %v965, %v997
      %v1014 = vadd.f32 %v966, %v998
      %v1015 = vadd.f32 %v967, %v983
      %v1016 = vadd.f32 %v968, %v984
      %v1017 = vadd.f32 %v969, %v985
      %v1018 = vadd.f32 %v970, %v986
      %v1019 = vadd.f32 %v971, %v987
      %v1020 = vadd.f32 %v972, %v988
      %v1021 = vadd.f32 %v973, %v989
      %v1022 = vadd.f32 %v974, %v990
      %v1023 = vadd.f32 %v975, %v991
      %v1024 = vadd.f32 %v976, %v992
      %v1025 = vadd.f32 %v977, %v993
      %v1026 = vadd.f32 %v978, %v994
      %v1027 = vadd.f32 %v979, %v995
      %v1028 = vadd.f32 %v980, %v996
      %v1029 = vadd.f32 %v981, %v997
      %v1030 = vadd.f32 %v982, %v998
      %v1031 = vmax.f32 %v999, 0.0
      %v1032 = vmax.f32 %v1000, 0.0
      %v1033 = vmax.f32 %v1001, 0.0
      %v1034 = vmax.f32 %v1002, 0.0
      %v1035 = vmax.f32 %v1003, 0.0
      %v1036 = vmax.f32 %v1004, 0.0
      %v1037 = vmax.f32 %v1005, 0.0
      %v1038 = vmax.f32 %v1006, 0.0
      %v1039 = vmax.f32 %v1007, 0.0
      %v1040 = vmax.f32 %v1008, 0.0
      %v1041 = vmax.f32 %v1009, 0.0
      %v1042 = vmax.f32 %v1010, 0.0
      %v1043 = vmax.f32 %v1011, 0.0
      %v1044 = vmax.f32 %v1012, 0.0
      %v1045 = vmax.f32 %v1013, 0.0
      %v1046 = vmax.f32 %v1014, 0.0
      %v1047 = vmax.f32 %v1015, 0.0
      %v1048 = vmax.f32 %v1016, 0.0
      %v1049 = vmax.f32 %v1017, 0.0
      %v1050 = vmax.f32 %v1018, 0.0
      %v1051 = vmax.f32 %v1019, 0.0
      %v1052 = vmax.f32 %v1020, 0.0
      %v1053 = vmax.f32 %v1021, 0.0
      %v1054 = vmax.f32 %v1022, 0.0
      %v1055 = vmax.f32 %v1023, 0.0
      %v1056 = vmax.f32 %v1024, 0.0
      %v1057 = vmax.f32 %v1025, 0.0
      %v1058 = vmax.f32 %v1026, 0.0
      %v1059 = vmax.f32 %v1027, 0.0
      %v1060 = vmax.f32 %v1028, 0.0
      %v1061 = vmax.f32 %v1029, 0.0
      %v1062 = vmax.f32 %v1030, 0.0
      %v1063 = vld [vmem:[%s623] sm:$0xff]
      %v1064 = vld [vmem:[%s623 + $0x10] sm:$0xff]
      %v1065 = vld [vmem:[%s623 + $0x20] sm:$0xff]
      %v1066 = vld [vmem:[%s623 + $0x30] sm:$0xff]
      %v1067 = vld [vmem:[%s623 + $0x40] sm:$0xff]
      %v1068 = vld [vmem:[%s623 + $0x50] sm:$0xff]
      %v1069 = vld [vmem:[%s623 + $0x60] sm:$0xff]
      %v1070 = vld [vmem:[%s623 + $0x70] sm:$0xff]
      %v1071 = vld [vmem:[%s623 + $0x90] sm:$0xff]
      %v1072 = vld [vmem:[%s623 + $0xa0] sm:$0xff]
      %v1073 = vld [vmem:[%s623 + $0xb0] sm:$0xff]
      %v1074 = vld [vmem:[%s623 + $0xc0] sm:$0xff]
      %v1075 = vld [vmem:[%s623 + $0xd0] sm:$0xff]
      %v1076 = vld [vmem:[%s623 + $0xe0] sm:$0xff]
      %v1077 = vld [vmem:[%s623 + $0xf0] sm:$0xff]
      %v1078 = vld [vmem:[%s623 + $0x100] sm:$0xff]
      %v1079 = vld [vmem:[%s7] sm:$0xff]
      %v1080 = vld [vmem:[%s7 + $0x10] sm:$0xff]
      %v1081 = vld [vmem:[%s7 + $0x20] sm:$0xff]
      %v1082 = vld [vmem:[%s7 + $0x30] sm:$0xff]
      %v1083 = vld [vmem:[%s7 + $0x40] sm:$0xff]
      %v1084 = vld [vmem:[%s7 + $0x50] sm:$0xff]
      %v1085 = vld [vmem:[%s7 + $0x60] sm:$0xff]
      %v1086 = vld [vmem:[%s7 + $0x70] sm:$0xff]
      %v1087 = vmul.f32 %v1063, %v1079
      %v1088 = vmul.f32 %v1064, %v1080
      %v1089 = vmul.f32 %v1065, %v1081
      %v1090 = vmul.f32 %v1066, %v1082
      %v1091 = vmul.f32 %v1067, %v1083
      %v1092 = vmul.f32 %v1068, %v1084
      %v1093 = vmul.f32 %v1069, %v1085
      %v1094 = vmul.f32 %v1070, %v1086
      %v1095 = vmul.f32 %v1071, %v1079
      %v1096 = vmul.f32 %v1072, %v1080
      %v1097 = vmul.f32 %v1073, %v1081
      %v1098 = vmul.f32 %v1074, %v1082
      %v1099 = vmul.f32 %v1075, %v1083
      %v1100 = vmul.f32 %v1076, %v1084
      %v1101 = vmul.f32 %v1077, %v1085
      %v1102 = vmul.f32 %v1078, %v1086
      %v1103 = vld [vmem:[%s11] sm:$0xff]
      %v1104 = vld [vmem:[%s11 + $0x10] sm:$0xff]
      %v1105 = vld [vmem:[%s11 + $0x20] sm:$0xff]
      %v1106 = vld [vmem:[%s11 + $0x30] sm:$0xff]
      %v1107 = vld [vmem:[%s11 + $0x40] sm:$0xff]
      %v1108 = vld [vmem:[%s11 + $0x50] sm:$0xff]
      %v1109 = vld [vmem:[%s11 + $0x60] sm:$0xff]
      %v1110 = vld [vmem:[%s11 + $0x70] sm:$0xff]
      %v1111 = vadd.f32 %v1087, %v1103
      %v1112 = vadd.f32 %v1088, %v1104
      %v1113 = vadd.f32 %v1089, %v1105
      %v1114 = vadd.f32 %v1090, %v1106
      %v1115 = vadd.f32 %v1091, %v1107
      %v1116 = vadd.f32 %v1092, %v1108
      %v1117 = vadd.f32 %v1093, %v1109
      %v1118 = vadd.f32 %v1094, %v1110
      %v1119 = vadd.f32 %v1095, %v1103
      %v1120 = vadd.f32 %v1096, %v1104
      %v1121 = vadd.f32 %v1097, %v1105
      %v1122 = vadd.f32 %v1098, %v1106
      %v1123 = vadd.f32 %v1099, %v1107
      %v1124 = vadd.f32 %v1100, %v1108
      %v1125 = vadd.f32 %v1101, %v1109
      %v1126 = vadd.f32 %v1102, %v1110
      %v1127 = vmax.f32 %v1111, 0.0
      %v1128 = vmax.f32 %v1112, 0.0
      %v1129 = vmax.f32 %v1113, 0.0
      %v1130 = vmax.f32 %v1114, 0.0
      %v1131 = vmax.f32 %v1115, 0.0
      %v1132 = vmax.f32 %v1116, 0.0
      %v1133 = vmax.f32 %v1117, 0.0
      %v1134 = vmax.f32 %v1118, 0.0
      %v1135 = vmax.f32 %v1119, 0.0
      %v1136 = vmax.f32 %v1120, 0.0
      %v1137 = vmax.f32 %v1121, 0.0
      %v1138 = vmax.f32 %v1122, 0.0
      %v1139 = vmax.f32 %v1123, 0.0
      %v1140 = vmax.f32 %v1124, 0.0
      %v1141 = vmax.f32 %v1125, 0.0
      %v1142 = vmax.f32 %v1126, 0.0
      %vm1175 = vcmask 1046528
      %v1176 = vrot.slane %v777, 1
      %v1177 = vrot.slane %v778, 1
      %v1178 = vsel %vm1175, %v1176, %v1177
      %v1179 = vrot.slane %v779, 1
      %v1180 = vrot.slane %v780, 1
      %v1181 = vsel %vm1175, %v1179, %v1180
      %v1182 = vrot.slane %v781, 1
      %v1183 = vrot.slane %v782, 1
      %v1184 = vsel %vm1175, %v1182, %v1183
      %v1185 = vrot.slane %v783, 1
      %v1186 = vrot.slane %v784, 1
      %v1187 = vsel %vm1175, %v1185, %v1186
      %v1188 = vrot.slane %v785, 1
      %v1189 = vrot.slane %v786, 1
      %v1190 = vsel %vm1175, %v1188, %v1189
      %v1191 = vrot.slane %v787, 1
      %v1192 = vrot.slane %v788, 1
      %v1193 = vsel %vm1175, %v1191, %v1192
      %v1194 = vrot.slane %v789, 1
      %v1195 = vrot.slane %v790, 1
      %v1196 = vsel %vm1175, %v1194, %v1195
      %v1197 = vrot.slane %v791, 1
      %v1198 = vrot.slane %v792, 1
      %v1199 = vsel %vm1175, %v1197, %v1198
      %v1200 = vrot.slane %v795, 1
      %v1201 = vrot.slane %v796, 1
      %v1202 = vsel %vm1175, %v1200, %v1201
      %v1203 = vrot.slane %v797, 1
      %v1204 = vrot.slane %v798, 1
      %v1205 = vsel %vm1175, %v1203, %v1204
      %v1206 = vrot.slane %v799, 1
      %v1207 = vrot.slane %v800, 1
      %v1208 = vsel %vm1175, %v1206, %v1207
      %v1209 = vrot.slane %v801, 1
      %v1210 = vrot.slane %v802, 1
      %v1211 = vsel %vm1175, %v1209, %v1210
      %v1212 = vrot.slane %v803, 1
      %v1213 = vrot.slane %v804, 1
      %v1214 = vsel %vm1175, %v1212, %v1213
      %v1215 = vrot.slane %v805, 1
      %v1216 = vrot.slane %v806, 1
      %v1217 = vsel %vm1175, %v1215, %v1216
      %v1218 = vrot.slane %v807, 1
      %v1219 = vrot.slane %v808, 1
      %v1220 = vsel %vm1175, %v1218, %v1219
      %v1221 = vrot.slane %v809, 1
      %v1222 = vrot.slane %v810, 1
      %v1223 = vsel %vm1175, %v1221, %v1222
      %v1256 = vrot.slane %v1031, 1
      %v1257 = vrot.slane %v1032, 1
      %v1258 = vsel %vm1175, %v1256, %v1257
      %v1259 = vrot.slane %v1033, 1
      %v1260 = vrot.slane %v1034, 1
      %v1261 = vsel %vm1175, %v1259, %v1260
      %v1262 = vrot.slane %v1035, 1
      %v1263 = vrot.slane %v1036, 1
      %v1264 = vsel %vm1175, %v1262, %v1263
      %v1265 = vrot.slane %v1037, 1
      %v1266 = vrot.slane %v1038, 1
      %v1267 = vsel %vm1175, %v1265, %v1266
      %v1268 = vrot.slane %v1039, 1
      %v1269 = vrot.slane %v1040, 1
      %v1270 = vsel %vm1175, %v1268, %v1269
      %v1271 = vrot.slane %v1041, 1
      %v1272 = vrot.slane %v1042, 1
      %v1273 = vsel %vm1175, %v1271, %v1272
      %v1274 = vrot.slane %v1043, 1
      %v1275 = vrot.slane %v1044, 1
      %v1276 = vsel %vm1175, %v1274, %v1275
      %v1277 = vrot.slane %v1045, 1
      %v1278 = vrot.slane %v1046, 1
      %v1279 = vsel %vm1175, %v1277, %v1278
      %v1280 = vrot.slane %v1047, 1
      %v1281 = vrot.slane %v1048, 1
      %v1282 = vsel %vm1175, %v1280, %v1281
      %v1283 = vrot.slane %v1049, 1
      %v1284 = vrot.slane %v1050, 1
      %v1285 = vsel %vm1175, %v1283, %v1284
      %v1286 = vrot.slane %v1051, 1
      %v1287 = vrot.slane %v1052, 1
      %v1288 = vsel %vm1175, %v1286, %v1287
      %v1289 = vrot.slane %v1053, 1
      %v1290 = vrot.slane %v1054, 1
      %v1291 = vsel %vm1175, %v1289, %v1290
      %v1292 = vrot.slane %v1055, 1
      %v1293 = vrot.slane %v1056, 1
      %v1294 = vsel %vm1175, %v1292, %v1293
      %v1295 = vrot.slane %v1057, 1
      %v1296 = vrot.slane %v1058, 1
      %v1297 = vsel %vm1175, %v1295, %v1296
      %v1298 = vrot.slane %v1059, 1
      %v1299 = vrot.slane %v1060, 1
      %v1300 = vsel %vm1175, %v1298, %v1299
      %v1301 = vrot.slane %v1061, 1
      %v1302 = vrot.slane %v1062, 1
      %v1303 = vsel %vm1175, %v1301, %v1302
      %v1308 = vrot.slane %v793, 1
      %v1309 = vrot.slane %v794, 1
      %v1310 = vsel %vm1175, %v1308, %v1309
      %v1311 = vrot.slane %v811, 1
      %v1312 = vrot.slane %v812, 1
      %v1313 = vsel %vm1175, %v1311, %v1312
      %1346 = vrot.lane.b32.xlu0 %v885, 16
      %v1347 = vpop.permute.xlu0 %1346
      %1348 = vrot.lane.b32.xlu0 %v886, 16
      %v1349 = vpop.permute.xlu0 %1348
      %1350 = vrot.lane.b32.xlu0 %v887, 16
      %v1351 = vpop.permute.xlu0 %1350
      %1352 = vrot.lane.b32.xlu0 %v888, 16
      %v1353 = vpop.permute.xlu0 %1352
      %1354 = vrot.lane.b32.xlu0 %v889, 16
      %v1355 = vpop.permute.xlu0 %1354
      %1356 = vrot.lane.b32.xlu0 %v890, 16
      %v1357 = vpop.permute.xlu0 %1356
      %1358 = vrot.lane.b32.xlu0 %v891, 16
      %v1359 = vpop.permute.xlu0 %1358
      %1360 = vrot.lane.b32.xlu0 %v892, 16
      %v1361 = vpop.permute.xlu0 %1360
      %1362 = vrot.lane.b32.xlu0 %v894, 16
      %v1363 = vpop.permute.xlu0 %1362
      %1364 = vrot.lane.b32.xlu0 %v895, 16
      %v1365 = vpop.permute.xlu0 %1364
      %1366 = vrot.lane.b32.xlu0 %v896, 16
      %v1367 = vpop.permute.xlu0 %1366
      %1368 = vrot.lane.b32.xlu0 %v897, 16
      %v1369 = vpop.permute.xlu0 %1368
      %1370 = vrot.lane.b32.xlu0 %v898, 16
      %v1371 = vpop.permute.xlu0 %1370
      %1372 = vrot.lane.b32.xlu0 %v899, 16
      %v1373 = vpop.permute.xlu0 %1372
      %1374 = vrot.lane.b32.xlu0 %v900, 16
      %v1375 = vpop.permute.xlu0 %1374
      %1376 = vrot.lane.b32.xlu0 %v901, 16
      %v1377 = vpop.permute.xlu0 %1376
      %1394 = vrot.lane.b32.xlu0 %v1178, 32
      %v1395 = vpop.permute.xlu0 %1394
      %1396 = vrot.lane.b32.xlu0 %v1181, 32
      %v1397 = vpop.permute.xlu0 %1396
      %1398 = vrot.lane.b32.xlu0 %v1184, 32
      %v1399 = vpop.permute.xlu0 %1398
      %1400 = vrot.lane.b32.xlu0 %v1187, 32
      %v1401 = vpop.permute.xlu0 %1400
      %1402 = vrot.lane.b32.xlu0 %v1190, 32
      %v1403 = vpop.permute.xlu0 %1402
      %1404 = vrot.lane.b32.xlu0 %v1193, 32
      %v1405 = vpop.permute.xlu0 %1404
      %1406 = vrot.lane.b32.xlu0 %v1196, 32
      %v1407 = vpop.permute.xlu0 %1406
      %1408 = vrot.lane.b32.xlu0 %v1199, 32
      %v1409 = vpop.permute.xlu0 %1408
      %1410 = vrot.lane.b32.xlu0 %v1202, 32
      %v1411 = vpop.permute.xlu0 %1410
      %1412 = vrot.lane.b32.xlu0 %v1205, 32
      %v1413 = vpop.permute.xlu0 %1412
      %1414 = vrot.lane.b32.xlu0 %v1208, 32
      %v1415 = vpop.permute.xlu0 %1414
      %1416 = vrot.lane.b32.xlu0 %v1211, 32
      %v1417 = vpop.permute.xlu0 %1416
      %1418 = vrot.lane.b32.xlu0 %v1214, 32
      %v1419 = vpop.permute.xlu0 %1418
      %1420 = vrot.lane.b32.xlu0 %v1217, 32
      %v1421 = vpop.permute.xlu0 %1420
      %1422 = vrot.lane.b32.xlu0 %v1220, 32
      %v1423 = vpop.permute.xlu0 %1422
      %1424 = vrot.lane.b32.xlu0 %v1223, 32
      %v1425 = vpop.permute.xlu0 %1424
      %1442 = vrot.lane.b32.xlu0 %v1031, 48
      %v1443 = vpop.permute.xlu0 %1442
      %1444 = vrot.lane.b32.xlu0 %v1033, 48
      %v1445 = vpop.permute.xlu0 %1444
      %1446 = vrot.lane.b32.xlu0 %v1035, 48
      %v1447 = vpop.permute.xlu0 %1446
      %1448 = vrot.lane.b32.xlu0 %v1037, 48
      %v1449 = vpop.permute.xlu0 %1448
      %1450 = vrot.lane.b32.xlu0 %v1039, 48
      %v1451 = vpop.permute.xlu0 %1450
      %1452 = vrot.lane.b32.xlu0 %v1041, 48
      %v1453 = vpop.permute.xlu0 %1452
      %1454 = vrot.lane.b32.xlu0 %v1043, 48
      %v1455 = vpop.permute.xlu0 %1454
      %1456 = vrot.lane.b32.xlu0 %v1045, 48
      %v1457 = vpop.permute.xlu0 %1456
      %1458 = vrot.lane.b32.xlu0 %v1047, 48
      %v1459 = vpop.permute.xlu0 %1458
      %1460 = vrot.lane.b32.xlu0 %v1049, 48
      %v1461 = vpop.permute.xlu0 %1460
      %1462 = vrot.lane.b32.xlu0 %v1051, 48
      %v1463 = vpop.permute.xlu0 %1462
      %1464 = vrot.lane.b32.xlu0 %v1053, 48
      %v1465 = vpop.permute.xlu0 %1464
      %1466 = vrot.lane.b32.xlu0 %v1055, 48
      %v1467 = vpop.permute.xlu0 %1466
      %1468 = vrot.lane.b32.xlu0 %v1057, 48
      %v1469 = vpop.permute.xlu0 %1468
      %1470 = vrot.lane.b32.xlu0 %v1059, 48
      %v1471 = vpop.permute.xlu0 %1470
      %1472 = vrot.lane.b32.xlu0 %v1061, 48
      %v1473 = vpop.permute.xlu0 %1472
      %1506 = vrot.lane.b32.xlu0 %v1127, 64
      %v1507 = vpop.permute.xlu0 %1506
      %1508 = vrot.lane.b32.xlu0 %v1128, 64
      %v1509 = vpop.permute.xlu0 %1508
      %1510 = vrot.lane.b32.xlu0 %v1129, 64
      %v1511 = vpop.permute.xlu0 %1510
      %1512 = vrot.lane.b32.xlu0 %v1130, 64
      %v1513 = vpop.permute.xlu0 %1512
      %1514 = vrot.lane.b32.xlu0 %v1131, 64
      %v1515 = vpop.permute.xlu0 %1514
      %1516 = vrot.lane.b32.xlu0 %v1132, 64
      %v1517 = vpop.permute.xlu0 %1516
      %1518 = vrot.lane.b32.xlu0 %v1133, 64
      %v1519 = vpop.permute.xlu0 %1518
      %1520 = vrot.lane.b32.xlu0 %v1134, 64
      %v1521 = vpop.permute.xlu0 %1520
      %1522 = vrot.lane.b32.xlu0 %v1135, 64
      %v1523 = vpop.permute.xlu0 %1522
      %1524 = vrot.lane.b32.xlu0 %v1136, 64
      %v1525 = vpop.permute.xlu0 %1524
      %1526 = vrot.lane.b32.xlu0 %v1137, 64
      %v1527 = vpop.permute.xlu0 %1526
      %1528 = vrot.lane.b32.xlu0 %v1138, 64
      %v1529 = vpop.permute.xlu0 %1528
      %1530 = vrot.lane.b32.xlu0 %v1139, 64
      %v1531 = vpop.permute.xlu0 %1530
      %1532 = vrot.lane.b32.xlu0 %v1140, 64
      %v1533 = vpop.permute.xlu0 %1532
      %1534 = vrot.lane.b32.xlu0 %v1141, 64
      %v1535 = vpop.permute.xlu0 %1534
      %1536 = vrot.lane.b32.xlu0 %v1142, 64
      %v1537 = vpop.permute.xlu0 %1536
      %1554 = vrot.lane.b32.xlu0 %v1258, 80
      %v1555 = vpop.permute.xlu0 %1554
      %1556 = vrot.lane.b32.xlu0 %v1261, 80
      %v1557 = vpop.permute.xlu0 %1556
      %1558 = vrot.lane.b32.xlu0 %v1264, 80
      %v1559 = vpop.permute.xlu0 %1558
      %1560 = vrot.lane.b32.xlu0 %v1267, 80
      %v1561 = vpop.permute.xlu0 %1560
      %1562 = vrot.lane.b32.xlu0 %v1270, 80
      %v1563 = vpop.permute.xlu0 %1562
      %1564 = vrot.lane.b32.xlu0 %v1273, 80
      %v1565 = vpop.permute.xlu0 %1564
      %1566 = vrot.lane.b32.xlu0 %v1276, 80
      %v1567 = vpop.permute.xlu0 %1566
      %1568 = vrot.lane.b32.xlu0 %v1279, 80
      %v1569 = vpop.permute.xlu0 %1568
      %1570 = vrot.lane.b32.xlu0 %v1282, 80
      %v1571 = vpop.permute.xlu0 %1570
      %1572 = vrot.lane.b32.xlu0 %v1285, 80
      %v1573 = vpop.permute.xlu0 %1572
      %1574 = vrot.lane.b32.xlu0 %v1288, 80
      %v1575 = vpop.permute.xlu0 %1574
      %1576 = vrot.lane.b32.xlu0 %v1291, 80
      %v1577 = vpop.permute.xlu0 %1576
      %1578 = vrot.lane.b32.xlu0 %v1294, 80
      %v1579 = vpop.permute.xlu0 %1578
      %1580 = vrot.lane.b32.xlu0 %v1297, 80
      %v1581 = vpop.permute.xlu0 %1580
      %1582 = vrot.lane.b32.xlu0 %v1300, 80
      %v1583 = vpop.permute.xlu0 %1582
      %1584 = vrot.lane.b32.xlu0 %v1303, 80
      %v1585 = vpop.permute.xlu0 %1584
      %1602 = vrot.lane.b32.xlu0 %v779, 96
      %v1603 = vpop.permute.xlu0 %1602
      %1604 = vrot.lane.b32.xlu0 %v781, 96
      %v1605 = vpop.permute.xlu0 %1604
      %1606 = vrot.lane.b32.xlu0 %v783, 96
      %v1607 = vpop.permute.xlu0 %1606
      %1608 = vrot.lane.b32.xlu0 %v785, 96
      %v1609 = vpop.permute.xlu0 %1608
      %1610 = vrot.lane.b32.xlu0 %v787, 96
      %v1611 = vpop.permute.xlu0 %1610
      %1612 = vrot.lane.b32.xlu0 %v789, 96
      %v1613 = vpop.permute.xlu0 %1612
      %1614 = vrot.lane.b32.xlu0 %v791, 96
      %v1615 = vpop.permute.xlu0 %1614
      %1616 = vrot.lane.b32.xlu0 %v793, 96
      %v1617 = vpop.permute.xlu0 %1616
      %1618 = vrot.lane.b32.xlu0 %v797, 96
      %v1619 = vpop.permute.xlu0 %1618
      %1620 = vrot.lane.b32.xlu0 %v799, 96
      %v1621 = vpop.permute.xlu0 %1620
      %1622 = vrot.lane.b32.xlu0 %v801, 96
      %v1623 = vpop.permute.xlu0 %1622
      %1624 = vrot.lane.b32.xlu0 %v803, 96
      %v1625 = vpop.permute.xlu0 %1624
      %1626 = vrot.lane.b32.xlu0 %v805, 96
      %v1627 = vpop.permute.xlu0 %1626
      %1628 = vrot.lane.b32.xlu0 %v807, 96
      %v1629 = vpop.permute.xlu0 %1628
      %1630 = vrot.lane.b32.xlu0 %v809, 96
      %v1631 = vpop.permute.xlu0 %1630
      %1632 = vrot.lane.b32.xlu0 %v811, 96
      %v1633 = vpop.permute.xlu0 %1632
      %1652 = vrot.lane.b32.xlu0 %v886, 112
      %v1653 = vpop.permute.xlu0 %1652
      %1654 = vrot.lane.b32.xlu0 %v887, 112
      %v1655 = vpop.permute.xlu0 %1654
      %1656 = vrot.lane.b32.xlu0 %v888, 112
      %v1657 = vpop.permute.xlu0 %1656
      %1658 = vrot.lane.b32.xlu0 %v889, 112
      %v1659 = vpop.permute.xlu0 %1658
      %1660 = vrot.lane.b32.xlu0 %v890, 112
      %v1661 = vpop.permute.xlu0 %1660
      %1662 = vrot.lane.b32.xlu0 %v891, 112
      %v1663 = vpop.permute.xlu0 %1662
      %1664 = vrot.lane.b32.xlu0 %v892, 112
      %v1665 = vpop.permute.xlu0 %1664
      %1666 = vrot.lane.b32.xlu0 %v893, 112
      %v1667 = vpop.permute.xlu0 %1666
      %1668 = vrot.lane.b32.xlu0 %v895, 112
      %v1669 = vpop.permute.xlu0 %1668
      %1670 = vrot.lane.b32.xlu0 %v896, 112
      %v1671 = vpop.permute.xlu0 %1670
      %1672 = vrot.lane.b32.xlu0 %v897, 112
      %v1673 = vpop.permute.xlu0 %1672
      %1674 = vrot.lane.b32.xlu0 %v898, 112
      %v1675 = vpop.permute.xlu0 %1674
      %1676 = vrot.lane.b32.xlu0 %v899, 112
      %v1677 = vpop.permute.xlu0 %1676
      %1678 = vrot.lane.b32.xlu0 %v900, 112
      %v1679 = vpop.permute.xlu0 %1678
      %1680 = vrot.lane.b32.xlu0 %v901, 112
      %v1681 = vpop.permute.xlu0 %1680
      %1682 = vrot.lane.b32.xlu0 %v902, 112
      %v1683 = vpop.permute.xlu0 %1682
      %vm1700 = vcmask 130048
      %v1701 = vsel %vm1700, %v777, %v1347
      %v1702 = vsel %vm1700, %v779, %v1349
      %v1703 = vsel %vm1700, %v781, %v1351
      %v1704 = vsel %vm1700, %v783, %v1353
      %v1705 = vsel %vm1700, %v785, %v1355
      %v1706 = vsel %vm1700, %v787, %v1357
      %v1707 = vsel %vm1700, %v789, %v1359
      %v1708 = vsel %vm1700, %v791, %v1361
      %v1709 = vsel %vm1700, %v795, %v1363
      %v1710 = vsel %vm1700, %v797, %v1365
      %v1711 = vsel %vm1700, %v799, %v1367
      %v1712 = vsel %vm1700, %v801, %v1369
      %v1713 = vsel %vm1700, %v803, %v1371
      %v1714 = vsel %vm1700, %v805, %v1373
      %v1715 = vsel %vm1700, %v807, %v1375
      %v1716 = vsel %vm1700, %v809, %v1377
      %vm1717 = vcmask 261120
      %v1718 = vsel %vm1717, %v1701, %v1395
      %v1719 = vsel %vm1717, %v1702, %v1397
      %v1720 = vsel %vm1717, %v1703, %v1399
      %v1721 = vsel %vm1717, %v1704, %v1401
      %v1722 = vsel %vm1717, %v1705, %v1403
      %v1723 = vsel %vm1717, %v1706, %v1405
      %v1724 = vsel %vm1717, %v1707, %v1407
      %v1725 = vsel %vm1717, %v1708, %v1409
      %v1726 = vsel %vm1717, %v1709, %v1411
      %v1727 = vsel %vm1717, %v1710, %v1413
      %v1728 = vsel %vm1717, %v1711, %v1415
      %v1729 = vsel %vm1717, %v1712, %v1417
      %v1730 = vsel %vm1717, %v1713, %v1419
      %v1731 = vsel %vm1717, %v1714, %v1421
      %v1732 = vsel %vm1717, %v1715, %v1423
      %v1733 = vsel %vm1717, %v1716, %v1425
      %vm1734 = vcmask 392192
      %v1735 = vsel %vm1734, %v1718, %v1443
      %v1736 = vsel %vm1734, %v1719, %v1445
      %v1737 = vsel %vm1734, %v1720, %v1447
      %v1738 = vsel %vm1734, %v1721, %v1449
      %v1739 = vsel %vm1734, %v1722, %v1451
      %v1740 = vsel %vm1734, %v1723, %v1453
      %v1741 = vsel %vm1734, %v1724, %v1455
      %v1742 = vsel %vm1734, %v1725, %v1457
      %v1743 = vsel %vm1734, %v1726, %v1459
      %v1744 = vsel %vm1734, %v1727, %v1461
      %v1745 = vsel %vm1734, %v1728, %v1463
      %v1746 = vsel %vm1734, %v1729, %v1465
      %v1747 = vsel %vm1734, %v1730, %v1467
      %v1748 = vsel %vm1734, %v1731, %v1469
      %v1749 = vsel %vm1734, %v1732, %v1471
      %v1750 = vsel %vm1734, %v1733, %v1473
      %vm1751 = vcmask 523264
      %v1752 = vsel %vm1751, %v1735, %v1507
      %v1753 = vsel %vm1751, %v1736, %v1509
      %v1754 = vsel %vm1751, %v1737, %v1511
      %v1755 = vsel %vm1751, %v1738, %v1513
      %v1756 = vsel %vm1751, %v1739, %v1515
      %v1757 = vsel %vm1751, %v1740, %v1517
      %v1758 = vsel %vm1751, %v1741, %v1519
      %v1759 = vsel %vm1751, %v1742, %v1521
      %v1760 = vsel %vm1751, %v1743, %v1523
      %v1761 = vsel %vm1751, %v1744, %v1525
      %v1762 = vsel %vm1751, %v1745, %v1527
      %v1763 = vsel %vm1751, %v1746, %v1529
      %v1764 = vsel %vm1751, %v1747, %v1531
      %v1765 = vsel %vm1751, %v1748, %v1533
      %v1766 = vsel %vm1751, %v1749, %v1535
      %v1767 = vsel %vm1751, %v1750, %v1537
      %vm1768 = vcmask 654336
      %v1769 = vsel %vm1768, %v1752, %v1555
      %v1770 = vsel %vm1768, %v1753, %v1557
      %v1771 = vsel %vm1768, %v1754, %v1559
      %v1772 = vsel %vm1768, %v1755, %v1561
      %v1773 = vsel %vm1768, %v1756, %v1563
      %v1774 = vsel %vm1768, %v1757, %v1565
      %v1775 = vsel %vm1768, %v1758, %v1567
      %v1776 = vsel %vm1768, %v1759, %v1569
      %v1777 = vsel %vm1768, %v1760, %v1571
      %v1778 = vsel %vm1768, %v1761, %v1573
      %v1779 = vsel %vm1768, %v1762, %v1575
      %v1780 = vsel %vm1768, %v1763, %v1577
      %v1781 = vsel %vm1768, %v1764, %v1579
      %v1782 = vsel %vm1768, %v1765, %v1581
      %v1783 = vsel %vm1768, %v1766, %v1583
      %v1784 = vsel %vm1768, %v1767, %v1585
      %vm1785 = vcmask 785408
      %v1786 = vsel %vm1785, %v1769, %v1603
      %v1787 = vsel %vm1785, %v1770, %v1605
      %v1788 = vsel %vm1785, %v1771, %v1607
      %v1789 = vsel %vm1785, %v1772, %v1609
      %v1790 = vsel %vm1785, %v1773, %v1611
      %v1791 = vsel %vm1785, %v1774, %v1613
      %v1792 = vsel %vm1785, %v1775, %v1615
      %v1793 = vsel %vm1785, %v1776, %v1617
      %v1794 = vsel %vm1785, %v1777, %v1619
      %v1795 = vsel %vm1785, %v1778, %v1621
      %v1796 = vsel %vm1785, %v1779, %v1623
      %v1797 = vsel %vm1785, %v1780, %v1625
      %v1798 = vsel %vm1785, %v1781, %v1627
      %v1799 = vsel %vm1785, %v1782, %v1629
      %v1800 = vsel %vm1785, %v1783, %v1631
      %v1801 = vsel %vm1785, %v1784, %v1633
      %vm1802 = vcmask 916480
      %v1803 = vsel %vm1802, %v1786, %v1653
      %v1804 = vsel %vm1802, %v1787, %v1655
      %v1805 = vsel %vm1802, %v1788, %v1657
      %v1806 = vsel %vm1802, %v1789, %v1659
      %v1807 = vsel %vm1802, %v1790, %v1661
      %v1808 = vsel %vm1802, %v1791, %v1663
      %v1809 = vsel %vm1802, %v1792, %v1665
      %v1810 = vsel %vm1802, %v1793, %v1667
      %v1811 = vsel %vm1802, %v1794, %v1669
      %v1812 = vsel %vm1802, %v1795, %v1671
      %v1813 = vsel %vm1802, %v1796, %v1673
      %v1814 = vsel %vm1802, %v1797, %v1675
      %v1815 = vsel %vm1802, %v1798, %v1677
      %v1816 = vsel %vm1802, %v1799, %v1679
      %v1817 = vsel %vm1802, %v1800, %v1681
      %v1818 = vsel %vm1802, %v1801, %v1683
      %v1819 = vpack.c.bf16 %v1804, %v1803
      %v1820 = vpack.c.bf16 %v1184, %v1181
      %v1821 = vpack.c.bf16 %v1806, %v1805
      %v1822 = vpack.c.bf16 %v1190, %v1187
      %v1823 = vpack.c.bf16 %v1808, %v1807
      %v1824 = vpack.c.bf16 %v1196, %v1193
      %v1825 = vpack.c.bf16 %v1810, %v1809
      %v1826 = vpack.c.bf16 %v1310, %v1199
      %v1827 = vpack.c.bf16 %v1812, %v1811
      %v1828 = vpack.c.bf16 %v1208, %v1205
      %v1829 = vpack.c.bf16 %v1814, %v1813
      %v1830 = vpack.c.bf16 %v1214, %v1211
      %v1831 = vpack.c.bf16 %v1816, %v1815
      %v1832 = vpack.c.bf16 %v1220, %v1217
      %v1833 = vpack.c.bf16 %v1818, %v1817
      %v1834 = vpack.c.bf16 %v1313, %v1223
      %v1835 = vld [vmem:[%s15] sm:$0xf]
      %v1836 = vld [vmem:[%s15 + $0x4] sm:$0xf]
      %v1837 = vld [vmem:[%s15 + $0x8] sm:$0xf]
      %v1838 = vld [vmem:[%s15 + $0xc] sm:$0xf]
      %v1839 = vld [vmem:[%s15 + $0x10] sm:$0xf]
      %v1840 = vld [vmem:[%s15 + $0x14] sm:$0xf]
      %v1841 = vld [vmem:[%s15 + $0x18] sm:$0xf]
      %v1842 = vld [vmem:[%s15 + $0x1c] sm:$0xf]
      %v1843 = vld [vmem:[%s15 + $0x20] sm:$0xf]
      %v1844 = vld [vmem:[%s15 + $0x24] sm:$0xf]
      %v1845 = vld [vmem:[%s15 + $0x28] sm:$0xf]
      %v1846 = vld [vmem:[%s15 + $0x2c] sm:$0xf]
      %v1847 = vld [vmem:[%s15 + $0x30] sm:$0xf]
      %v1848 = vld [vmem:[%s15 + $0x34] sm:$0xf]
      %v1849 = vld [vmem:[%s15 + $0x38] sm:$0xf]
      %v1850 = vld [vmem:[%s15 + $0x3c] sm:$0xf]
      %v1851 = vld [vmem:[%s15 + $0x40] sm:$0xf]
      %v1852 = vld [vmem:[%s15 + $0x44] sm:$0xf]
      %v1871 = vunpack.c.l.b16 %v1835
      %v1872 = vunpack.c.l.b16 %v1836
      %v1873 = vunpack.c.l.b16 %v1837
      %v1874 = vunpack.c.l.b16 %v1838
      %v1875 = vunpack.c.l.b16 %v1839
      %v1876 = vunpack.c.l.b16 %v1840
      %v1877 = vunpack.c.l.b16 %v1841
      %v1878 = vunpack.c.l.b16 %v1842
      %v1879 = vunpack.c.l.b16 %v1843
      %v1880 = vunpack.c.l.b16 %v1844
      %v1881 = vunpack.c.l.b16 %v1845
      %v1882 = vunpack.c.l.b16 %v1846
      %v1883 = vunpack.c.l.b16 %v1847
      %v1884 = vunpack.c.l.b16 %v1848
      %v1885 = vunpack.c.l.b16 %v1849
      %v1886 = vunpack.c.l.b16 %v1850
      %v1887 = vunpack.c.l.b16 %v1851
      %v1888 = vunpack.c.l.b16 %v1852
      %v1889 = vpack.c.b16 %v1872, %v1871
      %v1890 = vpack.c.b16 %v1874, %v1873
      %v1891 = vpack.c.b16 %v1876, %v1875
      %v1892 = vpack.c.b16 %v1878, %v1877
      %v1893 = vpack.c.b16 %v1880, %v1879
      %v1894 = vpack.c.b16 %v1882, %v1881
      %v1895 = vpack.c.b16 %v1884, %v1883
      %v1896 = vpack.c.b16 %v1886, %v1885
      %v1897 = vpack.c.b16 %v1888, %v1887
      %v1908 = vsel %vm1700, %v1820, 0
      %v1911 = vsel %vm1700, %v1822, 0
      %v1914 = vsel %vm1700, %v1824, 0
      %v1917 = vsel %vm1700, %v1826, 0
      %v1920 = vsel %vm1700, %v1828, 0
      %v1923 = vsel %vm1700, %v1830, 0
      %v1926 = vsel %vm1700, %v1832, 0
      %v1929 = vsel %vm1700, %v1834, 0
      %1931 = vmatprep.subr.bf16.mxu0 0
      %1932 = vmatpush1.bf16.msra.mxu0 %v1896
      %1933 = vmatprep.subr.bf16.mxu0 0
      %1934 = vmatpush1.bf16.msra.mxu0 %v1895
      %1935 = vmatprep.subr.bf16.mxu0 0
      %1936 = vmatpush1.bf16.msra.mxu0 %v1894
      %1937 = vmatprep.subr.bf16.mxu0 0
      %1938 = vmatpush1.bf16.msra.mxu0 %v1893
      %1939 = vmatprep.subr.bf16.mxu0 0
      %1940 = vmatpush1.bf16.msra.mxu0 %v1892
      %1941 = vmatprep.subr.bf16.mxu0 0
      %1942 = vmatpush1.bf16.msra.mxu0 %v1891
      %1943 = vmatprep.subr.bf16.mxu0 0
      %1944 = vmatpush1.bf16.msra.mxu0 %v1890
      %1945 = vmatprep.subr.bf16.mxu0 0
      %1946 = vmatpush1.bf16.msra.mxu0 %v1889
      %1947 = vmatprep.subr.bf16.mxu0 0
      %1948 = vmatpush2.bf16.msra.mxu0 0
      %1949 = vmatprep.subr.bf16.mxu0 0
      %1950 = vmatpush2.bf16.msra.mxu0 0
      %1951 = vmatprep.subr.bf16.mxu0 0
      %1952 = vmatpush2.bf16.msra.mxu0 0
      %1953 = vmatprep.subr.bf16.mxu0 0
      %1954 = vmatpush2.bf16.msra.mxu0 0
      %1955 = vmatprep.subr.bf16.mxu0 0
      %1956 = vmatpush2.bf16.msra.mxu0 0
      %1957 = vmatprep.subr.bf16.mxu0 0
      %1958 = vmatpush2.bf16.msra.mxu0 0
      %1959 = vmatprep.subr.bf16.mxu0 0
      %1960 = vmatpush2.bf16.msra.mxu0 0
      %1961 = vmatprep.subr.bf16.mxu0 0
      %1962 = vmatpush2.bf16.msra.mxu0 %v1897
      %1963 = vmatprep.mubr.bf16.mxu0 %v1908
      %1964 = vmatmul.mubr.bf16.gmra.mxu0 %v1819
      %v1965 = vpop.f32.mrf.mxu0
      %v1966 = vadd.f32 0.0, %v1965
      %v1967 = vpop.f32.mrf.mxu0
      %v1968 = vpop.f32.mrf.mxu0
      %v1969 = vadd.f32 0.0, %v1968
      %v1970 = vpop.f32.mrf.mxu0
      %1971 = vmatprep.mubr.bf16.mxu0 %v1911
      %1972 = vmatmul.mubr.bf16.gmra.mxu0 %v1821
      %v1973 = vpop.f32.mrf.mxu0
      %v1974 = vadd.f32 0.0, %v1973
      %v1975 = vpop.f32.mrf.mxu0
      %v1976 = vpop.f32.mrf.mxu0
      %v1977 = vadd.f32 0.0, %v1976
      %v1978 = vpop.f32.mrf.mxu0
      %1979 = vmatprep.mubr.bf16.mxu0 %v1914
      %1980 = vmatmul.mubr.bf16.gmra.mxu0 %v1823
      %v1981 = vpop.f32.mrf.mxu0
      %v1982 = vadd.f32 0.0, %v1981
      %v1983 = vpop.f32.mrf.mxu0
      %v1984 = vpop.f32.mrf.mxu0
      %v1985 = vadd.f32 0.0, %v1984
      %v1986 = vpop.f32.mrf.mxu0
      %1987 = vmatprep.mubr.bf16.mxu0 %v1917
      %1988 = vmatmul.mubr.bf16.gmra.mxu0 %v1825
      %v1989 = vpop.f32.mrf.mxu0
      %v1990 = vadd.f32 0.0, %v1989
      %v1991 = vpop.f32.mrf.mxu0
      %v1992 = vpop.f32.mrf.mxu0
      %v1993 = vadd.f32 0.0, %v1992
      %v1994 = vpop.f32.mrf.mxu0
      %1995 = vmatprep.mubr.bf16.mxu0 %v1920
      %1996 = vmatmul.mubr.bf16.gmra.mxu0 %v1827
      %v1997 = vpop.f32.mrf.mxu0
      %v1998 = vadd.f32 0.0, %v1997
      %v1999 = vpop.f32.mrf.mxu0
      %v2000 = vpop.f32.mrf.mxu0
      %v2001 = vadd.f32 0.0, %v2000
      %v2002 = vpop.f32.mrf.mxu0
      %2003 = vmatprep.mubr.bf16.mxu0 %v1923
      %2004 = vmatmul.mubr.bf16.gmra.mxu0 %v1829
      %v2005 = vpop.f32.mrf.mxu0
      %v2006 = vadd.f32 0.0, %v2005
      %v2007 = vpop.f32.mrf.mxu0
      %v2008 = vpop.f32.mrf.mxu0
      %v2009 = vadd.f32 0.0, %v2008
      %v2010 = vpop.f32.mrf.mxu0
      %2011 = vmatprep.mubr.bf16.mxu0 %v1926
      %2012 = vmatmul.mubr.bf16.gmra.mxu0 %v1831
      %v2013 = vpop.f32.mrf.mxu0
      %v2014 = vadd.f32 0.0, %v2013
      %v2015 = vpop.f32.mrf.mxu0
      %v2016 = vpop.f32.mrf.mxu0
      %v2017 = vadd.f32 0.0, %v2016
      %v2018 = vpop.f32.mrf.mxu0
      %2019 = vmatprep.mubr.bf16.mxu0 %v1929
      %2020 = vmatmul.mubr.bf16.gmra.mxu0 %v1833
      %v2021 = vpop.f32.mrf.mxu0
      %v2022 = vadd.f32 0.0, %v2021
      %v2023 = vpop.f32.mrf.mxu0
      %v2024 = vpop.f32.mrf.mxu0
      %v2025 = vadd.f32 0.0, %v2024
      %v2026 = vpop.f32.mrf.mxu0
      %2027 = vdwg.mxu0
      %v2028 = vld [vmem:[%s12] sm:$0x1]
      %v2030 = vlaneseq
      %v2031 = vshrl.u32 %v2030, 7
      %v2032 = vsub.s32 0, %v2031
      %v2033 = vrot.slane %v2028, %v2032
      %v2035 = vmul.f32 %v1966, %v2033
      %v2036 = vmul.f32 %v1969, %v2033
      %v2037 = vmul.f32 %v1974, %v2033
      %v2038 = vmul.f32 %v1977, %v2033
      %v2039 = vmul.f32 %v1982, %v2033
      %v2040 = vmul.f32 %v1985, %v2033
      %v2041 = vmul.f32 %v1990, %v2033
      %v2042 = vmul.f32 %v1993, %v2033
      %v2043 = vmul.f32 %v1998, %v2033
      %v2044 = vmul.f32 %v2001, %v2033
      %v2045 = vmul.f32 %v2006, %v2033
      %v2046 = vmul.f32 %v2009, %v2033
      %v2047 = vmul.f32 %v2014, %v2033
      %v2048 = vmul.f32 %v2017, %v2033
      %v2049 = vmul.f32 %v2022, %v2033
      %v2050 = vmul.f32 %v2025, %v2033
      %v2051 = vld [vmem:[%s13] sm:$0x1]
      %v2053 = vlaneseq
      %v2054 = vshrl.u32 %v2053, 7
      %v2055 = vsub.s32 0, %v2054
      %v2056 = vrot.slane %v2051, %v2055
      %v2058 = vadd.f32 %v2035, %v2056
      %v2059 = vadd.f32 %v2036, %v2056
      %v2060 = vadd.f32 %v2037, %v2056
      %v2061 = vadd.f32 %v2038, %v2056
      %v2062 = vadd.f32 %v2039, %v2056
      %v2063 = vadd.f32 %v2040, %v2056
      %v2064 = vadd.f32 %v2041, %v2056
      %v2065 = vadd.f32 %v2042, %v2056
      %v2066 = vadd.f32 %v2043, %v2056
      %v2067 = vadd.f32 %v2044, %v2056
      %v2068 = vadd.f32 %v2045, %v2056
      %v2069 = vadd.f32 %v2046, %v2056
      %v2070 = vadd.f32 %v2047, %v2056
      %v2071 = vadd.f32 %v2048, %v2056
      %v2072 = vadd.f32 %v2049, %v2056
      %v2073 = vadd.f32 %v2050, %v2056
      %v2074 = vmax.f32 %v2058, 0.0
      %v2075 = vmax.f32 %v2059, 0.0
      %v2076 = vmax.f32 %v2060, 0.0
      %v2077 = vmax.f32 %v2061, 0.0
      %v2078 = vmax.f32 %v2062, 0.0
      %v2079 = vmax.f32 %v2063, 0.0
      %v2080 = vmax.f32 %v2064, 0.0
      %v2081 = vmax.f32 %v2065, 0.0
      %v2082 = vmax.f32 %v2066, 0.0
      %v2083 = vmax.f32 %v2067, 0.0
      %v2084 = vmax.f32 %v2068, 0.0
      %v2085 = vmax.f32 %v2069, 0.0
      %v2086 = vmax.f32 %v2070, 0.0
      %v2087 = vmax.f32 %v2071, 0.0
      %v2088 = vmax.f32 %v2072, 0.0
      %v2089 = vmax.f32 %v2073, 0.0
      %v2090 = vld [vmem:[%s14] sm:$0x1]
      %v2092 = vlaneseq
      %v2093 = vshrl.u32 %v2092, 7
      %v2094 = vsub.s32 0, %v2093
      %v2095 = vrot.slane %v2090, %v2094
      %v2097 = vmul.f32 %v2074, %v2095
      %v2098 = vmul.f32 %v2075, %v2095
      %v2099 = vmul.f32 %v2076, %v2095
      %v2100 = vmul.f32 %v2077, %v2095
      %v2101 = vmul.f32 %v2078, %v2095
      %v2102 = vmul.f32 %v2079, %v2095
      %v2103 = vmul.f32 %v2080, %v2095
      %v2104 = vmul.f32 %v2081, %v2095
      %v2105 = vmul.f32 %v2082, %v2095
      %v2106 = vmul.f32 %v2083, %v2095
      %v2107 = vmul.f32 %v2084, %v2095
      %v2108 = vmul.f32 %v2085, %v2095
      %v2109 = vmul.f32 %v2086, %v2095
      %v2110 = vmul.f32 %v2087, %v2095
      %v2111 = vmul.f32 %v2088, %v2095
      %v2112 = vmul.f32 %v2089, %v2095
      %v2129 = vrot.slane %v2097, 7
      %v2130 = vrot.slane %v2098, 7
      %v2131 = vrot.slane %v2099, 7
      %v2132 = vrot.slane %v2100, 7
      %v2133 = vrot.slane %v2101, 7
      %v2134 = vrot.slane %v2102, 7
      %v2135 = vrot.slane %v2103, 7
      %v2136 = vrot.slane %v2104, 7
      %v2137 = vrot.slane %v2105, 7
      %v2138 = vrot.slane %v2106, 7
      %v2139 = vrot.slane %v2107, 7
      %v2140 = vrot.slane %v2108, 7
      %v2141 = vrot.slane %v2109, 7
      %v2142 = vrot.slane %v2110, 7
      %v2143 = vrot.slane %v2111, 7
      %v2144 = vrot.slane %v2112, 7
      %vm2161 = vcmask 1040384
      %v2162 = vsel %vm2161, 0.0, %v2129
      %v2163 = vsel %vm2161, 0.0, %v2130
      %v2164 = vsel %vm2161, 0.0, %v2131
      %v2165 = vsel %vm2161, 0.0, %v2132
      %v2166 = vsel %vm2161, 0.0, %v2133
      %v2167 = vsel %vm2161, 0.0, %v2134
      %v2168 = vsel %vm2161, 0.0, %v2135
      %v2169 = vsel %vm2161, 0.0, %v2136
      %v2170 = vsel %vm2161, 0.0, %v2137
      %v2171 = vsel %vm2161, 0.0, %v2138
      %v2172 = vsel %vm2161, 0.0, %v2139
      %v2173 = vsel %vm2161, 0.0, %v2140
      %v2174 = vsel %vm2161, 0.0, %v2141
      %v2175 = vsel %vm2161, 0.0, %v2142
      %v2176 = vsel %vm2161, 0.0, %v2143
      %v2177 = vsel %vm2161, 0.0, %v2144
      %v2178 = vsel %vm2161, %v2129, 0.0
      %v2179 = vsel %vm2161, %v2130, 0.0
      %v2180 = vsel %vm2161, %v2131, 0.0
      %v2181 = vsel %vm2161, %v2132, 0.0
      %v2182 = vsel %vm2161, %v2133, 0.0
      %v2183 = vsel %vm2161, %v2134, 0.0
      %v2184 = vsel %vm2161, %v2135, 0.0
      %v2185 = vsel %vm2161, %v2136, 0.0
      %v2186 = vsel %vm2161, %v2137, 0.0
      %v2187 = vsel %vm2161, %v2138, 0.0
      %v2188 = vsel %vm2161, %v2139, 0.0
      %v2189 = vsel %vm2161, %v2140, 0.0
      %v2190 = vsel %vm2161, %v2141, 0.0
      %v2191 = vsel %vm2161, %v2142, 0.0
      %v2192 = vsel %vm2161, %v2143, 0.0
      %v2193 = vsel %vm2161, %v2144, 0.0
      %v2223 = vrot.slane 0.0, 1
      %v2224 = vsel %vm1175, %v2223, %v2223
      %v2225 = vrot.slane %v2162, 1
      %v2226 = vrot.slane %v2178, 1
      %v2227 = vsel %vm1175, %v2225, %v2226
      %v2228 = vrot.slane %v2163, 1
      %v2229 = vrot.slane %v2179, 1
      %v2230 = vsel %vm1175, %v2228, %v2229
      %v2231 = vrot.slane %v2164, 1
      %v2232 = vrot.slane %v2180, 1
      %v2233 = vsel %vm1175, %v2231, %v2232
      %v2234 = vrot.slane %v2165, 1
      %v2235 = vrot.slane %v2181, 1
      %v2236 = vsel %vm1175, %v2234, %v2235
      %v2237 = vrot.slane %v2166, 1
      %v2238 = vrot.slane %v2182, 1
      %v2239 = vsel %vm1175, %v2237, %v2238
      %v2240 = vrot.slane %v2167, 1
      %v2241 = vrot.slane %v2183, 1
      %v2242 = vsel %vm1175, %v2240, %v2241
      %v2243 = vrot.slane %v2168, 1
      %v2244 = vrot.slane %v2184, 1
      %v2245 = vsel %vm1175, %v2243, %v2244
      %v2246 = vrot.slane %v2170, 1
      %v2247 = vrot.slane %v2186, 1
      %v2248 = vsel %vm1175, %v2246, %v2247
      %v2249 = vrot.slane %v2171, 1
      %v2250 = vrot.slane %v2187, 1
      %v2251 = vsel %vm1175, %v2249, %v2250
      %v2252 = vrot.slane %v2172, 1
      %v2253 = vrot.slane %v2188, 1
      %v2254 = vsel %vm1175, %v2252, %v2253
      %v2255 = vrot.slane %v2173, 1
      %v2256 = vrot.slane %v2189, 1
      %v2257 = vsel %vm1175, %v2255, %v2256
      %v2258 = vrot.slane %v2174, 1
      %v2259 = vrot.slane %v2190, 1
      %v2260 = vsel %vm1175, %v2258, %v2259
      %v2261 = vrot.slane %v2175, 1
      %v2262 = vrot.slane %v2191, 1
      %v2263 = vsel %vm1175, %v2261, %v2262
      %v2264 = vrot.slane %v2176, 1
      %v2265 = vrot.slane %v2192, 1
      %v2266 = vsel %vm1175, %v2264, %v2265
      %vm2267 = vcmask 1045504
      %v2268 = vrot.slane 0.0, 2
      %v2269 = vsel %vm2267, %v2268, %v2268
      %v2270 = vrot.slane %v2162, 2
      %v2271 = vrot.slane %v2178, 2
      %v2272 = vsel %vm2267, %v2270, %v2271
      %v2273 = vrot.slane %v2163, 2
      %v2274 = vrot.slane %v2179, 2
      %v2275 = vsel %vm2267, %v2273, %v2274
      %v2276 = vrot.slane %v2164, 2
      %v2277 = vrot.slane %v2180, 2
      %v2278 = vsel %vm2267, %v2276, %v2277
      %v2279 = vrot.slane %v2165, 2
      %v2280 = vrot.slane %v2181, 2
      %v2281 = vsel %vm2267, %v2279, %v2280
      %v2282 = vrot.slane %v2166, 2
      %v2283 = vrot.slane %v2182, 2
      %v2284 = vsel %vm2267, %v2282, %v2283
      %v2285 = vrot.slane %v2167, 2
      %v2286 = vrot.slane %v2183, 2
      %v2287 = vsel %vm2267, %v2285, %v2286
      %v2288 = vrot.slane %v2168, 2
      %v2289 = vrot.slane %v2184, 2
      %v2290 = vsel %vm2267, %v2288, %v2289
      %v2291 = vrot.slane %v2170, 2
      %v2292 = vrot.slane %v2186, 2
      %v2293 = vsel %vm2267, %v2291, %v2292
      %v2294 = vrot.slane %v2171, 2
      %v2295 = vrot.slane %v2187, 2
      %v2296 = vsel %vm2267, %v2294, %v2295
      %v2297 = vrot.slane %v2172, 2
      %v2298 = vrot.slane %v2188, 2
      %v2299 = vsel %vm2267, %v2297, %v2298
      %v2300 = vrot.slane %v2173, 2
      %v2301 = vrot.slane %v2189, 2
      %v2302 = vsel %vm2267, %v2300, %v2301
      %v2303 = vrot.slane %v2174, 2
      %v2304 = vrot.slane %v2190, 2
      %v2305 = vsel %vm2267, %v2303, %v2304
      %v2306 = vrot.slane %v2175, 2
      %v2307 = vrot.slane %v2191, 2
      %v2308 = vsel %vm2267, %v2306, %v2307
      %v2309 = vrot.slane %v2176, 2
      %v2310 = vrot.slane %v2192, 2
      %v2311 = vsel %vm2267, %v2309, %v2310
      %v2316 = vrot.slane %v2169, 1
      %v2317 = vrot.slane %v2185, 1
      %v2318 = vsel %vm1175, %v2316, %v2317
      %v2319 = vrot.slane %v2177, 1
      %v2320 = vrot.slane %v2193, 1
      %v2321 = vsel %vm1175, %v2319, %v2320
      %v2338 = vrot.slane %v2169, 2
      %v2339 = vrot.slane %v2185, 2
      %v2340 = vsel %vm2267, %v2338, %v2339
      %v2341 = vrot.slane %v2177, 2
      %v2342 = vrot.slane %v2193, 2
      %v2343 = vsel %vm2267, %v2341, %v2342
      %2359 = vrot.lane.b32.xlu0 %v2224, 32
      %v2360 = vpop.permute.xlu0 %2359
      %2361 = vrot.lane.b32.xlu0 %v2227, 32
      %v2362 = vpop.permute.xlu0 %2361
      %2363 = vrot.lane.b32.xlu0 %v2230, 32
      %v2364 = vpop.permute.xlu0 %2363
      %2365 = vrot.lane.b32.xlu0 %v2233, 32
      %v2366 = vpop.permute.xlu0 %2365
      %2367 = vrot.lane.b32.xlu0 %v2236, 32
      %v2368 = vpop.permute.xlu0 %2367
      %2369 = vrot.lane.b32.xlu0 %v2239, 32
      %v2370 = vpop.permute.xlu0 %2369
      %2371 = vrot.lane.b32.xlu0 %v2242, 32
      %v2372 = vpop.permute.xlu0 %2371
      %2373 = vrot.lane.b32.xlu0 %v2245, 32
      %v2374 = vpop.permute.xlu0 %2373
      %2375 = vrot.lane.b32.xlu0 %v2248, 32
      %v2376 = vpop.permute.xlu0 %2375
      %2377 = vrot.lane.b32.xlu0 %v2251, 32
      %v2378 = vpop.permute.xlu0 %2377
      %2379 = vrot.lane.b32.xlu0 %v2254, 32
      %v2380 = vpop.permute.xlu0 %2379
      %2381 = vrot.lane.b32.xlu0 %v2257, 32
      %v2382 = vpop.permute.xlu0 %2381
      %2383 = vrot.lane.b32.xlu0 %v2260, 32
      %v2384 = vpop.permute.xlu0 %2383
      %2385 = vrot.lane.b32.xlu0 %v2263, 32
      %v2386 = vpop.permute.xlu0 %2385
      %2387 = vrot.lane.b32.xlu0 %v2266, 32
      %v2388 = vpop.permute.xlu0 %2387
      %2404 = vrot.lane.b32.xlu0 %v2269, 64
      %v2405 = vpop.permute.xlu0 %2404
      %2406 = vrot.lane.b32.xlu0 %v2272, 64
      %v2407 = vpop.permute.xlu0 %2406
      %2408 = vrot.lane.b32.xlu0 %v2275, 64
      %v2409 = vpop.permute.xlu0 %2408
      %2410 = vrot.lane.b32.xlu0 %v2278, 64
      %v2411 = vpop.permute.xlu0 %2410
      %2412 = vrot.lane.b32.xlu0 %v2281, 64
      %v2413 = vpop.permute.xlu0 %2412
      %2414 = vrot.lane.b32.xlu0 %v2284, 64
      %v2415 = vpop.permute.xlu0 %2414
      %2416 = vrot.lane.b32.xlu0 %v2287, 64
      %v2417 = vpop.permute.xlu0 %2416
      %2418 = vrot.lane.b32.xlu0 %v2290, 64
      %v2419 = vpop.permute.xlu0 %2418
      %2420 = vrot.lane.b32.xlu0 %v2293, 64
      %v2421 = vpop.permute.xlu0 %2420
      %2422 = vrot.lane.b32.xlu0 %v2296, 64
      %v2423 = vpop.permute.xlu0 %2422
      %2424 = vrot.lane.b32.xlu0 %v2299, 64
      %v2425 = vpop.permute.xlu0 %2424
      %2426 = vrot.lane.b32.xlu0 %v2302, 64
      %v2427 = vpop.permute.xlu0 %2426
      %2428 = vrot.lane.b32.xlu0 %v2305, 64
      %v2429 = vpop.permute.xlu0 %2428
      %2430 = vrot.lane.b32.xlu0 %v2308, 64
      %v2431 = vpop.permute.xlu0 %2430
      %2432 = vrot.lane.b32.xlu0 %v2311, 64
      %v2433 = vpop.permute.xlu0 %2432
      %2449 = vrot.lane.b32.xlu0 %v2162, 96
      %v2450 = vpop.permute.xlu0 %2449
      %2451 = vrot.lane.b32.xlu0 %v2163, 96
      %v2452 = vpop.permute.xlu0 %2451
      %2453 = vrot.lane.b32.xlu0 %v2164, 96
      %v2454 = vpop.permute.xlu0 %2453
      %2455 = vrot.lane.b32.xlu0 %v2165, 96
      %v2456 = vpop.permute.xlu0 %2455
      %2457 = vrot.lane.b32.xlu0 %v2166, 96
      %v2458 = vpop.permute.xlu0 %2457
      %2459 = vrot.lane.b32.xlu0 %v2167, 96
      %v2460 = vpop.permute.xlu0 %2459
      %2461 = vrot.lane.b32.xlu0 %v2168, 96
      %v2462 = vpop.permute.xlu0 %2461
      %2463 = vrot.lane.b32.xlu0 %v2169, 96
      %v2464 = vpop.permute.xlu0 %2463
      %2465 = vrot.lane.b32.xlu0 %v2170, 96
      %v2466 = vpop.permute.xlu0 %2465
      %2467 = vrot.lane.b32.xlu0 %v2171, 96
      %v2468 = vpop.permute.xlu0 %2467
      %2469 = vrot.lane.b32.xlu0 %v2172, 96
      %v2470 = vpop.permute.xlu0 %2469
      %2471 = vrot.lane.b32.xlu0 %v2173, 96
      %v2472 = vpop.permute.xlu0 %2471
      %2473 = vrot.lane.b32.xlu0 %v2174, 96
      %v2474 = vpop.permute.xlu0 %2473
      %2475 = vrot.lane.b32.xlu0 %v2175, 96
      %v2476 = vpop.permute.xlu0 %2475
      %2477 = vrot.lane.b32.xlu0 %v2176, 96
      %v2478 = vpop.permute.xlu0 %2477
      %2479 = vrot.lane.b32.xlu0 %v2177, 96
      %v2480 = vpop.permute.xlu0 %2479
      %2497 = vrot.lane.b32.xlu0 %v2272, 32
      %v2498 = vpop.permute.xlu0 %2497
      %2499 = vrot.lane.b32.xlu0 %v2275, 32
      %v2500 = vpop.permute.xlu0 %2499
      %2501 = vrot.lane.b32.xlu0 %v2278, 32
      %v2502 = vpop.permute.xlu0 %2501
      %2503 = vrot.lane.b32.xlu0 %v2281, 32
      %v2504 = vpop.permute.xlu0 %2503
      %2505 = vrot.lane.b32.xlu0 %v2284, 32
      %v2506 = vpop.permute.xlu0 %2505
      %2507 = vrot.lane.b32.xlu0 %v2287, 32
      %v2508 = vpop.permute.xlu0 %2507
      %2509 = vrot.lane.b32.xlu0 %v2290, 32
      %v2510 = vpop.permute.xlu0 %2509
      %2511 = vrot.lane.b32.xlu0 %v2340, 32
      %v2512 = vpop.permute.xlu0 %2511
      %2513 = vrot.lane.b32.xlu0 %v2293, 32
      %v2514 = vpop.permute.xlu0 %2513
      %2515 = vrot.lane.b32.xlu0 %v2296, 32
      %v2516 = vpop.permute.xlu0 %2515
      %2517 = vrot.lane.b32.xlu0 %v2299, 32
      %v2518 = vpop.permute.xlu0 %2517
      %2519 = vrot.lane.b32.xlu0 %v2302, 32
      %v2520 = vpop.permute.xlu0 %2519
      %2521 = vrot.lane.b32.xlu0 %v2305, 32
      %v2522 = vpop.permute.xlu0 %2521
      %2523 = vrot.lane.b32.xlu0 %v2308, 32
      %v2524 = vpop.permute.xlu0 %2523
      %2525 = vrot.lane.b32.xlu0 %v2311, 32
      %v2526 = vpop.permute.xlu0 %2525
      %2527 = vrot.lane.b32.xlu0 %v2343, 32
      %v2528 = vpop.permute.xlu0 %2527
      %2545 = vrot.lane.b32.xlu0 %v2163, 64
      %v2546 = vpop.permute.xlu0 %2545
      %2547 = vrot.lane.b32.xlu0 %v2164, 64
      %v2548 = vpop.permute.xlu0 %2547
      %2549 = vrot.lane.b32.xlu0 %v2165, 64
      %v2550 = vpop.permute.xlu0 %2549
      %2551 = vrot.lane.b32.xlu0 %v2166, 64
      %v2552 = vpop.permute.xlu0 %2551
      %2553 = vrot.lane.b32.xlu0 %v2167, 64
      %v2554 = vpop.permute.xlu0 %2553
      %2555 = vrot.lane.b32.xlu0 %v2168, 64
      %v2556 = vpop.permute.xlu0 %2555
      %2557 = vrot.lane.b32.xlu0 %v2169, 64
      %v2558 = vpop.permute.xlu0 %2557
      %2559 = vrot.lane.b32.xlu0 0.0, 64
      %v2560 = vpop.permute.xlu0 %2559
      %2561 = vrot.lane.b32.xlu0 %v2171, 64
      %v2562 = vpop.permute.xlu0 %2561
      %2563 = vrot.lane.b32.xlu0 %v2172, 64
      %v2564 = vpop.permute.xlu0 %2563
      %2565 = vrot.lane.b32.xlu0 %v2173, 64
      %v2566 = vpop.permute.xlu0 %2565
      %2567 = vrot.lane.b32.xlu0 %v2174, 64
      %v2568 = vpop.permute.xlu0 %2567
      %2569 = vrot.lane.b32.xlu0 %v2175, 64
      %v2570 = vpop.permute.xlu0 %2569
      %2571 = vrot.lane.b32.xlu0 %v2176, 64
      %v2572 = vpop.permute.xlu0 %2571
      %2573 = vrot.lane.b32.xlu0 %v2177, 64
      %v2574 = vpop.permute.xlu0 %2573
      %2590 = vrot.lane.b32.xlu0 %v2230, 96
      %v2591 = vpop.permute.xlu0 %2590
      %2592 = vrot.lane.b32.xlu0 %v2233, 96
      %v2593 = vpop.permute.xlu0 %2592
      %2594 = vrot.lane.b32.xlu0 %v2236, 96
      %v2595 = vpop.permute.xlu0 %2594
      %2596 = vrot.lane.b32.xlu0 %v2239, 96
      %v2597 = vpop.permute.xlu0 %2596
      %2598 = vrot.lane.b32.xlu0 %v2242, 96
      %v2599 = vpop.permute.xlu0 %2598
      %2600 = vrot.lane.b32.xlu0 %v2245, 96
      %v2601 = vpop.permute.xlu0 %2600
      %2602 = vrot.lane.b32.xlu0 %v2318, 96
      %v2603 = vpop.permute.xlu0 %2602
      %2604 = vrot.lane.b32.xlu0 %v2224, 96
      %v2605 = vpop.permute.xlu0 %2604
      %2606 = vrot.lane.b32.xlu0 %v2251, 96
      %v2607 = vpop.permute.xlu0 %2606
      %2608 = vrot.lane.b32.xlu0 %v2254, 96
      %v2609 = vpop.permute.xlu0 %2608
      %2610 = vrot.lane.b32.xlu0 %v2257, 96
      %v2611 = vpop.permute.xlu0 %2610
      %2612 = vrot.lane.b32.xlu0 %v2260, 96
      %v2613 = vpop.permute.xlu0 %2612
      %2614 = vrot.lane.b32.xlu0 %v2263, 96
      %v2615 = vpop.permute.xlu0 %2614
      %2616 = vrot.lane.b32.xlu0 %v2266, 96
      %v2617 = vpop.permute.xlu0 %2616
      %2618 = vrot.lane.b32.xlu0 %v2321, 96
      %v2619 = vpop.permute.xlu0 %2618
      %v2635 = vsel %vm1717, 0.0, %v2360
      %v2636 = vsel %vm1717, %v2162, %v2362
      %v2637 = vsel %vm1717, %v2163, %v2364
      %v2638 = vsel %vm1717, %v2164, %v2366
      %v2639 = vsel %vm1717, %v2165, %v2368
      %v2640 = vsel %vm1717, %v2166, %v2370
      %v2641 = vsel %vm1717, %v2167, %v2372
      %v2642 = vsel %vm1717, %v2168, %v2374
      %v2643 = vsel %vm1717, %v2170, %v2376
      %v2644 = vsel %vm1717, %v2171, %v2378
      %v2645 = vsel %vm1717, %v2172, %v2380
      %v2646 = vsel %vm1717, %v2173, %v2382
      %v2647 = vsel %vm1717, %v2174, %v2384
      %v2648 = vsel %vm1717, %v2175, %v2386
      %v2649 = vsel %vm1717, %v2176, %v2388
      %v2650 = vsel %vm1751, %v2635, %v2405
      %v2651 = vsel %vm1751, %v2636, %v2407
      %v2652 = vsel %vm1751, %v2637, %v2409
      %v2653 = vsel %vm1751, %v2638, %v2411
      %v2654 = vsel %vm1751, %v2639, %v2413
      %v2655 = vsel %vm1751, %v2640, %v2415
      %v2656 = vsel %vm1751, %v2641, %v2417
      %v2657 = vsel %vm1751, %v2642, %v2419
      %v2658 = vsel %vm1751, %v2643, %v2421
      %v2659 = vsel %vm1751, %v2644, %v2423
      %v2660 = vsel %vm1751, %v2645, %v2425
      %v2661 = vsel %vm1751, %v2646, %v2427
      %v2662 = vsel %vm1751, %v2647, %v2429
      %v2663 = vsel %vm1751, %v2648, %v2431
      %v2664 = vsel %vm1751, %v2649, %v2433
      %v2665 = vsel %vm1785, %v2650, %v2450
      %v2666 = vsel %vm1785, %v2651, %v2452
      %v2667 = vsel %vm1785, %v2652, %v2454
      %v2668 = vsel %vm1785, %v2653, %v2456
      %v2669 = vsel %vm1785, %v2654, %v2458
      %v2670 = vsel %vm1785, %v2655, %v2460
      %v2671 = vsel %vm1785, %v2656, %v2462
      %v2672 = vsel %vm1785, %v2657, %v2464
      %v2673 = vsel %vm1785, %v2650, %v2466
      %v2674 = vsel %vm1785, %v2658, %v2468
      %v2675 = vsel %vm1785, %v2659, %v2470
      %v2676 = vsel %vm1785, %v2660, %v2472
      %v2677 = vsel %vm1785, %v2661, %v2474
      %v2678 = vsel %vm1785, %v2662, %v2476
      %v2679 = vsel %vm1785, %v2663, %v2478
      %v2680 = vsel %vm1785, %v2664, %v2480
      %v2681 = vsel %vm1717, %v2227, %v2498
      %v2682 = vsel %vm1717, %v2230, %v2500
      %v2683 = vsel %vm1717, %v2233, %v2502
      %v2684 = vsel %vm1717, %v2236, %v2504
      %v2685 = vsel %vm1717, %v2239, %v2506
      %v2686 = vsel %vm1717, %v2242, %v2508
      %v2687 = vsel %vm1717, %v2245, %v2510
      %v2688 = vsel %vm1717, %v2318, %v2512
      %v2689 = vsel %vm1717, %v2248, %v2514
      %v2690 = vsel %vm1717, %v2251, %v2516
      %v2691 = vsel %vm1717, %v2254, %v2518
      %v2692 = vsel %vm1717, %v2257, %v2520
      %v2693 = vsel %vm1717, %v2260, %v2522
      %v2694 = vsel %vm1717, %v2263, %v2524
      %v2695 = vsel %vm1717, %v2266, %v2526
      %v2696 = vsel %vm1717, %v2321, %v2528
      %v2697 = vsel %vm1751, %v2681, %v2546
      %v2698 = vsel %vm1751, %v2682, %v2548
      %v2699 = vsel %vm1751, %v2683, %v2550
      %v2700 = vsel %vm1751, %v2684, %v2552
      %v2701 = vsel %vm1751, %v2685, %v2554
      %v2702 = vsel %vm1751, %v2686, %v2556
      %v2703 = vsel %vm1751, %v2687, %v2558
      %v2704 = vsel %vm1751, %v2688, %v2560
      %v2705 = vsel %vm1751, %v2689, %v2562
      %v2706 = vsel %vm1751, %v2690, %v2564
      %v2707 = vsel %vm1751, %v2691, %v2566
      %v2708 = vsel %vm1751, %v2692, %v2568
      %v2709 = vsel %vm1751, %v2693, %v2570
      %v2710 = vsel %vm1751, %v2694, %v2572
      %v2711 = vsel %vm1751, %v2695, %v2574
      %v2712 = vsel %vm1751, %v2696, %v2560
      %v2713 = vsel %vm1785, %v2697, %v2591
      %v2714 = vsel %vm1785, %v2698, %v2593
      %v2715 = vsel %vm1785, %v2699, %v2595
      %v2716 = vsel %vm1785, %v2700, %v2597
      %v2717 = vsel %vm1785, %v2701, %v2599
      %v2718 = vsel %vm1785, %v2702, %v2601
      %v2719 = vsel %vm1785, %v2703, %v2603
      %v2720 = vsel %vm1785, %v2704, %v2605
      %v2721 = vsel %vm1785, %v2705, %v2607
      %v2722 = vsel %vm1785, %v2706, %v2609
      %v2723 = vsel %vm1785, %v2707, %v2611
      %v2724 = vsel %vm1785, %v2708, %v2613
      %v2725 = vsel %vm1785, %v2709, %v2615
      %v2726 = vsel %vm1785, %v2710, %v2617
      %v2727 = vsel %vm1785, %v2711, %v2619
      %v2728 = vsel %vm1785, %v2712, %v2605
      %v2729 = vpack.c.bf16 %v2666, %v2665
      %v2730 = vpack.c.bf16 %v2714, %v2713
      %v2731 = vpack.c.bf16 %v2278, %v2275
      %v2732 = vpack.c.bf16 %v2668, %v2667
      %v2733 = vpack.c.bf16 %v2716, %v2715
      %v2734 = vpack.c.bf16 %v2284, %v2281
      %v2735 = vpack.c.bf16 %v2670, %v2669
      %v2736 = vpack.c.bf16 %v2718, %v2717
      %v2737 = vpack.c.bf16 %v2290, %v2287
      %v2738 = vpack.c.bf16 %v2672, %v2671
      %v2739 = vpack.c.bf16 %v2720, %v2719
      %v2740 = vpack.c.bf16 %v2269, %v2340
      %v2741 = vpack.c.bf16 %v2674, %v2673
      %v2742 = vpack.c.bf16 %v2722, %v2721
      %v2743 = vpack.c.bf16 %v2299, %v2296
      %v2744 = vpack.c.bf16 %v2676, %v2675
      %v2745 = vpack.c.bf16 %v2724, %v2723
      %v2746 = vpack.c.bf16 %v2305, %v2302
      %v2747 = vpack.c.bf16 %v2678, %v2677
      %v2748 = vpack.c.bf16 %v2726, %v2725
      %v2749 = vpack.c.bf16 %v2311, %v2308
      %v2750 = vpack.c.bf16 %v2680, %v2679
      %v2751 = vpack.c.bf16 %v2728, %v2727
      %v2752 = vpack.c.bf16 %v2269, %v2343
      %v2753 = vld [vmem:[%s16] sm:$0xf]
      %v2754 = vld [vmem:[%s16 + $0x4] sm:$0xf]
      %v2755 = vld [vmem:[%s16 + $0x8] sm:$0xf]
      %v2756 = vld [vmem:[%s16 + $0xc] sm:$0xf]
      %v2757 = vld [vmem:[%s16 + $0x10] sm:$0xf]
      %v2758 = vld [vmem:[%s16 + $0x14] sm:$0xf]
      %v2759 = vld [vmem:[%s16 + $0x18] sm:$0xf]
      %v2760 = vld [vmem:[%s16 + $0x1c] sm:$0xf]
      %v2761 = vld [vmem:[%s16 + $0x20] sm:$0xf]
      %v2762 = vld [vmem:[%s16 + $0x24] sm:$0xf]
      %v2763 = vld [vmem:[%s16 + $0x28] sm:$0xf]
      %v2764 = vld [vmem:[%s16 + $0x2c] sm:$0xf]
      %v2765 = vld [vmem:[%s16 + $0x30] sm:$0xf]
      %v2766 = vld [vmem:[%s16 + $0x34] sm:$0xf]
      %v2767 = vld [vmem:[%s16 + $0x38] sm:$0xf]
      %v2768 = vld [vmem:[%s16 + $0x3c] sm:$0xf]
      %v2769 = vld [vmem:[%s16 + $0x40] sm:$0xf]
      %v2770 = vld [vmem:[%s16 + $0x44] sm:$0xf]
      %v2771 = vld [vmem:[%s16 + $0x48] sm:$0xf]
      %v2772 = vld [vmem:[%s16 + $0x4c] sm:$0xf]
      %v2773 = vld [vmem:[%s16 + $0x50] sm:$0xf]
      %v2774 = vld [vmem:[%s16 + $0x54] sm:$0xf]
      %v2775 = vld [vmem:[%s16 + $0x58] sm:$0xf]
      %v2776 = vld [vmem:[%s16 + $0x5c] sm:$0xf]
      %v2777 = vld [vmem:[%s16 + $0x60] sm:$0xf]
      %v2778 = vld [vmem:[%s16 + $0x64] sm:$0xf]
      %v2779 = vld [vmem:[%s16 + $0x68] sm:$0xf]
      %v2780 = vld [vmem:[%s16 + $0x6c] sm:$0xf]
      %v2781 = vld [vmem:[%s16 + $0x70] sm:$0xf]
      %v2782 = vld [vmem:[%s16 + $0x74] sm:$0xf]
      %v2783 = vld [vmem:[%s16 + $0x78] sm:$0xf]
      %v2784 = vld [vmem:[%s16 + $0x7c] sm:$0xf]
      %v2785 = vld [vmem:[%s16 + $0x80] sm:$0xf]
      %v2786 = vld [vmem:[%s16 + $0x84] sm:$0xf]
      %v2787 = vld [vmem:[%s16 + $0x88] sm:$0xf]
      %v2788 = vld [vmem:[%s16 + $0x8c] sm:$0xf]
      %v2825 = vunpack.c.l.b16 %v2753
      %v2826 = vunpack.c.l.b16 %v2754
      %v2827 = vunpack.c.l.b16 %v2755
      %v2828 = vunpack.c.l.b16 %v2756
      %v2829 = vunpack.c.l.b16 %v2757
      %v2830 = vunpack.c.l.b16 %v2758
      %v2831 = vunpack.c.l.b16 %v2759
      %v2832 = vunpack.c.l.b16 %v2760
      %v2833 = vunpack.c.l.b16 %v2761
      %v2834 = vunpack.c.l.b16 %v2762
      %v2835 = vunpack.c.l.b16 %v2763
      %v2836 = vunpack.c.l.b16 %v2764
      %v2837 = vunpack.c.l.b16 %v2765
      %v2838 = vunpack.c.l.b16 %v2766
      %v2839 = vunpack.c.l.b16 %v2767
      %v2840 = vunpack.c.l.b16 %v2768
      %v2841 = vunpack.c.l.b16 %v2769
      %v2842 = vunpack.c.l.b16 %v2770
      %v2843 = vunpack.c.l.b16 %v2771
      %v2844 = vunpack.c.l.b16 %v2772
      %v2845 = vunpack.c.l.b16 %v2773
      %v2846 = vunpack.c.l.b16 %v2774
      %v2847 = vunpack.c.l.b16 %v2775
      %v2848 = vunpack.c.l.b16 %v2776
      %v2849 = vunpack.c.l.b16 %v2777
      %v2850 = vunpack.c.l.b16 %v2778
      %v2851 = vunpack.c.l.b16 %v2779
      %v2852 = vunpack.c.l.b16 %v2780
      %v2853 = vunpack.c.l.b16 %v2781
      %v2854 = vunpack.c.l.b16 %v2782
      %v2855 = vunpack.c.l.b16 %v2783
      %v2856 = vunpack.c.l.b16 %v2784
      %v2857 = vunpack.c.l.b16 %v2785
      %v2858 = vunpack.c.l.b16 %v2786
      %v2859 = vunpack.c.l.b16 %v2787
      %v2860 = vunpack.c.l.b16 %v2788
      %v2861 = vpack.c.b16 %v2826, %v2825
      %v2862 = vpack.c.b16 %v2828, %v2827
      %v2863 = vpack.c.b16 %v2830, %v2829
      %v2864 = vpack.c.b16 %v2832, %v2831
      %v2865 = vpack.c.b16 %v2834, %v2833
      %v2866 = vpack.c.b16 %v2836, %v2835
      %v2867 = vpack.c.b16 %v2838, %v2837
      %v2868 = vpack.c.b16 %v2840, %v2839
      %v2869 = vpack.c.b16 %v2842, %v2841
      %v2870 = vpack.c.b16 %v2844, %v2843
      %v2871 = vpack.c.b16 %v2846, %v2845
      %v2872 = vpack.c.b16 %v2848, %v2847
      %v2873 = vpack.c.b16 %v2850, %v2849
      %v2874 = vpack.c.b16 %v2852, %v2851
      %v2875 = vpack.c.b16 %v2854, %v2853
      %v2876 = vpack.c.b16 %v2856, %v2855
      %v2877 = vpack.c.b16 %v2858, %v2857
      %v2878 = vpack.c.b16 %v2860, %v2859
      %v2898 = vsel %vm1717, %v2731, 0
      %v2901 = vsel %vm1717, %v2734, 0
      %v2904 = vsel %vm1717, %v2737, 0
      %v2907 = vsel %vm1717, %v2740, 0
      %v2910 = vsel %vm1717, %v2743, 0
      %v2913 = vsel %vm1717, %v2746, 0
      %v2916 = vsel %vm1717, %v2749, 0
      %v2919 = vsel %vm1717, %v2752, 0
      %2921 = vmatprep.subr.bf16.mxu0 0
      %2922 = vmatpush1.bf16.msra.mxu0 %v2868
      %2923 = vmatprep.subr.bf16.mxu0 0
      %2924 = vmatpush1.bf16.msra.mxu0 %v2867
      %2925 = vmatprep.subr.bf16.mxu0 0
      %2926 = vmatpush1.bf16.msra.mxu0 %v2866
      %2927 = vmatprep.subr.bf16.mxu0 0
      %2928 = vmatpush1.bf16.msra.mxu0 %v2865
      %2929 = vmatprep.subr.bf16.mxu0 0
      %2930 = vmatpush1.bf16.msra.mxu0 %v2864
      %2931 = vmatprep.subr.bf16.mxu0 0
      %2932 = vmatpush1.bf16.msra.mxu0 %v2863
      %2933 = vmatprep.subr.bf16.mxu0 0
      %2934 = vmatpush1.bf16.msra.mxu0 %v2862
      %2935 = vmatprep.subr.bf16.mxu0 0
      %2936 = vmatpush1.bf16.msra.mxu0 %v2861
      %2937 = vmatprep.subr.bf16.mxu0 0
      %2938 = vmatpush2.bf16.msra.mxu0 %v2876
      %2939 = vmatprep.subr.bf16.mxu0 0
      %2940 = vmatpush2.bf16.msra.mxu0 %v2875
      %2941 = vmatprep.subr.bf16.mxu0 0
      %2942 = vmatpush2.bf16.msra.mxu0 %v2874
      %2943 = vmatprep.subr.bf16.mxu0 0
      %2944 = vmatpush2.bf16.msra.mxu0 %v2873
      %2945 = vmatprep.subr.bf16.mxu0 0
      %2946 = vmatpush2.bf16.msra.mxu0 %v2872
      %2947 = vmatprep.subr.bf16.mxu0 0
      %2948 = vmatpush2.bf16.msra.mxu0 %v2871
      %2949 = vmatprep.subr.bf16.mxu0 0
      %2950 = vmatpush2.bf16.msra.mxu0 %v2870
      %2951 = vmatprep.subr.bf16.mxu0 0
      %2952 = vmatpush2.bf16.msra.mxu0 %v2869
      %2953 = vmatprep.mubr.bf16.mxu0 %v2730
      %2954 = vmatmul.mubr.bf16.gmra.mxu0 %v2729
      %v2955 = vpop.f32.mrf.mxu0
      %v2956 = vadd.f32 0.0, %v2955
      %v2957 = vpop.f32.mrf.mxu0
      %v2958 = vpop.f32.mrf.mxu0
      %v2959 = vadd.f32 0.0, %v2958
      %v2960 = vpop.f32.mrf.mxu0
      %2961 = vmatprep.mubr.bf16.mxu0 %v2733
      %2962 = vmatmul.mubr.bf16.gmra.mxu0 %v2732
      %v2963 = vpop.f32.mrf.mxu0
      %v2964 = vadd.f32 0.0, %v2963
      %v2965 = vpop.f32.mrf.mxu0
      %v2966 = vpop.f32.mrf.mxu0
      %v2967 = vadd.f32 0.0, %v2966
      %v2968 = vpop.f32.mrf.mxu0
      %2969 = vmatprep.mubr.bf16.mxu0 %v2736
      %2970 = vmatmul.mubr.bf16.gmra.mxu0 %v2735
      %v2971 = vpop.f32.mrf.mxu0
      %v2972 = vadd.f32 0.0, %v2971
      %v2973 = vpop.f32.mrf.mxu0
      %v2974 = vpop.f32.mrf.mxu0
      %v2975 = vadd.f32 0.0, %v2974
      %v2976 = vpop.f32.mrf.mxu0
      %2977 = vmatprep.mubr.bf16.mxu0 %v2739
      %2978 = vmatmul.mubr.bf16.gmra.mxu0 %v2738
      %v2979 = vpop.f32.mrf.mxu0
      %v2980 = vadd.f32 0.0, %v2979
      %v2981 = vpop.f32.mrf.mxu0
      %v2982 = vpop.f32.mrf.mxu0
      %v2983 = vadd.f32 0.0, %v2982
      %v2984 = vpop.f32.mrf.mxu0
      %2985 = vmatprep.mubr.bf16.mxu0 %v2742
      %2986 = vmatmul.mubr.bf16.gmra.mxu0 %v2741
      %v2987 = vpop.f32.mrf.mxu0
      %v2988 = vadd.f32 0.0, %v2987
      %v2989 = vpop.f32.mrf.mxu0
      %v2990 = vpop.f32.mrf.mxu0
      %v2991 = vadd.f32 0.0, %v2990
      %v2992 = vpop.f32.mrf.mxu0
      %2993 = vmatprep.mubr.bf16.mxu0 %v2745
      %2994 = vmatmul.mubr.bf16.gmra.mxu0 %v2744
      %v2995 = vpop.f32.mrf.mxu0
      %v2996 = vadd.f32 0.0, %v2995
      %v2997 = vpop.f32.mrf.mxu0
      %v2998 = vpop.f32.mrf.mxu0
      %v2999 = vadd.f32 0.0, %v2998
      %v3000 = vpop.f32.mrf.mxu0
      %3001 = vmatprep.mubr.bf16.mxu0 %v2748
      %3002 = vmatmul.mubr.bf16.gmra.mxu0 %v2747
      %v3003 = vpop.f32.mrf.mxu0
      %v3004 = vadd.f32 0.0, %v3003
      %v3005 = vpop.f32.mrf.mxu0
      %v3006 = vpop.f32.mrf.mxu0
      %v3007 = vadd.f32 0.0, %v3006
      %v3008 = vpop.f32.mrf.mxu0
      %3009 = vmatprep.mubr.bf16.mxu0 %v2751
      %3010 = vmatmul.mubr.bf16.gmra.mxu0 %v2750
      %v3011 = vpop.f32.mrf.mxu0
      %v3012 = vadd.f32 0.0, %v3011
      %v3013 = vpop.f32.mrf.mxu0
      %v3014 = vpop.f32.mrf.mxu0
      %v3015 = vadd.f32 0.0, %v3014
      %v3016 = vpop.f32.mrf.mxu0
      %3017 = vdwg.mxu0
      %3018 = vmatprep.subr.bf16.mxu0 0
      %3019 = vmatpush1.bf16.msra.mxu0 0
      %3020 = vmatprep.subr.bf16.mxu0 0
      %3021 = vmatpush1.bf16.msra.mxu0 0
      %3022 = vmatprep.subr.bf16.mxu0 0
      %3023 = vmatpush1.bf16.msra.mxu0 0
      %3024 = vmatprep.subr.bf16.mxu0 0
      %3025 = vmatpush1.bf16.msra.mxu0 0
      %3026 = vmatprep.subr.bf16.mxu0 0
      %3027 = vmatpush1.bf16.msra.mxu0 0
      %3028 = vmatprep.subr.bf16.mxu0 0
      %3029 = vmatpush1.bf16.msra.mxu0 0
      %3030 = vmatprep.subr.bf16.mxu0 0
      %3031 = vmatpush1.bf16.msra.mxu0 %v2878
      %3032 = vmatprep.subr.bf16.mxu0 0
      %3033 = vmatpush1.bf16.msra.mxu0 %v2877
      %3034 = vmatprep.subr.bf16.mxu0 0
      %3035 = vmatpush2.bf16.msra.mxu0 0
      %3036 = vmatprep.subr.bf16.mxu0 0
      %3037 = vmatpush2.bf16.msra.mxu0 0
      %3038 = vmatprep.subr.bf16.mxu0 0
      %3039 = vmatpush2.bf16.msra.mxu0 0
      %3040 = vmatprep.subr.bf16.mxu0 0
      %3041 = vmatpush2.bf16.msra.mxu0 0
      %3042 = vmatprep.subr.bf16.mxu0 0
      %3043 = vmatpush2.bf16.msra.mxu0 0
      %3044 = vmatprep.subr.bf16.mxu0 0
      %3045 = vmatpush2.bf16.msra.mxu0 0
      %3046 = vmatprep.subr.bf16.mxu0 0
      %3047 = vmatpush2.bf16.msra.mxu0 0
      %3048 = vmatprep.subr.bf16.mxu0 0
      %3049 = vmatpush2.bf16.msra.mxu0 0
      %3050 = vmatprep.mubr.bf16.mxu0 0
      %3051 = vmatmul.mubr.bf16.gmra.mxu0 %v2898
      %v3052 = vpop.f32.mrf.mxu0
      %v3053 = vadd.f32 %v2956, %v3052
      %v3054 = vpop.f32.mrf.mxu0
      %v3055 = vpop.f32.mrf.mxu0
      %v3056 = vadd.f32 %v2959, %v3055
      %v3057 = vpop.f32.mrf.mxu0
      %3058 = vmatprep.mubr.bf16.mxu0 0
      %3059 = vmatmul.mubr.bf16.gmra.mxu0 %v2901
      %v3060 = vpop.f32.mrf.mxu0
      %v3061 = vadd.f32 %v2964, %v3060
      %v3062 = vpop.f32.mrf.mxu0
      %v3063 = vpop.f32.mrf.mxu0
      %v3064 = vadd.f32 %v2967, %v3063
      %v3065 = vpop.f32.mrf.mxu0
      %3066 = vmatprep.mubr.bf16.mxu0 0
      %3067 = vmatmul.mubr.bf16.gmra.mxu0 %v2904
      %v3068 = vpop.f32.mrf.mxu0
      %v3069 = vadd.f32 %v2972, %v3068
      %v3070 = vpop.f32.mrf.mxu0
      %v3071 = vpop.f32.mrf.mxu0
      %v3072 = vadd.f32 %v2975, %v3071
      %v3073 = vpop.f32.mrf.mxu0
      %3074 = vmatprep.mubr.bf16.mxu0 0
      %3075 = vmatmul.mubr.bf16.gmra.mxu0 %v2907
      %v3076 = vpop.f32.mrf.mxu0
      %v3077 = vadd.f32 %v2980, %v3076
      %v3078 = vpop.f32.mrf.mxu0
      %v3079 = vpop.f32.mrf.mxu0
      %v3080 = vadd.f32 %v2983, %v3079
      %v3081 = vpop.f32.mrf.mxu0
      %3082 = vmatprep.mubr.bf16.mxu0 0
      %3083 = vmatmul.mubr.bf16.gmra.mxu0 %v2910
      %v3084 = vpop.f32.mrf.mxu0
      %v3085 = vadd.f32 %v2988, %v3084
      %v3086 = vpop.f32.mrf.mxu0
      %v3087 = vpop.f32.mrf.mxu0
      %v3088 = vadd.f32 %v2991, %v3087
      %v3089 = vpop.f32.mrf.mxu0
      %3090 = vmatprep.mubr.bf16.mxu0 0
      %3091 = vmatmul.mubr.bf16.gmra.mxu0 %v2913
      %v3092 = vpop.f32.mrf.mxu0
      %v3093 = vadd.f32 %v2996, %v3092
      %v3094 = vpop.f32.mrf.mxu0
      %v3095 = vpop.f32.mrf.mxu0
      %v3096 = vadd.f32 %v2999, %v3095
      %v3097 = vpop.f32.mrf.mxu0
      %3098 = vmatprep.mubr.bf16.mxu0 0
      %3099 = vmatmul.mubr.bf16.gmra.mxu0 %v2916
      %v3100 = vpop.f32.mrf.mxu0
      %v3101 = vadd.f32 %v3004, %v3100
      %v3102 = vpop.f32.mrf.mxu0
      %v3103 = vpop.f32.mrf.mxu0
      %v3104 = vadd.f32 %v3007, %v3103
      %v3105 = vpop.f32.mrf.mxu0
      %3106 = vmatprep.mubr.bf16.mxu0 0
      %3107 = vmatmul.mubr.bf16.gmra.mxu0 %v2919
      %v3108 = vpop.f32.mrf.mxu0
      %v3109 = vadd.f32 %v3012, %v3108
      %v3110 = vpop.f32.mrf.mxu0
      %v3111 = vpop.f32.mrf.mxu0
      %v3112 = vadd.f32 %v3015, %v3111
      %v3113 = vpop.f32.mrf.mxu0
      %3114 = vdwg.mxu0
      %3131 = vrot.lane.b32.xlu0 %v3053, 32
      %v3132 = vpop.permute.xlu0 %3131
      %3133 = vrot.lane.b32.xlu0 %v3056, 32
      %v3134 = vpop.permute.xlu0 %3133
      %3135 = vrot.lane.b32.xlu0 %v3061, 32
      %v3136 = vpop.permute.xlu0 %3135
      %3137 = vrot.lane.b32.xlu0 %v3064, 32
      %v3138 = vpop.permute.xlu0 %3137
      %3139 = vrot.lane.b32.xlu0 %v3069, 32
      %v3140 = vpop.permute.xlu0 %3139
      %3141 = vrot.lane.b32.xlu0 %v3072, 32
      %v3142 = vpop.permute.xlu0 %3141
      %3143 = vrot.lane.b32.xlu0 %v3077, 32
      %v3144 = vpop.permute.xlu0 %3143
      %3145 = vrot.lane.b32.xlu0 %v3080, 32
      %v3146 = vpop.permute.xlu0 %3145
      %3147 = vrot.lane.b32.xlu0 %v3085, 32
      %v3148 = vpop.permute.xlu0 %3147
      %3149 = vrot.lane.b32.xlu0 %v3088, 32
      %v3150 = vpop.permute.xlu0 %3149
      %3151 = vrot.lane.b32.xlu0 %v3093, 32
      %v3152 = vpop.permute.xlu0 %3151
      %3153 = vrot.lane.b32.xlu0 %v3096, 32
      %v3154 = vpop.permute.xlu0 %3153
      %3155 = vrot.lane.b32.xlu0 %v3101, 32
      %v3156 = vpop.permute.xlu0 %3155
      %3157 = vrot.lane.b32.xlu0 %v3104, 32
      %v3158 = vpop.permute.xlu0 %3157
      %3159 = vrot.lane.b32.xlu0 %v3109, 32
      %v3160 = vpop.permute.xlu0 %3159
      %3161 = vrot.lane.b32.xlu0 %v3112, 32
      %v3162 = vpop.permute.xlu0 %3161
      %v3179 = vadd.f32 %v1966, %v3132
      %v3180 = vadd.f32 %v1969, %v3134
      %v3181 = vadd.f32 %v1974, %v3136
      %v3182 = vadd.f32 %v1977, %v3138
      %v3183 = vadd.f32 %v1982, %v3140
      %v3184 = vadd.f32 %v1985, %v3142
      %v3185 = vadd.f32 %v1990, %v3144
      %v3186 = vadd.f32 %v1993, %v3146
      %v3187 = vadd.f32 %v1998, %v3148
      %v3188 = vadd.f32 %v2001, %v3150
      %v3189 = vadd.f32 %v2006, %v3152
      %v3190 = vadd.f32 %v2009, %v3154
      %v3191 = vadd.f32 %v2014, %v3156
      %v3192 = vadd.f32 %v2017, %v3158
      %v3193 = vadd.f32 %v2022, %v3160
      %v3194 = vadd.f32 %v2025, %v3162
      %3211 = vrot.lane.b32.xlu0 %v3179, 96
      %v3212 = vpop.permute.xlu0 %3211
      %3213 = vrot.lane.b32.xlu0 %v3180, 96
      %v3214 = vpop.permute.xlu0 %3213
      %3215 = vrot.lane.b32.xlu0 %v3181, 96
      %v3216 = vpop.permute.xlu0 %3215
      %3217 = vrot.lane.b32.xlu0 %v3182, 96
      %v3218 = vpop.permute.xlu0 %3217
      %3219 = vrot.lane.b32.xlu0 %v3183, 96
      %v3220 = vpop.permute.xlu0 %3219
      %3221 = vrot.lane.b32.xlu0 %v3184, 96
      %v3222 = vpop.permute.xlu0 %3221
      %3223 = vrot.lane.b32.xlu0 %v3185, 96
      %v3224 = vpop.permute.xlu0 %3223
      %3225 = vrot.lane.b32.xlu0 %v3186, 96
      %v3226 = vpop.permute.xlu0 %3225
      %3227 = vrot.lane.b32.xlu0 %v3187, 96
      %v3228 = vpop.permute.xlu0 %3227
      %3229 = vrot.lane.b32.xlu0 %v3188, 96
      %v3230 = vpop.permute.xlu0 %3229
      %3231 = vrot.lane.b32.xlu0 %v3189, 96
      %v3232 = vpop.permute.xlu0 %3231
      %3233 = vrot.lane.b32.xlu0 %v3190, 96
      %v3234 = vpop.permute.xlu0 %3233
      %3235 = vrot.lane.b32.xlu0 %v3191, 96
      %v3236 = vpop.permute.xlu0 %3235
      %3237 = vrot.lane.b32.xlu0 %v3192, 96
      %v3238 = vpop.permute.xlu0 %3237
      %3239 = vrot.lane.b32.xlu0 %v3193, 96
      %v3240 = vpop.permute.xlu0 %3239
      %3241 = vrot.lane.b32.xlu0 %v3194, 96
      %v3242 = vpop.permute.xlu0 %3241
      %3259 = vst.msk [vmem:[%s630] sm:$0xff] %vm1717, %v3212
      %3260 = vst.msk [vmem:[%s630 + $0x8] sm:$0xff] %vm1717, %v3214
      %3261 = vst.msk [vmem:[%s630 + $0x10] sm:$0xff] %vm1717, %v3216
      %3262 = vst.msk [vmem:[%s630 + $0x18] sm:$0xff] %vm1717, %v3218
      %3263 = vst.msk [vmem:[%s630 + $0x20] sm:$0xff] %vm1717, %v3220
      %3264 = vst.msk [vmem:[%s630 + $0x28] sm:$0xff] %vm1717, %v3222
      %3265 = vst.msk [vmem:[%s630 + $0x30] sm:$0xff] %vm1717, %v3224
      %3266 = vst.msk [vmem:[%s630 + $0x38] sm:$0xff] %vm1717, %v3226
      %3267 = vst.msk [vmem:[%s630 + $0x40] sm:$0xff] %vm1717, %v3228
      %3268 = vst.msk [vmem:[%s630 + $0x48] sm:$0xff] %vm1717, %v3230
      %3269 = vst.msk [vmem:[%s630 + $0x50] sm:$0xff] %vm1717, %v3232
      %3270 = vst.msk [vmem:[%s630 + $0x58] sm:$0xff] %vm1717, %v3234
      %3271 = vst.msk [vmem:[%s630 + $0x60] sm:$0xff] %vm1717, %v3236
      %3272 = vst.msk [vmem:[%s630 + $0x68] sm:$0xff] %vm1717, %v3238
      %3273 = vst.msk [vmem:[%s630 + $0x70] sm:$0xff] %vm1717, %v3240
      %3274 = vst.msk [vmem:[%s630 + $0x78] sm:$0xff] %vm1717, %v3242
      %s3275 = smul.u32 2, %s28
      %p3276 = scmp.lt.s32.totalorder %s3275, 3
      %s3277 = scalar_select %p3276, %s3275, 3
      %s3278 = smul.addr %s3277, 8
      %s3279 = smul.addr %s3278, 8
      %s3280 = scalar_lea.vmem %s17, %s3279
      // Predicated region
      $region89: #{_lambda_.2} parent=87 // pred_check
        %p3281 = pneg %p423
      $region90: #{_lambda_.2} parent=87 // pred_check_branch
        %3283 = sbr.rel (%p3281) target = $region92
      $region91: #{_lambda_.2} parent=87 // pred_region
        %s3284 = smul.u32 2, %s28
      $region92: #{_lambda_.2} parent=87 // pred_fallthru
        _
    $region88: #{_lambda_.2} parent=5 // pred_fallthru
      _
    %p3285 = scmp.le.s32.totalorder 2, %s23
    // Predicated region
    $region93: #{_lambda_.2} parent=5 // pred_check
      %p3286 = pneg %p3285
    $region94: #{_lambda_.2} parent=5 // pred_check_branch
      %3288 = sbr.rel (%p3286) target = $region96
    $region95: #{_lambda_.2} parent=5 // pred_region
      %s3289 = ssub.s32 %s23, 2
      // Predicated region
      $region97: #{_lambda_.2} parent=95 // pred_check
        %p3290 = pneg %p429
      $region98: #{_lambda_.2} parent=95 // pred_check_branch
        %3292 = sbr.rel (%p3290) target = $region100
      $region99: #{_lambda_.2} parent=95 // pred_region
        %s3293 = smul.u32 2, %s29
        %p3294 = scmp.lt.s32.totalorder %s3293, 3
        %s3295 = scalar_select %p3294, %s3293, 3
        %s3296 = smul.addr %s3295, 8
        %s3297 = smul.addr %s3296, 8
        %s3298 = scalar_lea.vmem %s17, %s3297
      $region100: #{_lambda_.2} parent=95 // pred_fallthru
        _
    $region96: #{_lambda_.2} parent=5 // pred_fallthru
      _
  $region6: #{_lambda_.2} parent=0 // loop_footer
    %s27 = sadd.s32 1, %s23
  $region7: #{_lambda_.2} parent=0 // loop_footer_branch
    %22 = sbr.rel target = $region3
  $region8: #{_lambda_.2} parent=0 // loop_exit
    _

</llo_original>
